<compile_context>
chip_gen: v7x
topology: tpu7x:2x2x1
jax: 0.10.0
libtpu: 0.0.40
codegen_flags: <defaults>
</compile_context>

<pallas_src>
import numpy as np
import jax
import jax.numpy as jnp
from jax import lax
from jax.experimental import pallas as pl
from jax.experimental.pallas import tpu as pltpu

# MXU operand dtype (accumulation is always f32). Set to jnp.float32 for
# bit-closer numerics at a lower MXU rate.
MATMUL_DTYPE = jnp.bfloat16


# ---------------------------------------------------------------------------
# Fused kernel (per Dt-block of D = B*N items):
#   g8p, g4p = in-VMEM 2x2 / 4x4 area pooling (strided sublane loads)
#   xpad     = [g16 | g8p | g4p | h] written into a border-zeroed VMEM slab
#   v        = im2col(xpad) @ w_fold  (ONE MXU matmul, K = 9*Cin) + bias_map
#   f,u,n    = sigmoid / sigmoid / tanh of the three S-slices of v
#   new_h    = f * h * (1 - u) + u * n
# ---------------------------------------------------------------------------
def _fused_update_kernel(g16_ref, g8_ref, g4_ref, h_ref, w_ref, bmap_ref,
                         out_ref, xpad_ref):
    Dt, Hp, Wp, Cin = xpad_ref.shape
    H, W = Hp - 2, Wp - 2
    S = out_ref.shape[-1]
    C0 = g16_ref.shape[-1]
    C1 = g8_ref.shape[-1]
    C2 = g4_ref.shape[-1]
    f32 = jnp.float32

    # ---- exact r x r 'area' pooling in VMEM via strided sublane loads ------
    def pooled(ref, r):
        acc = ref[:, pl.ds(0, H, stride=r), pl.ds(0, W, stride=r), :].astype(f32)
        for dy in range(r):
            for dx in range(r):
                if dy == 0 and dx == 0:
                    continue
                acc = acc + ref[:, pl.ds(dy, H, stride=r),
                                pl.ds(dx, W, stride=r), :].astype(f32)
        return acc * (1.0 / (r * r))

    g8p = pooled(g8_ref, 2)
    g4p = pooled(g4_ref, 4)

    # ---- zero-padded conv input slab: border-only zeroing + slab stores ----
    zrow = jnp.zeros((Dt, 1, Wp, Cin), f32)
    xpad_ref[:, 0:1, :, :] = zrow
    xpad_ref[:, Hp - 1:Hp, :, :] = zrow
    zcol = jnp.zeros((Dt, Hp, 1, Cin), f32)
    xpad_ref[:, :, 0:1, :] = zcol
    xpad_ref[:, :, Wp - 1:Wp, :] = zcol

    h = h_ref[...]
    xpad_ref[:, 1:H + 1, 1:W + 1, 0:C0] = g16_ref[...]
    xpad_ref[:, 1:H + 1, 1:W + 1, C0:C0 + C1] = g8p
    xpad_ref[:, 1:H + 1, 1:W + 1, C0 + C1:C0 + C1 + C2] = g4p
    xpad_ref[:, 1:H + 1, 1:W + 1, C0 + C1 + C2:Cin] = h

    # ---- 3x3 conv as ONE im2col matmul (K = 9*Cin) on the MXU --------------
    wins = [xpad_ref[:, ky:ky + H, kx:kx + W, :]
            for ky in range(3) for kx in range(3)]
    patches = jnp.concatenate(wins, axis=-1)                    # (Dt,H,W,9*Cin)
    m = Dt * H * W
    patches2d = patches.reshape(m, 9 * Cin).astype(w_ref.dtype)
    v = jnp.dot(patches2d, w_ref[...], preferred_element_type=f32)   # (m, 3S)
    v = v.reshape(Dt, H, W, 3 * S) + bmap_ref[...]              # folded biases

    forget = jax.nn.sigmoid(v[..., :S])
    update = jax.nn.sigmoid(v[..., S:2 * S])
    cand = jnp.tanh(v[..., 2 * S:])
    out_ref[...] = forget * h * (1.0 - update) + update * cand


# ---------------------------------------------------------------------------
# Wrapper-side parameter folding (tiny, done once, in f32).
# ---------------------------------------------------------------------------
def fold_params(params, H, W):
    w16, w8, w4 = params["w16"], params["w8"], params["w4"]    # (Ck, mid)
    mid = w16.shape[1]
    wt, bt = params["wt"], params["bt"]                        # (3,3,mid+S,3S),(3S,)
    b_cat = params["b16"] + params["b8"] + params["b4"]        # (mid,)

    w_cat = jnp.concatenate([w16, w8, w4], axis=0)             # (Ctot, mid)
    wt_g, wt_h = wt[:, :, :mid, :], wt[:, :, mid:, :]
    w_gfold = jnp.einsum('cm,yxmo->yxco', w_cat, wt_g)         # (3,3,Ctot,3S)
    w_fold = jnp.concatenate([w_gfold, wt_h], axis=2)          # (3,3,Cin,3S)
    Cin, C3 = w_fold.shape[2], w_fold.shape[3]
    w_fold = w_fold.reshape(9 * Cin, C3).astype(MATMUL_DTYPE)  # tap-major rows

    # Boundary-exact folded projection bias: tap (ky,kx) only contributes
    # b_cat where the shifted pixel is in-bounds (zero-padded pixels are 0).
    bc = jnp.einsum('m,yxmo->yxo', b_cat, wt_g)                # (3,3,3S)
    ks = jnp.arange(3)
    vy = ((jnp.arange(H)[:, None] + ks[None, :] - 1 >= 0) &
          (jnp.arange(H)[:, None] + ks[None, :] - 1 < H)).astype(jnp.float32)
    vx = ((jnp.arange(W)[:, None] + ks[None, :] - 1 >= 0) &
          (jnp.arange(W)[:, None] + ks[None, :] - 1 < W)).astype(jnp.float32)
    bias_map = jnp.einsum('ya,xb,abo->yxo', vy, vx, bc) + bt   # (H,W,3S)
    return w_fold, bias_map.astype(jnp.float32)


# ---------------------------------------------------------------------------
# Generation-aware sizing helpers.
# ---------------------------------------------------------------------------
def _round_up(x, m):
    return -(-x // m) * m


def _vmem_tile_bytes(shape, itemsize):
    """VMEM footprint including (sublane, 128-lane) tile padding."""
    if len(shape) < 2:
        return _round_up(int(np.prod(shape)) * itemsize, 512)
    lead = int(np.prod(shape[:-2])) if len(shape) > 2 else 1
    sub = _round_up(int(shape[-2]), max(1, 32 // itemsize))
    lane = _round_up(int(shape[-1]), 128)
    return lead * sub * lane * itemsize


def _tpu_vmem_capacity_bytes():
    try:
        info = pltpu.get_tpu_info()
        cap = getattr(info, "vmem_capacity_bytes", None)
        if cap:
            return int(cap)
    except Exception:
        pass
    return 64 * 1024 * 1024            # conservative: v7x per-core VMEM


def _min_grid_steps():
    """Require >=2 grid steps only where ('parallel',) shards across cores."""
    try:
        kind = jax.devices()[0].device_kind.lower()
    except Exception:
        return 1
    return 2 if any(t in kind for t in ("v4", "v5p", "v7", "7x")) else 1


def _choose_dt(D, H, W, C0, C1, C2, S, budget_bytes, min_steps):
    """Largest Dt dividing D (with >= min_steps grid steps) whose per-step
    VMEM footprint (lane-padded double-buffered blocks, padded slab, im2col
    buffer, f32 temporaries) fits the budget."""
    Cin = C0 + C1 + C2 + S
    w_isz = jnp.dtype(MATMUL_DTYPE).itemsize
    best = 1
    for dt in range(1, D + 1):
        if D % dt or (D // dt) < min_steps:
            continue
        m = dt * H * W
        blocks = (_vmem_tile_bytes((dt, H, W, C0), 4)
                  + _vmem_tile_bytes((dt, 2 * H, 2 * W, C1), 4)
                  + _vmem_tile_bytes((dt, 4 * H, 4 * W, C2), 4)
                  + 2 * _vmem_tile_bytes((dt, H, W, S), 4)           # h + out
                  + _vmem_tile_bytes((9 * Cin, 3 * S), w_isz)
                  + _vmem_tile_bytes((H, W, 3 * S), 4)) * 2          # dbl-buffer
        slab = _vmem_tile_bytes((dt, H + 2, W + 2, Cin), 4)
        temps = (_vmem_tile_bytes((m, 9 * Cin), 4)                   # f32 concat
                 + _vmem_tile_bytes((m, 9 * Cin), w_isz)             # MXU operand
                 + _vmem_tile_bytes((m, 3 * S), 4)                   # v
                 + 6 * _vmem_tile_bytes((dt, H, W, 128), 4))         # gates/pools
        if blocks + slab + int(1.25 * temps) <= budget_bytes:
            best = dt
    return best


# ---------------------------------------------------------------------------
# Public entry point.
# ---------------------------------------------------------------------------
def multiscale_sensory_updater(params, g16, g8, g4, h):
    # g16:(B,N,H,W,C0)  g8:(B,N,2H,2W,C1)  g4:(B,N,4H,4W,C2)  h:(B,N,H,W,S)
    B, N, H, W, C0 = g16.shape
    C1, C2, S = g8.shape[-1], g4.shape[-1], h.shape[-1]
    D = B * N
    Cin = C0 + C1 + C2 + S

    g16_d = g16.reshape(D, H, W, C0)
    g8_d = g8.reshape(D, 2 * H, 2 * W, C1)      # pooled inside the kernel
    g4_d = g4.reshape(D, 4 * H, 4 * W, C2)      # pooled inside the kernel
    h_d = h.reshape(D, H, W, S)

    w_fold, bias_map = fold_params(params, H, W)

    vmem_cap = _tpu_vmem_capacity_bytes()
    vmem_limit = max(32 << 20, min(vmem_cap - (4 << 20), 100 << 20))
    min_steps = min(_min_grid_steps(), D)
    Dt = _choose_dt(D, H, W, C0, C1, C2, S,
                    budget_bytes=int(vmem_limit * 0.7), min_steps=min_steps)
    grid = (D // Dt,)

    def blk(*trail):
        return pl.BlockSpec((Dt,) + trail, lambda d: (d,) + (0,) * len(trail))

    def bcast(shape):
        return pl.BlockSpec(shape, lambda d: (0,) * len(shape))

    new_h = pl.pallas_call(
        _fused_update_kernel,
        out_shape=jax.ShapeDtypeStruct((D, H, W, S), jnp.float32),
        grid=grid,
        in_specs=[blk(H, W, C0), blk(2 * H, 2 * W, C1), blk(4 * H, 4 * W, C2),
                  blk(H, W, S), bcast(w_fold.shape), bcast(bias_map.shape)],
        out_specs=blk(H, W, S),
        scratch_shapes=[pltpu.VMEM((Dt, H + 2, W + 2, Cin), jnp.float32)],
        compiler_params=pltpu.CompilerParams(
            dimension_semantics=("parallel",),
            vmem_limit_bytes=int(vmem_limit)),
    )(g16_d, g8_d, g4_d, h_d, w_fold, bias_map)

    return new_h.reshape(B, N, H, W, S)


# ---------------------------------------------------------------------------
# Pure-JAX reference (mirrors the PyTorch module) for correctness check.
# ---------------------------------------------------------------------------
def area_downsample(x, r):
    # Exact F.interpolate(mode='area', scale_factor=1/r) == r x r average pool.
    D, Hr, Wr, C = x.shape
    return x.reshape(D, Hr // r, r, Wr // r, r, C).mean(axis=(2, 4))


def reference(params, g16, g8, g4, h):
    B, N, H, W, C0 = g16.shape
    S = h.shape[-1]
    D = B * N
    g16_d = g16.reshape(D, H, W, C0)
    g8_d = area_downsample(g8.reshape(D, 2 * H, 2 * W, g8.shape[-1]), 2)
    g4_d = area_downsample(g4.reshape(D, 4 * H, 4 * W, g4.shape[-1]), 4)
    g = (jnp.einsum('dhwc,co->dhwo', g16_d, params["w16"]) + params["b16"]
         + jnp.einsum('dhwc,co->dhwo', g8_d, params["w8"]) + params["b8"]
         + jnp.einsum('dhwc,co->dhwo', g4_d, params["w4"]) + params["b4"])
    h_d = h.reshape(D, H, W, S)
    x = jnp.concatenate([g, h_d], axis=-1)
    v = lax.conv_general_dilated(x, params["wt"], (1, 1), 'SAME',
                                 dimension_numbers=('NHWC', 'HWIO', 'NHWC'))
    v = v + params["bt"]
    f = jax.nn.sigmoid(v[..., :S])
    u = jax.nn.sigmoid(v[..., S:2 * S])
    n = jnp.tanh(v[..., 2 * S:])
    new_h = f * h_d * (1.0 - u) + u * n
    return new_h.reshape(B, N, H, W, S)


if __name__ == "__main__":
    B, N = 2, 2
    H = W = 8                       # g16 resolution; g8 = 16x16, g4 = 32x32
    g_dims = [8, 8, 7]              # g4 input gets +1 channel -> 8
    mid_dim, sensory_dim = 16, 8

    key = jax.random.PRNGKey(0)
    ks = jax.random.split(key, 9)

    def conv1x1_params(kk, cin, cout):
        kw, kb = jax.random.split(kk)
        bound = 1.0 / np.sqrt(cin)
        w = jax.random.uniform(kw, (cin, cout), jnp.float32, -bound, bound)
        b = jax.random.uniform(kb, (cout,), jnp.float32, -bound, bound)
        return w, b

    w16, b16 = conv1x1_params(ks[0], g_dims[0], mid_dim)
    w8, b8 = conv1x1_params(ks[1], g_dims[1], mid_dim)
    w4, b4 = conv1x1_params(ks[2], g_dims[2] + 1, mid_dim)

    cin_t = mid_dim + sensory_dim
    cout_t = sensory_dim * 3
    xavier_std = np.sqrt(2.0 / (cin_t * 9 + cout_t * 9))      # xavier_normal_
    wt = xavier_std * jax.random.normal(ks[3], (3, 3, cin_t, cout_t), jnp.float32)
    bt_bound = 1.0 / np.sqrt(cin_t * 9)
    bt = jax.random.uniform(ks[4], (cout_t,), jnp.float32, -bt_bound, bt_bound)

    params = dict(w16=w16, b16=b16, w8=w8, b8=b8, w4=w4, b4=b4, wt=wt, bt=bt)

    g16 = jax.random.normal(ks[5], (B, N, H, W, g_dims[0]), jnp.float32)
    g8 = jax.random.normal(ks[6], (B, N, 2 * H, 2 * W, g_dims[1]), jnp.float32)
    g4 = jax.random.normal(ks[7], (B, N, 4 * H, 4 * W, g_dims[2] + 1), jnp.float32)
    h = jax.random.normal(ks[8], (B, N, H, W, sensory_dim), jnp.float32)

    out = jax.jit(multiscale_sensory_updater)(params, g16, g8, g4, h)
    out = jax.block_until_ready(out)

    ref = reference(params, g16, g8, g4, h)
    # bf16 MXU operands (f32 accumulation) widen the tolerance slightly.
    tol = 3e-2 if MATMUL_DTYPE == jnp.bfloat16 else 2e-3
    np.testing.assert_allclose(np.asarray(out), np.asarray(ref),
                               atol=tol, rtol=tol)
    print("KERNEL_OK")
</pallas_src>

<mosaic_0001>
module attributes {stable_mosaic.version = 11 : i64} {
  func.func @_fused_update_kernel(%arg0: i32, %arg1: memref<4x8x8x8xf32, #tpu.memory_space<vmem>>, %arg2: memref<4x16x16x8xf32, #tpu.memory_space<vmem>>, %arg3: memref<4x32x32x8xf32, #tpu.memory_space<vmem>>, %arg4: memref<4x8x8x8xf32, #tpu.memory_space<vmem>>, %arg5: memref<288x24xbf16, #tpu.memory_space<vmem>>, %arg6: memref<8x8x24xf32, #tpu.memory_space<vmem>>, %arg7: memref<4x8x8x8xf32, #tpu.memory_space<vmem>>, %arg8: memref<4x10x10x32xf32, #tpu.memory_space<vmem>>) attributes {dimension_semantics = [#tpu.dimension_semantics<parallel>], iteration_bounds = array<i64: 1>, scalar_prefetch = 0 : i64, scratch_operands = 1 : i64, tpu.core_type = #tpu.core_type<tc>, window_params = [{transform_indices = @transform_0, window_bounds = array<i64: 4, 8, 8, 8>}, {transform_indices = @transform_1, window_bounds = array<i64: 4, 16, 16, 8>}, {transform_indices = @transform_2, window_bounds = array<i64: 4, 32, 32, 8>}, {transform_indices = @transform_3, window_bounds = array<i64: 4, 8, 8, 8>}, {pipeline_mode = #tpu.pipeline_mode<synchronous>, transform_indices = @transform_4, window_bounds = array<i64: 288, 24>}, {pipeline_mode = #tpu.pipeline_mode<synchronous>, transform_indices = @transform_5, window_bounds = array<i64: 8, 8, 24>}, {transform_indices = @transform_6, window_bounds = array<i64: 4, 8, 8, 8>}]} {
    %c0 = arith.constant 0 : index
    %c0_0 = arith.constant 0 : index
    %c0_1 = arith.constant 0 : index
    %c0_2 = arith.constant 0 : index
    %0 = tpu.strided_load %arg2[%c0, %c0_0, %c0_1, %c0_2] {strides = array<i32: 1, 2, 2, 1>} : memref<4x16x16x8xf32, #tpu.memory_space<vmem>>, vector<4x8x8x8xf32>
    %c0_3 = arith.constant 0 : index
    %c0_4 = arith.constant 0 : index
    %c1 = arith.constant 1 : index
    %c0_5 = arith.constant 0 : index
    %1 = tpu.strided_load %arg2[%c0_3, %c0_4, %c1, %c0_5] {strides = array<i32: 1, 2, 2, 1>} : memref<4x16x16x8xf32, #tpu.memory_space<vmem>>, vector<4x8x8x8xf32>
    %2 = arith.addf %0, %1 : vector<4x8x8x8xf32>
    %c0_6 = arith.constant 0 : index
    %c1_7 = arith.constant 1 : index
    %c0_8 = arith.constant 0 : index
    %c0_9 = arith.constant 0 : index
    %3 = tpu.strided_load %arg2[%c0_6, %c1_7, %c0_8, %c0_9] {strides = array<i32: 1, 2, 2, 1>} : memref<4x16x16x8xf32, #tpu.memory_space<vmem>>, vector<4x8x8x8xf32>
    %4 = arith.addf %2, %3 : vector<4x8x8x8xf32>
    %c0_10 = arith.constant 0 : index
    %c1_11 = arith.constant 1 : index
    %c1_12 = arith.constant 1 : index
    %c0_13 = arith.constant 0 : index
    %5 = tpu.strided_load %arg2[%c0_10, %c1_11, %c1_12, %c0_13] {strides = array<i32: 1, 2, 2, 1>} : memref<4x16x16x8xf32, #tpu.memory_space<vmem>>, vector<4x8x8x8xf32>
    %6 = arith.addf %4, %5 : vector<4x8x8x8xf32>
    %cst = arith.constant 2.500000e-01 : f32
    %7 = vector.broadcast %cst : f32 to vector<4x8x8x8xf32>
    %8 = arith.mulf %6, %7 : vector<4x8x8x8xf32>
    %c0_14 = arith.constant 0 : index
    %c0_15 = arith.constant 0 : index
    %c0_16 = arith.constant 0 : index
    %c0_17 = arith.constant 0 : index
    %9 = tpu.strided_load %arg3[%c0_14, %c0_15, %c0_16, %c0_17] {strides = array<i32: 1, 4, 4, 1>} : memref<4x32x32x8xf32, #tpu.memory_space<vmem>>, vector<4x8x8x8xf32>
    %c0_18 = arith.constant 0 : index
    %c0_19 = arith.constant 0 : index
    %c1_20 = arith.constant 1 : index
    %c0_21 = arith.constant 0 : index
    %10 = tpu.strided_load %arg3[%c0_18, %c0_19, %c1_20, %c0_21] {strides = array<i32: 1, 4, 4, 1>} : memref<4x32x32x8xf32, #tpu.memory_space<vmem>>, vector<4x8x8x8xf32>
    %11 = arith.addf %9, %10 : vector<4x8x8x8xf32>
    %c0_22 = arith.constant 0 : index
    %c0_23 = arith.constant 0 : index
    %c2 = arith.constant 2 : index
    %c0_24 = arith.constant 0 : index
    %12 = tpu.strided_load %arg3[%c0_22, %c0_23, %c2, %c0_24] {strides = array<i32: 1, 4, 4, 1>} : memref<4x32x32x8xf32, #tpu.memory_space<vmem>>, vector<4x8x8x8xf32>
    %13 = arith.addf %11, %12 : vector<4x8x8x8xf32>
    %c0_25 = arith.constant 0 : index
    %c0_26 = arith.constant 0 : index
    %c3 = arith.constant 3 : index
    %c0_27 = arith.constant 0 : index
    %14 = tpu.strided_load %arg3[%c0_25, %c0_26, %c3, %c0_27] {strides = array<i32: 1, 4, 4, 1>} : memref<4x32x32x8xf32, #tpu.memory_space<vmem>>, vector<4x8x8x8xf32>
    %15 = arith.addf %13, %14 : vector<4x8x8x8xf32>
    %c0_28 = arith.constant 0 : index
    %c1_29 = arith.constant 1 : index
    %c0_30 = arith.constant 0 : index
    %c0_31 = arith.constant 0 : index
    %16 = tpu.strided_load %arg3[%c0_28, %c1_29, %c0_30, %c0_31] {strides = array<i32: 1, 4, 4, 1>} : memref<4x32x32x8xf32, #tpu.memory_space<vmem>>, vector<4x8x8x8xf32>
    %17 = arith.addf %15, %16 : vector<4x8x8x8xf32>
    %c0_32 = arith.constant 0 : index
    %c1_33 = arith.constant 1 : index
    %c1_34 = arith.constant 1 : index
    %c0_35 = arith.constant 0 : index
    %18 = tpu.strided_load %arg3[%c0_32, %c1_33, %c1_34, %c0_35] {strides = array<i32: 1, 4, 4, 1>} : memref<4x32x32x8xf32, #tpu.memory_space<vmem>>, vector<4x8x8x8xf32>
    %19 = arith.addf %17, %18 : vector<4x8x8x8xf32>
    %c0_36 = arith.constant 0 : index
    %c1_37 = arith.constant 1 : index
    %c2_38 = arith.constant 2 : index
    %c0_39 = arith.constant 0 : index
    %20 = tpu.strided_load %arg3[%c0_36, %c1_37, %c2_38, %c0_39] {strides = array<i32: 1, 4, 4, 1>} : memref<4x32x32x8xf32, #tpu.memory_space<vmem>>, vector<4x8x8x8xf32>
    %21 = arith.addf %19, %20 : vector<4x8x8x8xf32>
    %c0_40 = arith.constant 0 : index
    %c1_41 = arith.constant 1 : index
    %c3_42 = arith.constant 3 : index
    %c0_43 = arith.constant 0 : index
    %22 = tpu.strided_load %arg3[%c0_40, %c1_41, %c3_42, %c0_43] {strides = array<i32: 1, 4, 4, 1>} : memref<4x32x32x8xf32, #tpu.memory_space<vmem>>, vector<4x8x8x8xf32>
    %23 = arith.addf %21, %22 : vector<4x8x8x8xf32>
    %c0_44 = arith.constant 0 : index
    %c2_45 = arith.constant 2 : index
    %c0_46 = arith.constant 0 : index
    %c0_47 = arith.constant 0 : index
    %24 = tpu.strided_load %arg3[%c0_44, %c2_45, %c0_46, %c0_47] {strides = array<i32: 1, 4, 4, 1>} : memref<4x32x32x8xf32, #tpu.memory_space<vmem>>, vector<4x8x8x8xf32>
    %25 = arith.addf %23, %24 : vector<4x8x8x8xf32>
    %c0_48 = arith.constant 0 : index
    %c2_49 = arith.constant 2 : index
    %c1_50 = arith.constant 1 : index
    %c0_51 = arith.constant 0 : index
    %26 = tpu.strided_load %arg3[%c0_48, %c2_49, %c1_50, %c0_51] {strides = array<i32: 1, 4, 4, 1>} : memref<4x32x32x8xf32, #tpu.memory_space<vmem>>, vector<4x8x8x8xf32>
    %27 = arith.addf %25, %26 : vector<4x8x8x8xf32>
    %c0_52 = arith.constant 0 : index
    %c2_53 = arith.constant 2 : index
    %c2_54 = arith.constant 2 : index
    %c0_55 = arith.constant 0 : index
    %28 = tpu.strided_load %arg3[%c0_52, %c2_53, %c2_54, %c0_55] {strides = array<i32: 1, 4, 4, 1>} : memref<4x32x32x8xf32, #tpu.memory_space<vmem>>, vector<4x8x8x8xf32>
    %29 = arith.addf %27, %28 : vector<4x8x8x8xf32>
    %c0_56 = arith.constant 0 : index
    %c2_57 = arith.constant 2 : index
    %c3_58 = arith.constant 3 : index
    %c0_59 = arith.constant 0 : index
    %30 = tpu.strided_load %arg3[%c0_56, %c2_57, %c3_58, %c0_59] {strides = array<i32: 1, 4, 4, 1>} : memref<4x32x32x8xf32, #tpu.memory_space<vmem>>, vector<4x8x8x8xf32>
    %31 = arith.addf %29, %30 : vector<4x8x8x8xf32>
    %c0_60 = arith.constant 0 : index
    %c3_61 = arith.constant 3 : index
    %c0_62 = arith.constant 0 : index
    %c0_63 = arith.constant 0 : index
    %32 = tpu.strided_load %arg3[%c0_60, %c3_61, %c0_62, %c0_63] {strides = array<i32: 1, 4, 4, 1>} : memref<4x32x32x8xf32, #tpu.memory_space<vmem>>, vector<4x8x8x8xf32>
    %33 = arith.addf %31, %32 : vector<4x8x8x8xf32>
    %c0_64 = arith.constant 0 : index
    %c3_65 = arith.constant 3 : index
    %c1_66 = arith.constant 1 : index
    %c0_67 = arith.constant 0 : index
    %34 = tpu.strided_load %arg3[%c0_64, %c3_65, %c1_66, %c0_67] {strides = array<i32: 1, 4, 4, 1>} : memref<4x32x32x8xf32, #tpu.memory_space<vmem>>, vector<4x8x8x8xf32>
    %35 = arith.addf %33, %34 : vector<4x8x8x8xf32>
    %c0_68 = arith.constant 0 : index
    %c3_69 = arith.constant 3 : index
    %c2_70 = arith.constant 2 : index
    %c0_71 = arith.constant 0 : index
    %36 = tpu.strided_load %arg3[%c0_68, %c3_69, %c2_70, %c0_71] {strides = array<i32: 1, 4, 4, 1>} : memref<4x32x32x8xf32, #tpu.memory_space<vmem>>, vector<4x8x8x8xf32>
    %37 = arith.addf %35, %36 : vector<4x8x8x8xf32>
    %c0_72 = arith.constant 0 : index
    %c3_73 = arith.constant 3 : index
    %c3_74 = arith.constant 3 : index
    %c0_75 = arith.constant 0 : index
    %38 = tpu.strided_load %arg3[%c0_72, %c3_73, %c3_74, %c0_75] {strides = array<i32: 1, 4, 4, 1>} : memref<4x32x32x8xf32, #tpu.memory_space<vmem>>, vector<4x8x8x8xf32>
    %39 = arith.addf %37, %38 : vector<4x8x8x8xf32>
    %cst_76 = arith.constant 6.250000e-02 : f32
    %40 = vector.broadcast %cst_76 : f32 to vector<4x8x8x8xf32>
    %41 = arith.mulf %39, %40 : vector<4x8x8x8xf32>
    %cst_77 = arith.constant 0.000000e+00 : f32
    %42 = vector.broadcast %cst_77 : f32 to vector<4x1x10x32xf32>
    %c0_78 = arith.constant 0 : index
    %c0_79 = arith.constant 0 : index
    %c0_80 = arith.constant 0 : index
    %c0_81 = arith.constant 0 : index
    %43 = vector.load %arg8[%c0_78, %c0_79, %c0_80, %c0_81] : memref<4x10x10x32xf32, #tpu.memory_space<vmem>>, vector<4x1x10x32xf32>
    tpu.vector_store %arg8[%c0_78, %c0_79, %c0_80, %c0_81], %42 {strides = array<i32>} : memref<4x10x10x32xf32, #tpu.memory_space<vmem>>, vector<4x1x10x32xf32>,
    %c0_82 = arith.constant 0 : index
    %c9 = arith.constant 9 : index
    %c0_83 = arith.constant 0 : index
    %c0_84 = arith.constant 0 : index
    %44 = vector.load %arg8[%c0_82, %c9, %c0_83, %c0_84] : memref<4x10x10x32xf32, #tpu.memory_space<vmem>>, vector<4x1x10x32xf32>
    tpu.vector_store %arg8[%c0_82, %c9, %c0_83, %c0_84], %42 {strides = array<i32>} : memref<4x10x10x32xf32, #tpu.memory_space<vmem>>, vector<4x1x10x32xf32>,
    %cst_85 = arith.constant 0.000000e+00 : f32
    %45 = vector.broadcast %cst_85 : f32 to vector<4x10x1x32xf32>
    %c0_86 = arith.constant 0 : index
    %c0_87 = arith.constant 0 : index
    %c0_88 = arith.constant 0 : index
    %c0_89 = arith.constant 0 : index
    %46 = vector.load %arg8[%c0_86, %c0_87, %c0_88, %c0_89] : memref<4x10x10x32xf32, #tpu.memory_space<vmem>>, vector<4x10x1x32xf32>
    tpu.vector_store %arg8[%c0_86, %c0_87, %c0_88, %c0_89], %45 {strides = array<i32>} : memref<4x10x10x32xf32, #tpu.memory_space<vmem>>, vector<4x10x1x32xf32>,
    %c0_90 = arith.constant 0 : index
    %c0_91 = arith.constant 0 : index
    %c9_92 = arith.constant 9 : index
    %c0_93 = arith.constant 0 : index
    %47 = vector.load %arg8[%c0_90, %c0_91, %c9_92, %c0_93] : memref<4x10x10x32xf32, #tpu.memory_space<vmem>>, vector<4x10x1x32xf32>
    tpu.vector_store %arg8[%c0_90, %c0_91, %c9_92, %c0_93], %45 {strides = array<i32>} : memref<4x10x10x32xf32, #tpu.memory_space<vmem>>, vector<4x10x1x32xf32>,
    %c0_94 = arith.constant 0 : index
    %c0_95 = arith.constant 0 : index
    %c0_96 = arith.constant 0 : index
    %c0_97 = arith.constant 0 : index
    %48 = vector.load %arg4[%c0_94, %c0_95, %c0_96, %c0_97] : memref<4x8x8x8xf32, #tpu.memory_space<vmem>>, vector<4x8x8x8xf32>
    %c0_98 = arith.constant 0 : index
    %c0_99 = arith.constant 0 : index
    %c0_100 = arith.constant 0 : index
    %c0_101 = arith.constant 0 : index
    %49 = vector.load %arg1[%c0_98, %c0_99, %c0_100, %c0_101] : memref<4x8x8x8xf32, #tpu.memory_space<vmem>>, vector<4x8x8x8xf32>
    %c0_102 = arith.constant 0 : index
    %c1_103 = arith.constant 1 : index
    %c1_104 = arith.constant 1 : index
    %c0_105 = arith.constant 0 : index
    %50 = vector.load %arg8[%c0_102, %c1_103, %c1_104, %c0_105] : memref<4x10x10x32xf32, #tpu.memory_space<vmem>>, vector<4x8x8x8xf32>
    tpu.vector_store %arg8[%c0_102, %c1_103, %c1_104, %c0_105], %49 {strides = array<i32>} : memref<4x10x10x32xf32, #tpu.memory_space<vmem>>, vector<4x8x8x8xf32>,
    %c0_106 = arith.constant 0 : index
    %c1_107 = arith.constant 1 : index
    %c1_108 = arith.constant 1 : index
    %c8 = arith.constant 8 : index
    %51 = vector.load %arg8[%c0_106, %c1_107, %c1_108, %c8] : memref<4x10x10x32xf32, #tpu.memory_space<vmem>>, vector<4x8x8x8xf32>
    tpu.vector_store %arg8[%c0_106, %c1_107, %c1_108, %c8], %8 {strides = array<i32>} : memref<4x10x10x32xf32, #tpu.memory_space<vmem>>, vector<4x8x8x8xf32>,
    %c0_109 = arith.constant 0 : index
    %c1_110 = arith.constant 1 : index
    %c1_111 = arith.constant 1 : index
    %c16 = arith.constant 16 : index
    %52 = vector.load %arg8[%c0_109, %c1_110, %c1_111, %c16] : memref<4x10x10x32xf32, #tpu.memory_space<vmem>>, vector<4x8x8x8xf32>
    tpu.vector_store %arg8[%c0_109, %c1_110, %c1_111, %c16], %41 {strides = array<i32>} : memref<4x10x10x32xf32, #tpu.memory_space<vmem>>, vector<4x8x8x8xf32>,
    %c0_112 = arith.constant 0 : index
    %c1_113 = arith.constant 1 : index
    %c1_114 = arith.constant 1 : index
    %c24 = arith.constant 24 : index
    %53 = vector.load %arg8[%c0_112, %c1_113, %c1_114, %c24] : memref<4x10x10x32xf32, #tpu.memory_space<vmem>>, vector<4x8x8x8xf32>
    tpu.vector_store %arg8[%c0_112, %c1_113, %c1_114, %c24], %48 {strides = array<i32>} : memref<4x10x10x32xf32, #tpu.memory_space<vmem>>, vector<4x8x8x8xf32>,
    %c0_115 = arith.constant 0 : index
    %c0_116 = arith.constant 0 : index
    %c0_117 = arith.constant 0 : index
    %c0_118 = arith.constant 0 : index
    %54 = vector.load %arg8[%c0_115, %c0_116, %c0_117, %c0_118] : memref<4x10x10x32xf32, #tpu.memory_space<vmem>>, vector<4x8x8x32xf32>
    %c0_119 = arith.constant 0 : index
    %c0_120 = arith.constant 0 : index
    %c1_121 = arith.constant 1 : index
    %c0_122 = arith.constant 0 : index
    %55 = vector.load %arg8[%c0_119, %c0_120, %c1_121, %c0_122] : memref<4x10x10x32xf32, #tpu.memory_space<vmem>>, vector<4x8x8x32xf32>
    %c0_123 = arith.constant 0 : index
    %c0_124 = arith.constant 0 : index
    %c2_125 = arith.constant 2 : index
    %c0_126 = arith.constant 0 : index
    %56 = vector.load %arg8[%c0_123, %c0_124, %c2_125, %c0_126] : memref<4x10x10x32xf32, #tpu.memory_space<vmem>>, vector<4x8x8x32xf32>
    %c0_127 = arith.constant 0 : index
    %c1_128 = arith.constant 1 : index
    %c0_129 = arith.constant 0 : index
    %c0_130 = arith.constant 0 : index
    %57 = vector.load %arg8[%c0_127, %c1_128, %c0_129, %c0_130] : memref<4x10x10x32xf32, #tpu.memory_space<vmem>>, vector<4x8x8x32xf32>
    %c0_131 = arith.constant 0 : index
    %c1_132 = arith.constant 1 : index
    %c1_133 = arith.constant 1 : index
    %c0_134 = arith.constant 0 : index
    %58 = vector.load %arg8[%c0_131, %c1_132, %c1_133, %c0_134] : memref<4x10x10x32xf32, #tpu.memory_space<vmem>>, vector<4x8x8x32xf32>
    %c0_135 = arith.constant 0 : index
    %c1_136 = arith.constant 1 : index
    %c2_137 = arith.constant 2 : index
    %c0_138 = arith.constant 0 : index
    %59 = vector.load %arg8[%c0_135, %c1_136, %c2_137, %c0_138] : memref<4x10x10x32xf32, #tpu.memory_space<vmem>>, vector<4x8x8x32xf32>
    %c0_139 = arith.constant 0 : index
    %c2_140 = arith.constant 2 : index
    %c0_141 = arith.constant 0 : index
    %c0_142 = arith.constant 0 : index
    %60 = vector.load %arg8[%c0_139, %c2_140, %c0_141, %c0_142] : memref<4x10x10x32xf32, #tpu.memory_space<vmem>>, vector<4x8x8x32xf32>
    %c0_143 = arith.constant 0 : index
    %c2_144 = arith.constant 2 : index
    %c1_145 = arith.constant 1 : index
    %c0_146 = arith.constant 0 : index
    %61 = vector.load %arg8[%c0_143, %c2_144, %c1_145, %c0_146] : memref<4x10x10x32xf32, #tpu.memory_space<vmem>>, vector<4x8x8x32xf32>
    %c0_147 = arith.constant 0 : index
    %c2_148 = arith.constant 2 : index
    %c2_149 = arith.constant 2 : index
    %c0_150 = arith.constant 0 : index
    %62 = vector.load %arg8[%c0_147, %c2_148, %c2_149, %c0_150] : memref<4x10x10x32xf32, #tpu.memory_space<vmem>>, vector<4x8x8x32xf32>
    %63 = tpu.concatenate %54, %55, %56, %57, %58, %59, %60, %61, %62 in 3 : vector<4x8x8x32xf32>, vector<4x8x8x32xf32>, vector<4x8x8x32xf32>, vector<4x8x8x32xf32>, vector<4x8x8x32xf32>, vector<4x8x8x32xf32>, vector<4x8x8x32xf32>, vector<4x8x8x32xf32>, vector<4x8x8x32xf32> -> vector<4x8x8x288xf32>
    %64 = vector.shape_cast %63 : vector<4x8x8x288xf32> to vector<256x288xf32>
    %65 = arith.truncf %64 : vector<256x288xf32> to vector<256x288xbf16>
    %c0_151 = arith.constant 0 : index
    %c0_152 = arith.constant 0 : index
    %66 = vector.load %arg5[%c0_151, %c0_152] : memref<288x24xbf16, #tpu.memory_space<vmem>>, vector<288x24xbf16>
    %cst_153 = arith.constant dense<0.000000e+00> : vector<256x24xf32>
    %67 = tpu.matmul %65, %66, %cst_153 {dimension_numbers = #tpu.dot_dimension_numbers<[1], [0], [0], [1], [0, 0, 1, 1], [], []>} : vector<256x288xbf16>, vector<288x24xbf16>, vector<256x24xf32> -> vector<256x24xf32>
    %68 = vector.shape_cast %67 : vector<256x24xf32> to vector<4x8x8x24xf32>
    %c0_154 = arith.constant 0 : index
    %c0_155 = arith.constant 0 : index
    %c0_156 = arith.constant 0 : index
    %69 = vector.load %arg6[%c0_154, %c0_155, %c0_156] : memref<8x8x24xf32, #tpu.memory_space<vmem>>, vector<8x8x24xf32>
    %70 = vector.shape_cast %69 : vector<8x8x24xf32> to vector<1x8x8x24xf32>
    %71 = vector.broadcast %70 : vector<1x8x8x24xf32> to vector<4x8x8x24xf32>
    %72 = arith.addf %68, %71 : vector<4x8x8x24xf32>
    %73 = vector.extract_strided_slice %72 {offsets = [0, 0, 0, 0], sizes = [4, 8, 8, 8], strides = [1, 1, 1, 1]} : vector<4x8x8x24xf32> to vector<4x8x8x8xf32>
    %74 = arith.negf %73 : vector<4x8x8x8xf32>
    %75 = math.exp %74 : vector<4x8x8x8xf32>
    %cst_157 = arith.constant 1.000000e+00 : f32
    %76 = vector.broadcast %cst_157 : f32 to vector<4x8x8x8xf32>
    %77 = arith.addf %76, %75 : vector<4x8x8x8xf32>
    %78 = arith.divf %76, %77 : vector<4x8x8x8xf32>
    %79 = vector.extract_strided_slice %72 {offsets = [0, 0, 0, 8], sizes = [4, 8, 8, 8], strides = [1, 1, 1, 1]} : vector<4x8x8x24xf32> to vector<4x8x8x8xf32>
    %80 = arith.negf %79 : vector<4x8x8x8xf32>
    %81 = math.exp %80 : vector<4x8x8x8xf32>
    %cst_158 = arith.constant 1.000000e+00 : f32
    %82 = vector.broadcast %cst_158 : f32 to vector<4x8x8x8xf32>
    %83 = arith.addf %82, %81 : vector<4x8x8x8xf32>
    %84 = arith.divf %82, %83 : vector<4x8x8x8xf32>
    %85 = vector.extract_strided_slice %72 {offsets = [0, 0, 0, 16], sizes = [4, 8, 8, 8], strides = [1, 1, 1, 1]} : vector<4x8x8x24xf32> to vector<4x8x8x8xf32>
    %86 = math.tanh %85 : vector<4x8x8x8xf32>
    %87 = arith.mulf %78, %48 : vector<4x8x8x8xf32>
    %cst_159 = arith.constant 1.000000e+00 : f32
    %88 = vector.broadcast %cst_159 : f32 to vector<4x8x8x8xf32>
    %89 = arith.subf %88, %84 : vector<4x8x8x8xf32>
    %90 = arith.mulf %87, %89 : vector<4x8x8x8xf32>
    %91 = arith.mulf %84, %86 : vector<4x8x8x8xf32>
    %92 = arith.addf %90, %91 : vector<4x8x8x8xf32>
    %c0_160 = arith.constant 0 : index
    %c0_161 = arith.constant 0 : index
    %c0_162 = arith.constant 0 : index
    %c0_163 = arith.constant 0 : index
    %93 = vector.load %arg7[%c0_160, %c0_161, %c0_162, %c0_163] : memref<4x8x8x8xf32, #tpu.memory_space<vmem>>, vector<4x8x8x8xf32>
    tpu.vector_store %arg7[%c0_160, %c0_161, %c0_162, %c0_163], %92 {strides = array<i32>} : memref<4x8x8x8xf32, #tpu.memory_space<vmem>>, vector<4x8x8x8xf32>,
    return
  }
  func.func @transform_0(%arg0: i32) -> (i32, i32, i32, i32) {
    %c0_i32 = arith.constant 0 : i32
    %c0_i32_0 = arith.constant 0 : i32
    %c0_i32_1 = arith.constant 0 : i32
    %c0_i32_2 = arith.constant 0 : i32
    return %arg0, %c0_i32, %c0_i32_0, %c0_i32_1 : i32, i32, i32, i32
  }
  func.func @transform_1(%arg0: i32) -> (i32, i32, i32, i32) {
    %c0_i32 = arith.constant 0 : i32
    %c0_i32_0 = arith.constant 0 : i32
    %c0_i32_1 = arith.constant 0 : i32
    %c0_i32_2 = arith.constant 0 : i32
    return %arg0, %c0_i32, %c0_i32_0, %c0_i32_1 : i32, i32, i32, i32
  }
  func.func @transform_2(%arg0: i32) -> (i32, i32, i32, i32) {
    %c0_i32 = arith.constant 0 : i32
    %c0_i32_0 = arith.constant 0 : i32
    %c0_i32_1 = arith.constant 0 : i32
    %c0_i32_2 = arith.constant 0 : i32
    return %arg0, %c0_i32, %c0_i32_0, %c0_i32_1 : i32, i32, i32, i32
  }
  func.func @transform_3(%arg0: i32) -> (i32, i32, i32, i32) {
    %c0_i32 = arith.constant 0 : i32
    %c0_i32_0 = arith.constant 0 : i32
    %c0_i32_1 = arith.constant 0 : i32
    %c0_i32_2 = arith.constant 0 : i32
    return %arg0, %c0_i32, %c0_i32_0, %c0_i32_1 : i32, i32, i32, i32
  }
  func.func @transform_4(%arg0: i32) -> (i32, i32) {
    %c0_i32 = arith.constant 0 : i32
    %c0_i32_0 = arith.constant 0 : i32
    %c0_i32_1 = arith.constant 0 : i32
    return %c0_i32, %c0_i32_0 : i32, i32
  }
  func.func @transform_5(%arg0: i32) -> (i32, i32, i32) {
    %c0_i32 = arith.constant 0 : i32
    %c0_i32_0 = arith.constant 0 : i32
    %c0_i32_1 = arith.constant 0 : i32
    %c0_i32_2 = arith.constant 0 : i32
    return %c0_i32, %c0_i32_0, %c0_i32_1 : i32, i32, i32
  }
  func.func @transform_6(%arg0: i32) -> (i32, i32, i32, i32) {
    %c0_i32 = arith.constant 0 : i32
    %c0_i32_0 = arith.constant 0 : i32
    %c0_i32_1 = arith.constant 0 : i32
    %c0_i32_2 = arith.constant 0 : i32
    return %arg0, %c0_i32, %c0_i32_0, %c0_i32_1 : i32, i32, i32, i32
  }
}

</mosaic_0001>

<llo_original>
// kernel: multiscale_sensory_updater.1
$region0: #{multiscale_sensory_updater.1}
  #allocation0 [shape = 'u32[]', space=smem, size = 0x4, offset = 0x4, fixed_abs, tag = 'smem constant byte address 0x4 - core index']
  #allocation1 [shape = 'u32[144,128]{1,0:T(1,128)}', space=vmem, size = 0x12000, scoped, tag = 'internal scratch']
  #allocation2 [shape = 'f32[4,10,10,32]{3,2,1,0:T(8,128)}', space=vmem, size = 0x50000, scoped, tag = 'scratch operand']
  %s0 = inlined_call_operand.vmem [shape: f32[4,8,8,8], index: 0, kind: input, shape index: {}]
  %s1 = inlined_call_operand.vmem [shape: f32[4,16,16,8], index: 1, kind: input, shape index: {}]
  %s2 = inlined_call_operand.vmem [shape: f32[4,32,32,8], index: 2, kind: input, shape index: {}]
  %s3 = inlined_call_operand.vmem [shape: f32[4,8,8,8], index: 3, kind: input, shape index: {}]
  %s4 = inlined_call_operand.vmem [shape: bf16[288,24], index: 4, kind: input, shape index: {}]
  %s5 = inlined_call_operand.vmem [shape: f32[8,8,24], index: 5, kind: input, shape index: {}]
  %s6 = inlined_call_operand.hbm [shape: f32[4,8,8,8], index: 6, kind: output, shape index: {}]
  %s7 = sld [smem:[#allocation0]]
  $region34: #{multiscale_sensory_updater.1} parent=0
    _
  %s9 = ssub.s32 1, %s7
  %s10 = scalar_select 0, %s9, %s7
  $region1: #{multiscale_sensory_updater.1} parent=0
    #allocation3 [shape = 'u8[131072]{0}', space=vmem, size = 0x20000, scoped, tag = 'output window, operand 0, single buffered']
    #allocation4 [shape = 's32[1]{0}', space=sflag, size = 0x4, scoped, tag = 'scoped memory for multiscale_sensory_updater.1']
    %11 = vsyncpa [#allocation4], 0
    // Predicated region
    $region2: #{multiscale_sensory_updater.1} parent=1 // pred_check
      _
    $region3: #{multiscale_sensory_updater.1} parent=1 // pred_check_branch
      %13 = sbr.rel (0) target = $region5
    $region4: #{multiscale_sensory_updater.1} parent=1 // pred_region
      _
    $region5: #{multiscale_sensory_updater.1} parent=1 // pred_fallthru
      _
    // Predicated region
    $region6: #{multiscale_sensory_updater.1} parent=1 // pred_check
      _
    $region7: #{multiscale_sensory_updater.1} parent=1 // pred_check_branch
      %15 = sbr.rel (0) target = $region9
    $region8: #{multiscale_sensory_updater.1} parent=1 // pred_region
      _
    $region9: #{multiscale_sensory_updater.1} parent=1 // pred_fallthru
      _
    // Predicated region
    $region10: #{multiscale_sensory_updater.1} parent=1 // pred_check
      _
    $region11: #{multiscale_sensory_updater.1} parent=1 // pred_check_branch
      %17 = sbr.rel (0) target = $region13
    $region12: #{multiscale_sensory_updater.1} parent=1 // pred_region
      _
    $region13: #{multiscale_sensory_updater.1} parent=1 // pred_fallthru
      _
    // Predicated region
    $region14: #{multiscale_sensory_updater.1} parent=1 // pred_check
      _
    $region15: #{multiscale_sensory_updater.1} parent=1 // pred_check_branch
      %19 = sbr.rel (0) target = $region17
    $region16: #{multiscale_sensory_updater.1} parent=1 // pred_region
      _
    $region17: #{multiscale_sensory_updater.1} parent=1 // pred_fallthru
      _
    // Predicated region
    $region18: #{multiscale_sensory_updater.1} parent=1 // pred_check
      _
    $region19: #{multiscale_sensory_updater.1} parent=1 // pred_check_branch
      %21 = sbr.rel (0) target = $region21
    $region20: #{multiscale_sensory_updater.1} parent=1 // pred_region
      _
    $region21: #{multiscale_sensory_updater.1} parent=1 // pred_fallthru
      _
    // Predicated region
    $region22: #{multiscale_sensory_updater.1} parent=1 // pred_check
      _
    $region23: #{multiscale_sensory_updater.1} parent=1 // pred_check_branch
      %23 = sbr.rel (0) target = $region25
    $region24: #{multiscale_sensory_updater.1} parent=1 // pred_region
      _
    $region25: #{multiscale_sensory_updater.1} parent=1 // pred_fallthru
      _
    %v25 = vld [vmem:[%s1] ss:$2 sm:$0xff]
    %s26 = scalar_lea.vmem %s1, 32
    %v27 = vld [vmem:[%s26] ss:$2 sm:$0xff]
    %s28 = scalar_lea.vmem %s1, 64
    %v29 = vld [vmem:[%s28] ss:$2 sm:$0xff]
    %s30 = scalar_lea.vmem %s1, 96
    %v31 = vld [vmem:[%s30] ss:$2 sm:$0xff]
    %s32 = scalar_lea.vmem %s1, 128
    %v33 = vld [vmem:[%s32] ss:$2 sm:$0xff]
    %s34 = scalar_lea.vmem %s1, 160
    %v35 = vld [vmem:[%s34] ss:$2 sm:$0xff]
    %s36 = scalar_lea.vmem %s1, 192
    %v37 = vld [vmem:[%s36] ss:$2 sm:$0xff]
    %s38 = scalar_lea.vmem %s1, 224
    %v39 = vld [vmem:[%s38] ss:$2 sm:$0xff]
    %s40 = scalar_lea.vmem %s1, 256
    %v41 = vld [vmem:[%s40] ss:$2 sm:$0xff]
    %s42 = scalar_lea.vmem %s1, 288
    %v43 = vld [vmem:[%s42] ss:$2 sm:$0xff]
    %s44 = scalar_lea.vmem %s1, 320
    %v45 = vld [vmem:[%s44] ss:$2 sm:$0xff]
    %s46 = scalar_lea.vmem %s1, 352
    %v47 = vld [vmem:[%s46] ss:$2 sm:$0xff]
    %s48 = scalar_lea.vmem %s1, 384
    %v49 = vld [vmem:[%s48] ss:$2 sm:$0xff]
    %s50 = scalar_lea.vmem %s1, 416
    %v51 = vld [vmem:[%s50] ss:$2 sm:$0xff]
    %s52 = scalar_lea.vmem %s1, 448
    %v53 = vld [vmem:[%s52] ss:$2 sm:$0xff]
    %s54 = scalar_lea.vmem %s1, 480
    %v55 = vld [vmem:[%s54] ss:$2 sm:$0xff]
    %s56 = scalar_lea.vmem %s1, 512
    %v57 = vld [vmem:[%s56] ss:$2 sm:$0xff]
    %s58 = scalar_lea.vmem %s1, 544
    %v59 = vld [vmem:[%s58] ss:$2 sm:$0xff]
    %s60 = scalar_lea.vmem %s1, 576
    %v61 = vld [vmem:[%s60] ss:$2 sm:$0xff]
    %s62 = scalar_lea.vmem %s1, 608
    %v63 = vld [vmem:[%s62] ss:$2 sm:$0xff]
    %s64 = scalar_lea.vmem %s1, 640
    %v65 = vld [vmem:[%s64] ss:$2 sm:$0xff]
    %s66 = scalar_lea.vmem %s1, 672
    %v67 = vld [vmem:[%s66] ss:$2 sm:$0xff]
    %s68 = scalar_lea.vmem %s1, 704
    %v69 = vld [vmem:[%s68] ss:$2 sm:$0xff]
    %s70 = scalar_lea.vmem %s1, 736
    %v71 = vld [vmem:[%s70] ss:$2 sm:$0xff]
    %s72 = scalar_lea.vmem %s1, 768
    %v73 = vld [vmem:[%s72] ss:$2 sm:$0xff]
    %s74 = scalar_lea.vmem %s1, 800
    %v75 = vld [vmem:[%s74] ss:$2 sm:$0xff]
    %s76 = scalar_lea.vmem %s1, 832
    %v77 = vld [vmem:[%s76] ss:$2 sm:$0xff]
    %s78 = scalar_lea.vmem %s1, 864
    %v79 = vld [vmem:[%s78] ss:$2 sm:$0xff]
    %s80 = scalar_lea.vmem %s1, 896
    %v81 = vld [vmem:[%s80] ss:$2 sm:$0xff]
    %s82 = scalar_lea.vmem %s1, 928
    %v83 = vld [vmem:[%s82] ss:$2 sm:$0xff]
    %s84 = scalar_lea.vmem %s1, 960
    %v85 = vld [vmem:[%s84] ss:$2 sm:$0xff]
    %s86 = scalar_lea.vmem %s1, 992
    %v87 = vld [vmem:[%s86] ss:$2 sm:$0xff]
    %s88 = scalar_lea.vmem %s1, 1
    %v89 = vld [vmem:[%s88] ss:$2 sm:$0xff]
    %s90 = scalar_lea.vmem %s1, 33
    %v91 = vld [vmem:[%s90] ss:$2 sm:$0xff]
    %s92 = scalar_lea.vmem %s1, 65
    %v93 = vld [vmem:[%s92] ss:$2 sm:$0xff]
    %s94 = scalar_lea.vmem %s1, 97
    %v95 = vld [vmem:[%s94] ss:$2 sm:$0xff]
    %s96 = scalar_lea.vmem %s1, 129
    %v97 = vld [vmem:[%s96] ss:$2 sm:$0xff]
    %s98 = scalar_lea.vmem %s1, 161
    %v99 = vld [vmem:[%s98] ss:$2 sm:$0xff]
    %s100 = scalar_lea.vmem %s1, 193
    %v101 = vld [vmem:[%s100] ss:$2 sm:$0xff]
    %s102 = scalar_lea.vmem %s1, 225
    %v103 = vld [vmem:[%s102] ss:$2 sm:$0xff]
    %s104 = scalar_lea.vmem %s1, 257
    %v105 = vld [vmem:[%s104] ss:$2 sm:$0xff]
    %s106 = scalar_lea.vmem %s1, 289
    %v107 = vld [vmem:[%s106] ss:$2 sm:$0xff]
    %s108 = scalar_lea.vmem %s1, 321
    %v109 = vld [vmem:[%s108] ss:$2 sm:$0xff]
    %s110 = scalar_lea.vmem %s1, 353
    %v111 = vld [vmem:[%s110] ss:$2 sm:$0xff]
    %s112 = scalar_lea.vmem %s1, 385
    %v113 = vld [vmem:[%s112] ss:$2 sm:$0xff]
    %s114 = scalar_lea.vmem %s1, 417
    %v115 = vld [vmem:[%s114] ss:$2 sm:$0xff]
    %s116 = scalar_lea.vmem %s1, 449
    %v117 = vld [vmem:[%s116] ss:$2 sm:$0xff]
    %s118 = scalar_lea.vmem %s1, 481
    %v119 = vld [vmem:[%s118] ss:$2 sm:$0xff]
    %s120 = scalar_lea.vmem %s1, 513
    %v121 = vld [vmem:[%s120] ss:$2 sm:$0xff]
    %s122 = scalar_lea.vmem %s1, 545
    %v123 = vld [vmem:[%s122] ss:$2 sm:$0xff]
    %s124 = scalar_lea.vmem %s1, 577
    %v125 = vld [vmem:[%s124] ss:$2 sm:$0xff]
    %s126 = scalar_lea.vmem %s1, 609
    %v127 = vld [vmem:[%s126] ss:$2 sm:$0xff]
    %s128 = scalar_lea.vmem %s1, 641
    %v129 = vld [vmem:[%s128] ss:$2 sm:$0xff]
    %s130 = scalar_lea.vmem %s1, 673
    %v131 = vld [vmem:[%s130] ss:$2 sm:$0xff]
    %s132 = scalar_lea.vmem %s1, 705
    %v133 = vld [vmem:[%s132] ss:$2 sm:$0xff]
    %s134 = scalar_lea.vmem %s1, 737
    %v135 = vld [vmem:[%s134] ss:$2 sm:$0xff]
    %s136 = scalar_lea.vmem %s1, 769
    %v137 = vld [vmem:[%s136] ss:$2 sm:$0xff]
    %s138 = scalar_lea.vmem %s1, 801
    %v139 = vld [vmem:[%s138] ss:$2 sm:$0xff]
    %s140 = scalar_lea.vmem %s1, 833
    %v141 = vld [vmem:[%s140] ss:$2 sm:$0xff]
    %s142 = scalar_lea.vmem %s1, 865
    %v143 = vld [vmem:[%s142] ss:$2 sm:$0xff]
    %s144 = scalar_lea.vmem %s1, 897
    %v145 = vld [vmem:[%s144] ss:$2 sm:$0xff]
    %s146 = scalar_lea.vmem %s1, 929
    %v147 = vld [vmem:[%s146] ss:$2 sm:$0xff]
    %s148 = scalar_lea.vmem %s1, 961
    %v149 = vld [vmem:[%s148] ss:$2 sm:$0xff]
    %s150 = scalar_lea.vmem %s1, 993
    %v151 = vld [vmem:[%s150] ss:$2 sm:$0xff]
    %v152 = vadd.f32 %v25, %v89
    %v153 = vadd.f32 %v27, %v91
    %v154 = vadd.f32 %v29, %v93
    %v155 = vadd.f32 %v31, %v95
    %v156 = vadd.f32 %v33, %v97
    %v157 = vadd.f32 %v35, %v99
    %v158 = vadd.f32 %v37, %v101
    %v159 = vadd.f32 %v39, %v103
    %v160 = vadd.f32 %v41, %v105
    %v161 = vadd.f32 %v43, %v107
    %v162 = vadd.f32 %v45, %v109
    %v163 = vadd.f32 %v47, %v111
    %v164 = vadd.f32 %v49, %v113
    %v165 = vadd.f32 %v51, %v115
    %v166 = vadd.f32 %v53, %v117
    %v167 = vadd.f32 %v55, %v119
    %v168 = vadd.f32 %v57, %v121
    %v169 = vadd.f32 %v59, %v123
    %v170 = vadd.f32 %v61, %v125
    %v171 = vadd.f32 %v63, %v127
    %v172 = vadd.f32 %v65, %v129
    %v173 = vadd.f32 %v67, %v131
    %v174 = vadd.f32 %v69, %v133
    %v175 = vadd.f32 %v71, %v135
    %v176 = vadd.f32 %v73, %v137
    %v177 = vadd.f32 %v75, %v139
    %v178 = vadd.f32 %v77, %v141
    %v179 = vadd.f32 %v79, %v143
    %v180 = vadd.f32 %v81, %v145
    %v181 = vadd.f32 %v83, %v147
    %v182 = vadd.f32 %v85, %v149
    %v183 = vadd.f32 %v87, %v151
    %s184 = scalar_lea.vmem %s1, 16
    %v185 = vld [vmem:[%s184] ss:$2 sm:$0xff]
    %s186 = scalar_lea.vmem %s184, 32
    %v187 = vld [vmem:[%s186] ss:$2 sm:$0xff]
    %s188 = scalar_lea.vmem %s184, 64
    %v189 = vld [vmem:[%s188] ss:$2 sm:$0xff]
    %s190 = scalar_lea.vmem %s184, 96
    %v191 = vld [vmem:[%s190] ss:$2 sm:$0xff]
    %s192 = scalar_lea.vmem %s184, 128
    %v193 = vld [vmem:[%s192] ss:$2 sm:$0xff]
    %s194 = scalar_lea.vmem %s184, 160
    %v195 = vld [vmem:[%s194] ss:$2 sm:$0xff]
    %s196 = scalar_lea.vmem %s184, 192
    %v197 = vld [vmem:[%s196] ss:$2 sm:$0xff]
    %s198 = scalar_lea.vmem %s184, 224
    %v199 = vld [vmem:[%s198] ss:$2 sm:$0xff]
    %s200 = scalar_lea.vmem %s184, 256
    %v201 = vld [vmem:[%s200] ss:$2 sm:$0xff]
    %s202 = scalar_lea.vmem %s184, 288
    %v203 = vld [vmem:[%s202] ss:$2 sm:$0xff]
    %s204 = scalar_lea.vmem %s184, 320
    %v205 = vld [vmem:[%s204] ss:$2 sm:$0xff]
    %s206 = scalar_lea.vmem %s184, 352
    %v207 = vld [vmem:[%s206] ss:$2 sm:$0xff]
    %s208 = scalar_lea.vmem %s184, 384
    %v209 = vld [vmem:[%s208] ss:$2 sm:$0xff]
    %s210 = scalar_lea.vmem %s184, 416
    %v211 = vld [vmem:[%s210] ss:$2 sm:$0xff]
    %s212 = scalar_lea.vmem %s184, 448
    %v213 = vld [vmem:[%s212] ss:$2 sm:$0xff]
    %s214 = scalar_lea.vmem %s184, 480
    %v215 = vld [vmem:[%s214] ss:$2 sm:$0xff]
    %s216 = scalar_lea.vmem %s184, 512
    %v217 = vld [vmem:[%s216] ss:$2 sm:$0xff]
    %s218 = scalar_lea.vmem %s184, 544
    %v219 = vld [vmem:[%s218] ss:$2 sm:$0xff]
    %s220 = scalar_lea.vmem %s184, 576
    %v221 = vld [vmem:[%s220] ss:$2 sm:$0xff]
    %s222 = scalar_lea.vmem %s184, 608
    %v223 = vld [vmem:[%s222] ss:$2 sm:$0xff]
    %s224 = scalar_lea.vmem %s184, 640
    %v225 = vld [vmem:[%s224] ss:$2 sm:$0xff]
    %s226 = scalar_lea.vmem %s184, 672
    %v227 = vld [vmem:[%s226] ss:$2 sm:$0xff]
    %s228 = scalar_lea.vmem %s184, 704
    %v229 = vld [vmem:[%s228] ss:$2 sm:$0xff]
    %s230 = scalar_lea.vmem %s184, 736
    %v231 = vld [vmem:[%s230] ss:$2 sm:$0xff]
    %s232 = scalar_lea.vmem %s184, 768
    %v233 = vld [vmem:[%s232] ss:$2 sm:$0xff]
    %s234 = scalar_lea.vmem %s184, 800
    %v235 = vld [vmem:[%s234] ss:$2 sm:$0xff]
    %s236 = scalar_lea.vmem %s184, 832
    %v237 = vld [vmem:[%s236] ss:$2 sm:$0xff]
    %s238 = scalar_lea.vmem %s184, 864
    %v239 = vld [vmem:[%s238] ss:$2 sm:$0xff]
    %s240 = scalar_lea.vmem %s184, 896
    %v241 = vld [vmem:[%s240] ss:$2 sm:$0xff]
    %s242 = scalar_lea.vmem %s184, 928
    %v243 = vld [vmem:[%s242] ss:$2 sm:$0xff]
    %s244 = scalar_lea.vmem %s184, 960
    %v245 = vld [vmem:[%s244] ss:$2 sm:$0xff]
    %s246 = scalar_lea.vmem %s184, 992
    %v247 = vld [vmem:[%s246] ss:$2 sm:$0xff]
    %v248 = vadd.f32 %v152, %v185
    %v249 = vadd.f32 %v153, %v187
    %v250 = vadd.f32 %v154, %v189
    %v251 = vadd.f32 %v155, %v191
    %v252 = vadd.f32 %v156, %v193
    %v253 = vadd.f32 %v157, %v195
    %v254 = vadd.f32 %v158, %v197
    %v255 = vadd.f32 %v159, %v199
    %v256 = vadd.f32 %v160, %v201
    %v257 = vadd.f32 %v161, %v203
    %v258 = vadd.f32 %v162, %v205
    %v259 = vadd.f32 %v163, %v207
    %v260 = vadd.f32 %v164, %v209
    %v261 = vadd.f32 %v165, %v211
    %v262 = vadd.f32 %v166, %v213
    %v263 = vadd.f32 %v167, %v215
    %v264 = vadd.f32 %v168, %v217
    %v265 = vadd.f32 %v169, %v219
    %v266 = vadd.f32 %v170, %v221
    %v267 = vadd.f32 %v171, %v223
    %v268 = vadd.f32 %v172, %v225
    %v269 = vadd.f32 %v173, %v227
    %v270 = vadd.f32 %v174, %v229
    %v271 = vadd.f32 %v175, %v231
    %v272 = vadd.f32 %v176, %v233
    %v273 = vadd.f32 %v177, %v235
    %v274 = vadd.f32 %v178, %v237
    %v275 = vadd.f32 %v179, %v239
    %v276 = vadd.f32 %v180, %v241
    %v277 = vadd.f32 %v181, %v243
    %v278 = vadd.f32 %v182, %v245
    %v279 = vadd.f32 %v183, %v247
    %s280 = scalar_lea.vmem %s184, 1
    %v281 = vld [vmem:[%s280] ss:$2 sm:$0xff]
    %s282 = scalar_lea.vmem %s184, 33
    %v283 = vld [vmem:[%s282] ss:$2 sm:$0xff]
    %s284 = scalar_lea.vmem %s184, 65
    %v285 = vld [vmem:[%s284] ss:$2 sm:$0xff]
    %s286 = scalar_lea.vmem %s184, 97
    %v287 = vld [vmem:[%s286] ss:$2 sm:$0xff]
    %s288 = scalar_lea.vmem %s184, 129
    %v289 = vld [vmem:[%s288] ss:$2 sm:$0xff]
    %s290 = scalar_lea.vmem %s184, 161
    %v291 = vld [vmem:[%s290] ss:$2 sm:$0xff]
    %s292 = scalar_lea.vmem %s184, 193
    %v293 = vld [vmem:[%s292] ss:$2 sm:$0xff]
    %s294 = scalar_lea.vmem %s184, 225
    %v295 = vld [vmem:[%s294] ss:$2 sm:$0xff]
    %s296 = scalar_lea.vmem %s184, 257
    %v297 = vld [vmem:[%s296] ss:$2 sm:$0xff]
    %s298 = scalar_lea.vmem %s184, 289
    %v299 = vld [vmem:[%s298] ss:$2 sm:$0xff]
    %s300 = scalar_lea.vmem %s184, 321
    %v301 = vld [vmem:[%s300] ss:$2 sm:$0xff]
    %s302 = scalar_lea.vmem %s184, 353
    %v303 = vld [vmem:[%s302] ss:$2 sm:$0xff]
    %s304 = scalar_lea.vmem %s184, 385
    %v305 = vld [vmem:[%s304] ss:$2 sm:$0xff]
    %s306 = scalar_lea.vmem %s184, 417
    %v307 = vld [vmem:[%s306] ss:$2 sm:$0xff]
    %s308 = scalar_lea.vmem %s184, 449
    %v309 = vld [vmem:[%s308] ss:$2 sm:$0xff]
    %s310 = scalar_lea.vmem %s184, 481
    %v311 = vld [vmem:[%s310] ss:$2 sm:$0xff]
    %s312 = scalar_lea.vmem %s184, 513
    %v313 = vld [vmem:[%s312] ss:$2 sm:$0xff]
    %s314 = scalar_lea.vmem %s184, 545
    %v315 = vld [vmem:[%s314] ss:$2 sm:$0xff]
    %s316 = scalar_lea.vmem %s184, 577
    %v317 = vld [vmem:[%s316] ss:$2 sm:$0xff]
    %s318 = scalar_lea.vmem %s184, 609
    %v319 = vld [vmem:[%s318] ss:$2 sm:$0xff]
    %s320 = scalar_lea.vmem %s184, 641
    %v321 = vld [vmem:[%s320] ss:$2 sm:$0xff]
    %s322 = scalar_lea.vmem %s184, 673
    %v323 = vld [vmem:[%s322] ss:$2 sm:$0xff]
    %s324 = scalar_lea.vmem %s184, 705
    %v325 = vld [vmem:[%s324] ss:$2 sm:$0xff]
    %s326 = scalar_lea.vmem %s184, 737
    %v327 = vld [vmem:[%s326] ss:$2 sm:$0xff]
    %s328 = scalar_lea.vmem %s184, 769
    %v329 = vld [vmem:[%s328] ss:$2 sm:$0xff]
    %s330 = scalar_lea.vmem %s184, 801
    %v331 = vld [vmem:[%s330] ss:$2 sm:$0xff]
    %s332 = scalar_lea.vmem %s184, 833
    %v333 = vld [vmem:[%s332] ss:$2 sm:$0xff]
    %s334 = scalar_lea.vmem %s184, 865
    %v335 = vld [vmem:[%s334] ss:$2 sm:$0xff]
    %s336 = scalar_lea.vmem %s184, 897
    %v337 = vld [vmem:[%s336] ss:$2 sm:$0xff]
    %s338 = scalar_lea.vmem %s184, 929
    %v339 = vld [vmem:[%s338] ss:$2 sm:$0xff]
    %s340 = scalar_lea.vmem %s184, 961
    %v341 = vld [vmem:[%s340] ss:$2 sm:$0xff]
    %s342 = scalar_lea.vmem %s184, 993
    %v343 = vld [vmem:[%s342] ss:$2 sm:$0xff]
    %v344 = vadd.f32 %v248, %v281
    %v345 = vadd.f32 %v249, %v283
    %v346 = vadd.f32 %v250, %v285
    %v347 = vadd.f32 %v251, %v287
    %v348 = vadd.f32 %v252, %v289
    %v349 = vadd.f32 %v253, %v291
    %v350 = vadd.f32 %v254, %v293
    %v351 = vadd.f32 %v255, %v295
    %v352 = vadd.f32 %v256, %v297
    %v353 = vadd.f32 %v257, %v299
    %v354 = vadd.f32 %v258, %v301
    %v355 = vadd.f32 %v259, %v303
    %v356 = vadd.f32 %v260, %v305
    %v357 = vadd.f32 %v261, %v307
    %v358 = vadd.f32 %v262, %v309
    %v359 = vadd.f32 %v263, %v311
    %v360 = vadd.f32 %v264, %v313
    %v361 = vadd.f32 %v265, %v315
    %v362 = vadd.f32 %v266, %v317
    %v363 = vadd.f32 %v267, %v319
    %v364 = vadd.f32 %v268, %v321
    %v365 = vadd.f32 %v269, %v323
    %v366 = vadd.f32 %v270, %v325
    %v367 = vadd.f32 %v271, %v327
    %v368 = vadd.f32 %v272, %v329
    %v369 = vadd.f32 %v273, %v331
    %v370 = vadd.f32 %v274, %v333
    %v371 = vadd.f32 %v275, %v335
    %v372 = vadd.f32 %v276, %v337
    %v373 = vadd.f32 %v277, %v339
    %v374 = vadd.f32 %v278, %v341
    %v375 = vadd.f32 %v279, %v343
    %v376 = vmul.f32 %v344, 0.25
    %v377 = vmul.f32 %v345, 0.25
    %v378 = vmul.f32 %v346, 0.25
    %v379 = vmul.f32 %v347, 0.25
    %v380 = vmul.f32 %v348, 0.25
    %v381 = vmul.f32 %v349, 0.25
    %v382 = vmul.f32 %v350, 0.25
    %v383 = vmul.f32 %v351, 0.25
    %v384 = vmul.f32 %v352, 0.25
    %v385 = vmul.f32 %v353, 0.25
    %v386 = vmul.f32 %v354, 0.25
    %v387 = vmul.f32 %v355, 0.25
    %v388 = vmul.f32 %v356, 0.25
    %v389 = vmul.f32 %v357, 0.25
    %v390 = vmul.f32 %v358, 0.25
    %v391 = vmul.f32 %v359, 0.25
    %v392 = vmul.f32 %v360, 0.25
    %v393 = vmul.f32 %v361, 0.25
    %v394 = vmul.f32 %v362, 0.25
    %v395 = vmul.f32 %v363, 0.25
    %v396 = vmul.f32 %v364, 0.25
    %v397 = vmul.f32 %v365, 0.25
    %v398 = vmul.f32 %v366, 0.25
    %v399 = vmul.f32 %v367, 0.25
    %v400 = vmul.f32 %v368, 0.25
    %v401 = vmul.f32 %v369, 0.25
    %v402 = vmul.f32 %v370, 0.25
    %v403 = vmul.f32 %v371, 0.25
    %v404 = vmul.f32 %v372, 0.25
    %v405 = vmul.f32 %v373, 0.25
    %v406 = vmul.f32 %v374, 0.25
    %v407 = vmul.f32 %v375, 0.25
    %v408 = vld [vmem:[%s2] ss:$4 sm:$0xff]
    %s409 = scalar_lea.vmem %s2, 128
    %v410 = vld [vmem:[%s409] ss:$4 sm:$0xff]
    %s411 = scalar_lea.vmem %s2, 256
    %v412 = vld [vmem:[%s411] ss:$4 sm:$0xff]
    %s413 = scalar_lea.vmem %s2, 384
    %v414 = vld [vmem:[%s413] ss:$4 sm:$0xff]
    %s415 = scalar_lea.vmem %s2, 512
    %v416 = vld [vmem:[%s415] ss:$4 sm:$0xff]
    %s417 = scalar_lea.vmem %s2, 640
    %v418 = vld [vmem:[%s417] ss:$4 sm:$0xff]
    %s419 = scalar_lea.vmem %s2, 768
    %v420 = vld [vmem:[%s419] ss:$4 sm:$0xff]
    %s421 = scalar_lea.vmem %s2, 896
    %v422 = vld [vmem:[%s421] ss:$4 sm:$0xff]
    %s423 = scalar_lea.vmem %s2, 1024
    %v424 = vld [vmem:[%s423] ss:$4 sm:$0xff]
    %s425 = scalar_lea.vmem %s2, 1152
    %v426 = vld [vmem:[%s425] ss:$4 sm:$0xff]
    %s427 = scalar_lea.vmem %s2, 1280
    %v428 = vld [vmem:[%s427] ss:$4 sm:$0xff]
    %s429 = scalar_lea.vmem %s2, 1408
    %v430 = vld [vmem:[%s429] ss:$4 sm:$0xff]
    %s431 = scalar_lea.vmem %s2, 1536
    %v432 = vld [vmem:[%s431] ss:$4 sm:$0xff]
    %s433 = scalar_lea.vmem %s2, 1664
    %v434 = vld [vmem:[%s433] ss:$4 sm:$0xff]
    %s435 = scalar_lea.vmem %s2, 1792
    %v436 = vld [vmem:[%s435] ss:$4 sm:$0xff]
    %s437 = scalar_lea.vmem %s2, 1920
    %v438 = vld [vmem:[%s437] ss:$4 sm:$0xff]
    %s439 = scalar_lea.vmem %s2, 2048
    %v440 = vld [vmem:[%s439] ss:$4 sm:$0xff]
    %s441 = scalar_lea.vmem %s2, 2176
    %v442 = vld [vmem:[%s441] ss:$4 sm:$0xff]
    %s443 = scalar_lea.vmem %s2, 2304
    %v444 = vld [vmem:[%s443] ss:$4 sm:$0xff]
    %s445 = scalar_lea.vmem %s2, 2432
    %v446 = vld [vmem:[%s445] ss:$4 sm:$0xff]
    %s447 = scalar_lea.vmem %s2, 2560
    %v448 = vld [vmem:[%s447] ss:$4 sm:$0xff]
    %s449 = scalar_lea.vmem %s2, 2688
    %v450 = vld [vmem:[%s449] ss:$4 sm:$0xff]
    %s451 = scalar_lea.vmem %s2, 2816
    %v452 = vld [vmem:[%s451] ss:$4 sm:$0xff]
    %s453 = scalar_lea.vmem %s2, 2944
    %v454 = vld [vmem:[%s453] ss:$4 sm:$0xff]
    %s455 = scalar_lea.vmem %s2, 3072
    %v456 = vld [vmem:[%s455] ss:$4 sm:$0xff]
    %s457 = scalar_lea.vmem %s2, 3200
    %v458 = vld [vmem:[%s457] ss:$4 sm:$0xff]
    %s459 = scalar_lea.vmem %s2, 3328
    %v460 = vld [vmem:[%s459] ss:$4 sm:$0xff]
    %s461 = scalar_lea.vmem %s2, 3456
    %v462 = vld [vmem:[%s461] ss:$4 sm:$0xff]
    %s463 = scalar_lea.vmem %s2, 3584
    %v464 = vld [vmem:[%s463] ss:$4 sm:$0xff]
    %s465 = scalar_lea.vmem %s2, 3712
    %v466 = vld [vmem:[%s465] ss:$4 sm:$0xff]
    %s467 = scalar_lea.vmem %s2, 3840
    %v468 = vld [vmem:[%s467] ss:$4 sm:$0xff]
    %s469 = scalar_lea.vmem %s2, 3968
    %v470 = vld [vmem:[%s469] ss:$4 sm:$0xff]
    %s471 = scalar_lea.vmem %s2, 1
    %v472 = vld [vmem:[%s471] ss:$4 sm:$0xff]
    %s473 = scalar_lea.vmem %s2, 129
    %v474 = vld [vmem:[%s473] ss:$4 sm:$0xff]
    %s475 = scalar_lea.vmem %s2, 257
    %v476 = vld [vmem:[%s475] ss:$4 sm:$0xff]
    %s477 = scalar_lea.vmem %s2, 385
    %v478 = vld [vmem:[%s477] ss:$4 sm:$0xff]
    %s479 = scalar_lea.vmem %s2, 513
    %v480 = vld [vmem:[%s479] ss:$4 sm:$0xff]
    %s481 = scalar_lea.vmem %s2, 641
    %v482 = vld [vmem:[%s481] ss:$4 sm:$0xff]
    %s483 = scalar_lea.vmem %s2, 769
    %v484 = vld [vmem:[%s483] ss:$4 sm:$0xff]
    %s485 = scalar_lea.vmem %s2, 897
    %v486 = vld [vmem:[%s485] ss:$4 sm:$0xff]
    %s487 = scalar_lea.vmem %s2, 1025
    %v488 = vld [vmem:[%s487] ss:$4 sm:$0xff]
    %s489 = scalar_lea.vmem %s2, 1153
    %v490 = vld [vmem:[%s489] ss:$4 sm:$0xff]
    %s491 = scalar_lea.vmem %s2, 1281
    %v492 = vld [vmem:[%s491] ss:$4 sm:$0xff]
    %s493 = scalar_lea.vmem %s2, 1409
    %v494 = vld [vmem:[%s493] ss:$4 sm:$0xff]
    %s495 = scalar_lea.vmem %s2, 1537
    %v496 = vld [vmem:[%s495] ss:$4 sm:$0xff]
    %s497 = scalar_lea.vmem %s2, 1665
    %v498 = vld [vmem:[%s497] ss:$4 sm:$0xff]
    %s499 = scalar_lea.vmem %s2, 1793
    %v500 = vld [vmem:[%s499] ss:$4 sm:$0xff]
    %s501 = scalar_lea.vmem %s2, 1921
    %v502 = vld [vmem:[%s501] ss:$4 sm:$0xff]
    %s503 = scalar_lea.vmem %s2, 2049
    %v504 = vld [vmem:[%s503] ss:$4 sm:$0xff]
    %s505 = scalar_lea.vmem %s2, 2177
    %v506 = vld [vmem:[%s505] ss:$4 sm:$0xff]
    %s507 = scalar_lea.vmem %s2, 2305
    %v508 = vld [vmem:[%s507] ss:$4 sm:$0xff]
    %s509 = scalar_lea.vmem %s2, 2433
    %v510 = vld [vmem:[%s509] ss:$4 sm:$0xff]
    %s511 = scalar_lea.vmem %s2, 2561
    %v512 = vld [vmem:[%s511] ss:$4 sm:$0xff]
    %s513 = scalar_lea.vmem %s2, 2689
    %v514 = vld [vmem:[%s513] ss:$4 sm:$0xff]
    %s515 = scalar_lea.vmem %s2, 2817
    %v516 = vld [vmem:[%s515] ss:$4 sm:$0xff]
    %s517 = scalar_lea.vmem %s2, 2945
    %v518 = vld [vmem:[%s517] ss:$4 sm:$0xff]
    %s519 = scalar_lea.vmem %s2, 3073
    %v520 = vld [vmem:[%s519] ss:$4 sm:$0xff]
    %s521 = scalar_lea.vmem %s2, 3201
    %v522 = vld [vmem:[%s521] ss:$4 sm:$0xff]
    %s523 = scalar_lea.vmem %s2, 3329
    %v524 = vld [vmem:[%s523] ss:$4 sm:$0xff]
    %s525 = scalar_lea.vmem %s2, 3457
    %v526 = vld [vmem:[%s525] ss:$4 sm:$0xff]
    %s527 = scalar_lea.vmem %s2, 3585
    %v528 = vld [vmem:[%s527] ss:$4 sm:$0xff]
    %s529 = scalar_lea.vmem %s2, 3713
    %v530 = vld [vmem:[%s529] ss:$4 sm:$0xff]
    %s531 = scalar_lea.vmem %s2, 3841
    %v532 = vld [vmem:[%s531] ss:$4 sm:$0xff]
    %s533 = scalar_lea.vmem %s2, 3969
    %v534 = vld [vmem:[%s533] ss:$4 sm:$0xff]
    %v535 = vadd.f32 %v408, %v472
    %v536 = vadd.f32 %v410, %v474
    %v537 = vadd.f32 %v412, %v476
    %v538 = vadd.f32 %v414, %v478
    %v539 = vadd.f32 %v416, %v480
    %v540 = vadd.f32 %v418, %v482
    %v541 = vadd.f32 %v420, %v484
    %v542 = vadd.f32 %v422, %v486
    %v543 = vadd.f32 %v424, %v488
    %v544 = vadd.f32 %v426, %v490
    %v545 = vadd.f32 %v428, %v492
    %v546 = vadd.f32 %v430, %v494
    %v547 = vadd.f32 %v432, %v496
    %v548 = vadd.f32 %v434, %v498
    %v549 = vadd.f32 %v436, %v500
    %v550 = vadd.f32 %v438, %v502
    %v551 = vadd.f32 %v440, %v504
    %v552 = vadd.f32 %v442, %v506
    %v553 = vadd.f32 %v444, %v508
    %v554 = vadd.f32 %v446, %v510
    %v555 = vadd.f32 %v448, %v512
    %v556 = vadd.f32 %v450, %v514
    %v557 = vadd.f32 %v452, %v516
    %v558 = vadd.f32 %v454, %v518
    %v559 = vadd.f32 %v456, %v520
    %v560 = vadd.f32 %v458, %v522
    %v561 = vadd.f32 %v460, %v524
    %v562 = vadd.f32 %v462, %v526
    %v563 = vadd.f32 %v464, %v528
    %v564 = vadd.f32 %v466, %v530
    %v565 = vadd.f32 %v468, %v532
    %v566 = vadd.f32 %v470, %v534
    %s567 = scalar_lea.vmem %s2, 2
    %v568 = vld [vmem:[%s567] ss:$4 sm:$0xff]
    %s569 = scalar_lea.vmem %s2, 130
    %v570 = vld [vmem:[%s569] ss:$4 sm:$0xff]
    %s571 = scalar_lea.vmem %s2, 258
    %v572 = vld [vmem:[%s571] ss:$4 sm:$0xff]
    %s573 = scalar_lea.vmem %s2, 386
    %v574 = vld [vmem:[%s573] ss:$4 sm:$0xff]
    %s575 = scalar_lea.vmem %s2, 514
    %v576 = vld [vmem:[%s575] ss:$4 sm:$0xff]
    %s577 = scalar_lea.vmem %s2, 642
    %v578 = vld [vmem:[%s577] ss:$4 sm:$0xff]
    %s579 = scalar_lea.vmem %s2, 770
    %v580 = vld [vmem:[%s579] ss:$4 sm:$0xff]
    %s581 = scalar_lea.vmem %s2, 898
    %v582 = vld [vmem:[%s581] ss:$4 sm:$0xff]
    %s583 = scalar_lea.vmem %s2, 1026
    %v584 = vld [vmem:[%s583] ss:$4 sm:$0xff]
    %s585 = scalar_lea.vmem %s2, 1154
    %v586 = vld [vmem:[%s585] ss:$4 sm:$0xff]
    %s587 = scalar_lea.vmem %s2, 1282
    %v588 = vld [vmem:[%s587] ss:$4 sm:$0xff]
    %s589 = scalar_lea.vmem %s2, 1410
    %v590 = vld [vmem:[%s589] ss:$4 sm:$0xff]
    %s591 = scalar_lea.vmem %s2, 1538
    %v592 = vld [vmem:[%s591] ss:$4 sm:$0xff]
    %s593 = scalar_lea.vmem %s2, 1666
    %v594 = vld [vmem:[%s593] ss:$4 sm:$0xff]
    %s595 = scalar_lea.vmem %s2, 1794
    %v596 = vld [vmem:[%s595] ss:$4 sm:$0xff]
    %s597 = scalar_lea.vmem %s2, 1922
    %v598 = vld [vmem:[%s597] ss:$4 sm:$0xff]
    %s599 = scalar_lea.vmem %s2, 2050
    %v600 = vld [vmem:[%s599] ss:$4 sm:$0xff]
    %s601 = scalar_lea.vmem %s2, 2178
    %v602 = vld [vmem:[%s601] ss:$4 sm:$0xff]
    %s603 = scalar_lea.vmem %s2, 2306
    %v604 = vld [vmem:[%s603] ss:$4 sm:$0xff]
    %s605 = scalar_lea.vmem %s2, 2434
    %v606 = vld [vmem:[%s605] ss:$4 sm:$0xff]
    %s607 = scalar_lea.vmem %s2, 2562
    %v608 = vld [vmem:[%s607] ss:$4 sm:$0xff]
    %s609 = scalar_lea.vmem %s2, 2690
    %v610 = vld [vmem:[%s609] ss:$4 sm:$0xff]
    %s611 = scalar_lea.vmem %s2, 2818
    %v612 = vld [vmem:[%s611] ss:$4 sm:$0xff]
    %s613 = scalar_lea.vmem %s2, 2946
    %v614 = vld [vmem:[%s613] ss:$4 sm:$0xff]
    %s615 = scalar_lea.vmem %s2, 3074
    %v616 = vld [vmem:[%s615] ss:$4 sm:$0xff]
    %s617 = scalar_lea.vmem %s2, 3202
    %v618 = vld [vmem:[%s617] ss:$4 sm:$0xff]
    %s619 = scalar_lea.vmem %s2, 3330
    %v620 = vld [vmem:[%s619] ss:$4 sm:$0xff]
    %s621 = scalar_lea.vmem %s2, 3458
    %v622 = vld [vmem:[%s621] ss:$4 sm:$0xff]
    %s623 = scalar_lea.vmem %s2, 3586
    %v624 = vld [vmem:[%s623] ss:$4 sm:$0xff]
    %s625 = scalar_lea.vmem %s2, 3714
    %v626 = vld [vmem:[%s625] ss:$4 sm:$0xff]
    %s627 = scalar_lea.vmem %s2, 3842
    %v628 = vld [vmem:[%s627] ss:$4 sm:$0xff]
    %s629 = scalar_lea.vmem %s2, 3970
    %v630 = vld [vmem:[%s629] ss:$4 sm:$0xff]
    %v631 = vadd.f32 %v535, %v568
    %v632 = vadd.f32 %v536, %v570
    %v633 = vadd.f32 %v537, %v572
    %v634 = vadd.f32 %v538, %v574
    %v635 = vadd.f32 %v539, %v576
    %v636 = vadd.f32 %v540, %v578
    %v637 = vadd.f32 %v541, %v580
    %v638 = vadd.f32 %v542, %v582
    %v639 = vadd.f32 %v543, %v584
    %v640 = vadd.f32 %v544, %v586
    %v641 = vadd.f32 %v545, %v588
    %v642 = vadd.f32 %v546, %v590
    %v643 = vadd.f32 %v547, %v592
    %v644 = vadd.f32 %v548, %v594
    %v645 = vadd.f32 %v549, %v596
    %v646 = vadd.f32 %v550, %v598
    %v647 = vadd.f32 %v551, %v600
    %v648 = vadd.f32 %v552, %v602
    %v649 = vadd.f32 %v553, %v604
    %v650 = vadd.f32 %v554, %v606
    %v651 = vadd.f32 %v555, %v608
    %v652 = vadd.f32 %v556, %v610
    %v653 = vadd.f32 %v557, %v612
    %v654 = vadd.f32 %v558, %v614
    %v655 = vadd.f32 %v559, %v616
    %v656 = vadd.f32 %v560, %v618
    %v657 = vadd.f32 %v561, %v620
    %v658 = vadd.f32 %v562, %v622
    %v659 = vadd.f32 %v563, %v624
    %v660 = vadd.f32 %v564, %v626
    %v661 = vadd.f32 %v565, %v628
    %v662 = vadd.f32 %v566, %v630
    %s663 = scalar_lea.vmem %s2, 3
    %v664 = vld [vmem:[%s663] ss:$4 sm:$0xff]
    %s665 = scalar_lea.vmem %s2, 131
    %v666 = vld [vmem:[%s665] ss:$4 sm:$0xff]
    %s667 = scalar_lea.vmem %s2, 259
    %v668 = vld [vmem:[%s667] ss:$4 sm:$0xff]
    %s669 = scalar_lea.vmem %s2, 387
    %v670 = vld [vmem:[%s669] ss:$4 sm:$0xff]
    %s671 = scalar_lea.vmem %s2, 515
    %v672 = vld [vmem:[%s671] ss:$4 sm:$0xff]
    %s673 = scalar_lea.vmem %s2, 643
    %v674 = vld [vmem:[%s673] ss:$4 sm:$0xff]
    %s675 = scalar_lea.vmem %s2, 771
    %v676 = vld [vmem:[%s675] ss:$4 sm:$0xff]
    %s677 = scalar_lea.vmem %s2, 899
    %v678 = vld [vmem:[%s677] ss:$4 sm:$0xff]
    %s679 = scalar_lea.vmem %s2, 1027
    %v680 = vld [vmem:[%s679] ss:$4 sm:$0xff]
    %s681 = scalar_lea.vmem %s2, 1155
    %v682 = vld [vmem:[%s681] ss:$4 sm:$0xff]
    %s683 = scalar_lea.vmem %s2, 1283
    %v684 = vld [vmem:[%s683] ss:$4 sm:$0xff]
    %s685 = scalar_lea.vmem %s2, 1411
    %v686 = vld [vmem:[%s685] ss:$4 sm:$0xff]
    %s687 = scalar_lea.vmem %s2, 1539
    %v688 = vld [vmem:[%s687] ss:$4 sm:$0xff]
    %s689 = scalar_lea.vmem %s2, 1667
    %v690 = vld [vmem:[%s689] ss:$4 sm:$0xff]
    %s691 = scalar_lea.vmem %s2, 1795
    %v692 = vld [vmem:[%s691] ss:$4 sm:$0xff]
    %s693 = scalar_lea.vmem %s2, 1923
    %v694 = vld [vmem:[%s693] ss:$4 sm:$0xff]
    %s695 = scalar_lea.vmem %s2, 2051
    %v696 = vld [vmem:[%s695] ss:$4 sm:$0xff]
    %s697 = scalar_lea.vmem %s2, 2179
    %v698 = vld [vmem:[%s697] ss:$4 sm:$0xff]
    %s699 = scalar_lea.vmem %s2, 2307
    %v700 = vld [vmem:[%s699] ss:$4 sm:$0xff]
    %s701 = scalar_lea.vmem %s2, 2435
    %v702 = vld [vmem:[%s701] ss:$4 sm:$0xff]
    %s703 = scalar_lea.vmem %s2, 2563
    %v704 = vld [vmem:[%s703] ss:$4 sm:$0xff]
    %s705 = scalar_lea.vmem %s2, 2691
    %v706 = vld [vmem:[%s705] ss:$4 sm:$0xff]
    %s707 = scalar_lea.vmem %s2, 2819
    %v708 = vld [vmem:[%s707] ss:$4 sm:$0xff]
    %s709 = scalar_lea.vmem %s2, 2947
    %v710 = vld [vmem:[%s709] ss:$4 sm:$0xff]
    %s711 = scalar_lea.vmem %s2, 3075
    %v712 = vld [vmem:[%s711] ss:$4 sm:$0xff]
    %s713 = scalar_lea.vmem %s2, 3203
    %v714 = vld [vmem:[%s713] ss:$4 sm:$0xff]
    %s715 = scalar_lea.vmem %s2, 3331
    %v716 = vld [vmem:[%s715] ss:$4 sm:$0xff]
    %s717 = scalar_lea.vmem %s2, 3459
    %v718 = vld [vmem:[%s717] ss:$4 sm:$0xff]
    %s719 = scalar_lea.vmem %s2, 3587
    %v720 = vld [vmem:[%s719] ss:$4 sm:$0xff]
    %s721 = scalar_lea.vmem %s2, 3715
    %v722 = vld [vmem:[%s721] ss:$4 sm:$0xff]
    %s723 = scalar_lea.vmem %s2, 3843
    %v724 = vld [vmem:[%s723] ss:$4 sm:$0xff]
    %s725 = scalar_lea.vmem %s2, 3971
    %v726 = vld [vmem:[%s725] ss:$4 sm:$0xff]
    %v727 = vadd.f32 %v631, %v664
    %v728 = vadd.f32 %v632, %v666
    %v729 = vadd.f32 %v633, %v668
    %v730 = vadd.f32 %v634, %v670
    %v731 = vadd.f32 %v635, %v672
    %v732 = vadd.f32 %v636, %v674
    %v733 = vadd.f32 %v637, %v676
    %v734 = vadd.f32 %v638, %v678
    %v735 = vadd.f32 %v639, %v680
    %v736 = vadd.f32 %v640, %v682
    %v737 = vadd.f32 %v641, %v684
    %v738 = vadd.f32 %v642, %v686
    %v739 = vadd.f32 %v643, %v688
    %v740 = vadd.f32 %v644, %v690
    %v741 = vadd.f32 %v645, %v692
    %v742 = vadd.f32 %v646, %v694
    %v743 = vadd.f32 %v647, %v696
    %v744 = vadd.f32 %v648, %v698
    %v745 = vadd.f32 %v649, %v700
    %v746 = vadd.f32 %v650, %v702
    %v747 = vadd.f32 %v651, %v704
    %v748 = vadd.f32 %v652, %v706
    %v749 = vadd.f32 %v653, %v708
    %v750 = vadd.f32 %v654, %v710
    %v751 = vadd.f32 %v655, %v712
    %v752 = vadd.f32 %v656, %v714
    %v753 = vadd.f32 %v657, %v716
    %v754 = vadd.f32 %v658, %v718
    %v755 = vadd.f32 %v659, %v720
    %v756 = vadd.f32 %v660, %v722
    %v757 = vadd.f32 %v661, %v724
    %v758 = vadd.f32 %v662, %v726
    %s759 = scalar_lea.vmem %s2, 32
    %v760 = vld [vmem:[%s759] ss:$4 sm:$0xff]
    %s761 = scalar_lea.vmem %s759, 128
    %v762 = vld [vmem:[%s761] ss:$4 sm:$0xff]
    %s763 = scalar_lea.vmem %s759, 256
    %v764 = vld [vmem:[%s763] ss:$4 sm:$0xff]
    %s765 = scalar_lea.vmem %s759, 384
    %v766 = vld [vmem:[%s765] ss:$4 sm:$0xff]
    %s767 = scalar_lea.vmem %s759, 512
    %v768 = vld [vmem:[%s767] ss:$4 sm:$0xff]
    %s769 = scalar_lea.vmem %s759, 640
    %v770 = vld [vmem:[%s769] ss:$4 sm:$0xff]
    %s771 = scalar_lea.vmem %s759, 768
    %v772 = vld [vmem:[%s771] ss:$4 sm:$0xff]
    %s773 = scalar_lea.vmem %s759, 896
    %v774 = vld [vmem:[%s773] ss:$4 sm:$0xff]
    %s775 = scalar_lea.vmem %s759, 1024
    %v776 = vld [vmem:[%s775] ss:$4 sm:$0xff]
    %s777 = scalar_lea.vmem %s759, 1152
    %v778 = vld [vmem:[%s777] ss:$4 sm:$0xff]
    %s779 = scalar_lea.vmem %s759, 1280
    %v780 = vld [vmem:[%s779] ss:$4 sm:$0xff]
    %s781 = scalar_lea.vmem %s759, 1408
    %v782 = vld [vmem:[%s781] ss:$4 sm:$0xff]
    %s783 = scalar_lea.vmem %s759, 1536
    %v784 = vld [vmem:[%s783] ss:$4 sm:$0xff]
    %s785 = scalar_lea.vmem %s759, 1664
    %v786 = vld [vmem:[%s785] ss:$4 sm:$0xff]
    %s787 = scalar_lea.vmem %s759, 1792
    %v788 = vld [vmem:[%s787] ss:$4 sm:$0xff]
    %s789 = scalar_lea.vmem %s759, 1920
    %v790 = vld [vmem:[%s789] ss:$4 sm:$0xff]
    %s791 = scalar_lea.vmem %s759, 2048
    %v792 = vld [vmem:[%s791] ss:$4 sm:$0xff]
    %s793 = scalar_lea.vmem %s759, 2176
    %v794 = vld [vmem:[%s793] ss:$4 sm:$0xff]
    %s795 = scalar_lea.vmem %s759, 2304
    %v796 = vld [vmem:[%s795] ss:$4 sm:$0xff]
    %s797 = scalar_lea.vmem %s759, 2432
    %v798 = vld [vmem:[%s797] ss:$4 sm:$0xff]
    %s799 = scalar_lea.vmem %s759, 2560
    %v800 = vld [vmem:[%s799] ss:$4 sm:$0xff]
    %s801 = scalar_lea.vmem %s759, 2688
    %v802 = vld [vmem:[%s801] ss:$4 sm:$0xff]
    %s803 = scalar_lea.vmem %s759, 2816
    %v804 = vld [vmem:[%s803] ss:$4 sm:$0xff]
    %s805 = scalar_lea.vmem %s759, 2944
    %v806 = vld [vmem:[%s805] ss:$4 sm:$0xff]
    %s807 = scalar_lea.vmem %s759, 3072
    %v808 = vld [vmem:[%s807] ss:$4 sm:$0xff]
    %s809 = scalar_lea.vmem %s759, 3200
    %v810 = vld [vmem:[%s809] ss:$4 sm:$0xff]
    %s811 = scalar_lea.vmem %s759, 3328
    %v812 = vld [vmem:[%s811] ss:$4 sm:$0xff]
    %s813 = scalar_lea.vmem %s759, 3456
    %v814 = vld [vmem:[%s813] ss:$4 sm:$0xff]
    %s815 = scalar_lea.vmem %s759, 3584
    %v816 = vld [vmem:[%s815] ss:$4 sm:$0xff]
    %s817 = scalar_lea.vmem %s759, 3712
    %v818 = vld [vmem:[%s817] ss:$4 sm:$0xff]
    %s819 = scalar_lea.vmem %s759, 3840
    %v820 = vld [vmem:[%s819] ss:$4 sm:$0xff]
    %s821 = scalar_lea.vmem %s759, 3968
    %v822 = vld [vmem:[%s821] ss:$4 sm:$0xff]
    %v823 = vadd.f32 %v727, %v760
    %v824 = vadd.f32 %v728, %v762
    %v825 = vadd.f32 %v729, %v764
    %v826 = vadd.f32 %v730, %v766
    %v827 = vadd.f32 %v731, %v768
    %v828 = vadd.f32 %v732, %v770
    %v829 = vadd.f32 %v733, %v772
    %v830 = vadd.f32 %v734, %v774
    %v831 = vadd.f32 %v735, %v776
    %v832 = vadd.f32 %v736, %v778
    %v833 = vadd.f32 %v737, %v780
    %v834 = vadd.f32 %v738, %v782
    %v835 = vadd.f32 %v739, %v784
    %v836 = vadd.f32 %v740, %v786
    %v837 = vadd.f32 %v741, %v788
    %v838 = vadd.f32 %v742, %v790
    %v839 = vadd.f32 %v743, %v792
    %v840 = vadd.f32 %v744, %v794
    %v841 = vadd.f32 %v745, %v796
    %v842 = vadd.f32 %v746, %v798
    %v843 = vadd.f32 %v747, %v800
    %v844 = vadd.f32 %v748, %v802
    %v845 = vadd.f32 %v749, %v804
    %v846 = vadd.f32 %v750, %v806
    %v847 = vadd.f32 %v751, %v808
    %v848 = vadd.f32 %v752, %v810
    %v849 = vadd.f32 %v753, %v812
    %v850 = vadd.f32 %v754, %v814
    %v851 = vadd.f32 %v755, %v816
    %v852 = vadd.f32 %v756, %v818
    %v853 = vadd.f32 %v757, %v820
    %v854 = vadd.f32 %v758, %v822
    %s855 = scalar_lea.vmem %s759, 1
    %v856 = vld [vmem:[%s855] ss:$4 sm:$0xff]
    %s857 = scalar_lea.vmem %s759, 129
    %v858 = vld [vmem:[%s857] ss:$4 sm:$0xff]
    %s859 = scalar_lea.vmem %s759, 257
    %v860 = vld [vmem:[%s859] ss:$4 sm:$0xff]
    %s861 = scalar_lea.vmem %s759, 385
    %v862 = vld [vmem:[%s861] ss:$4 sm:$0xff]
    %s863 = scalar_lea.vmem %s759, 513
    %v864 = vld [vmem:[%s863] ss:$4 sm:$0xff]
    %s865 = scalar_lea.vmem %s759, 641
    %v866 = vld [vmem:[%s865] ss:$4 sm:$0xff]
    %s867 = scalar_lea.vmem %s759, 769
    %v868 = vld [vmem:[%s867] ss:$4 sm:$0xff]
    %s869 = scalar_lea.vmem %s759, 897
    %v870 = vld [vmem:[%s869] ss:$4 sm:$0xff]
    %s871 = scalar_lea.vmem %s759, 1025
    %v872 = vld [vmem:[%s871] ss:$4 sm:$0xff]
    %s873 = scalar_lea.vmem %s759, 1153
    %v874 = vld [vmem:[%s873] ss:$4 sm:$0xff]
    %s875 = scalar_lea.vmem %s759, 1281
    %v876 = vld [vmem:[%s875] ss:$4 sm:$0xff]
    %s877 = scalar_lea.vmem %s759, 1409
    %v878 = vld [vmem:[%s877] ss:$4 sm:$0xff]
    %s879 = scalar_lea.vmem %s759, 1537
    %v880 = vld [vmem:[%s879] ss:$4 sm:$0xff]
    %s881 = scalar_lea.vmem %s759, 1665
    %v882 = vld [vmem:[%s881] ss:$4 sm:$0xff]
    %s883 = scalar_lea.vmem %s759, 1793
    %v884 = vld [vmem:[%s883] ss:$4 sm:$0xff]
    %s885 = scalar_lea.vmem %s759, 1921
    %v886 = vld [vmem:[%s885] ss:$4 sm:$0xff]
    %s887 = scalar_lea.vmem %s759, 2049
    %v888 = vld [vmem:[%s887] ss:$4 sm:$0xff]
    %s889 = scalar_lea.vmem %s759, 2177
    %v890 = vld [vmem:[%s889] ss:$4 sm:$0xff]
    %s891 = scalar_lea.vmem %s759, 2305
    %v892 = vld [vmem:[%s891] ss:$4 sm:$0xff]
    %s893 = scalar_lea.vmem %s759, 2433
    %v894 = vld [vmem:[%s893] ss:$4 sm:$0xff]
    %s895 = scalar_lea.vmem %s759, 2561
    %v896 = vld [vmem:[%s895] ss:$4 sm:$0xff]
    %s897 = scalar_lea.vmem %s759, 2689
    %v898 = vld [vmem:[%s897] ss:$4 sm:$0xff]
    %s899 = scalar_lea.vmem %s759, 2817
    %v900 = vld [vmem:[%s899] ss:$4 sm:$0xff]
    %s901 = scalar_lea.vmem %s759, 2945
    %v902 = vld [vmem:[%s901] ss:$4 sm:$0xff]
    %s903 = scalar_lea.vmem %s759, 3073
    %v904 = vld [vmem:[%s903] ss:$4 sm:$0xff]
    %s905 = scalar_lea.vmem %s759, 3201
    %v906 = vld [vmem:[%s905] ss:$4 sm:$0xff]
    %s907 = scalar_lea.vmem %s759, 3329
    %v908 = vld [vmem:[%s907] ss:$4 sm:$0xff]
    %s909 = scalar_lea.vmem %s759, 3457
    %v910 = vld [vmem:[%s909] ss:$4 sm:$0xff]
    %s911 = scalar_lea.vmem %s759, 3585
    %v912 = vld [vmem:[%s911] ss:$4 sm:$0xff]
    %s913 = scalar_lea.vmem %s759, 3713
    %v914 = vld [vmem:[%s913] ss:$4 sm:$0xff]
    %s915 = scalar_lea.vmem %s759, 3841
    %v916 = vld [vmem:[%s915] ss:$4 sm:$0xff]
    %s917 = scalar_lea.vmem %s759, 3969
    %v918 = vld [vmem:[%s917] ss:$4 sm:$0xff]
    %v919 = vadd.f32 %v823, %v856
    %v920 = vadd.f32 %v824, %v858
    %v921 = vadd.f32 %v825, %v860
    %v922 = vadd.f32 %v826, %v862
    %v923 = vadd.f32 %v827, %v864
    %v924 = vadd.f32 %v828, %v866
    %v925 = vadd.f32 %v829, %v868
    %v926 = vadd.f32 %v830, %v870
    %v927 = vadd.f32 %v831, %v872
    %v928 = vadd.f32 %v832, %v874
    %v929 = vadd.f32 %v833, %v876
    %v930 = vadd.f32 %v834, %v878
    %v931 = vadd.f32 %v835, %v880
    %v932 = vadd.f32 %v836, %v882
    %v933 = vadd.f32 %v837, %v884
    %v934 = vadd.f32 %v838, %v886
    %v935 = vadd.f32 %v839, %v888
    %v936 = vadd.f32 %v840, %v890
    %v937 = vadd.f32 %v841, %v892
    %v938 = vadd.f32 %v842, %v894
    %v939 = vadd.f32 %v843, %v896
    %v940 = vadd.f32 %v844, %v898
    %v941 = vadd.f32 %v845, %v900
    %v942 = vadd.f32 %v846, %v902
    %v943 = vadd.f32 %v847, %v904
    %v944 = vadd.f32 %v848, %v906
    %v945 = vadd.f32 %v849, %v908
    %v946 = vadd.f32 %v850, %v910
    %v947 = vadd.f32 %v851, %v912
    %v948 = vadd.f32 %v852, %v914
    %v949 = vadd.f32 %v853, %v916
    %v950 = vadd.f32 %v854, %v918
    %s951 = scalar_lea.vmem %s759, 2
    %v952 = vld [vmem:[%s951] ss:$4 sm:$0xff]
    %s953 = scalar_lea.vmem %s759, 130
    %v954 = vld [vmem:[%s953] ss:$4 sm:$0xff]
    %s955 = scalar_lea.vmem %s759, 258
    %v956 = vld [vmem:[%s955] ss:$4 sm:$0xff]
    %s957 = scalar_lea.vmem %s759, 386
    %v958 = vld [vmem:[%s957] ss:$4 sm:$0xff]
    %s959 = scalar_lea.vmem %s759, 514
    %v960 = vld [vmem:[%s959] ss:$4 sm:$0xff]
    %s961 = scalar_lea.vmem %s759, 642
    %v962 = vld [vmem:[%s961] ss:$4 sm:$0xff]
    %s963 = scalar_lea.vmem %s759, 770
    %v964 = vld [vmem:[%s963] ss:$4 sm:$0xff]
    %s965 = scalar_lea.vmem %s759, 898
    %v966 = vld [vmem:[%s965] ss:$4 sm:$0xff]
    %s967 = scalar_lea.vmem %s759, 1026
    %v968 = vld [vmem:[%s967] ss:$4 sm:$0xff]
    %s969 = scalar_lea.vmem %s759, 1154
    %v970 = vld [vmem:[%s969] ss:$4 sm:$0xff]
    %s971 = scalar_lea.vmem %s759, 1282
    %v972 = vld [vmem:[%s971] ss:$4 sm:$0xff]
    %s973 = scalar_lea.vmem %s759, 1410
    %v974 = vld [vmem:[%s973] ss:$4 sm:$0xff]
    %s975 = scalar_lea.vmem %s759, 1538
    %v976 = vld [vmem:[%s975] ss:$4 sm:$0xff]
    %s977 = scalar_lea.vmem %s759, 1666
    %v978 = vld [vmem:[%s977] ss:$4 sm:$0xff]
    %s979 = scalar_lea.vmem %s759, 1794
    %v980 = vld [vmem:[%s979] ss:$4 sm:$0xff]
    %s981 = scalar_lea.vmem %s759, 1922
    %v982 = vld [vmem:[%s981] ss:$4 sm:$0xff]
    %s983 = scalar_lea.vmem %s759, 2050
    %v984 = vld [vmem:[%s983] ss:$4 sm:$0xff]
    %s985 = scalar_lea.vmem %s759, 2178
    %v986 = vld [vmem:[%s985] ss:$4 sm:$0xff]
    %s987 = scalar_lea.vmem %s759, 2306
    %v988 = vld [vmem:[%s987] ss:$4 sm:$0xff]
    %s989 = scalar_lea.vmem %s759, 2434
    %v990 = vld [vmem:[%s989] ss:$4 sm:$0xff]
    %s991 = scalar_lea.vmem %s759, 2562
    %v992 = vld [vmem:[%s991] ss:$4 sm:$0xff]
    %s993 = scalar_lea.vmem %s759, 2690
    %v994 = vld [vmem:[%s993] ss:$4 sm:$0xff]
    %s995 = scalar_lea.vmem %s759, 2818
    %v996 = vld [vmem:[%s995] ss:$4 sm:$0xff]
    %s997 = scalar_lea.vmem %s759, 2946
    %v998 = vld [vmem:[%s997] ss:$4 sm:$0xff]
    %s999 = scalar_lea.vmem %s759, 3074
    %v1000 = vld [vmem:[%s999] ss:$4 sm:$0xff]
    %s1001 = scalar_lea.vmem %s759, 3202
    %v1002 = vld [vmem:[%s1001] ss:$4 sm:$0xff]
    %s1003 = scalar_lea.vmem %s759, 3330
    %v1004 = vld [vmem:[%s1003] ss:$4 sm:$0xff]
    %s1005 = scalar_lea.vmem %s759, 3458
    %v1006 = vld [vmem:[%s1005] ss:$4 sm:$0xff]
    %s1007 = scalar_lea.vmem %s759, 3586
    %v1008 = vld [vmem:[%s1007] ss:$4 sm:$0xff]
    %s1009 = scalar_lea.vmem %s759, 3714
    %v1010 = vld [vmem:[%s1009] ss:$4 sm:$0xff]
    %s1011 = scalar_lea.vmem %s759, 3842
    %v1012 = vld [vmem:[%s1011] ss:$4 sm:$0xff]
    %s1013 = scalar_lea.vmem %s759, 3970
    %v1014 = vld [vmem:[%s1013] ss:$4 sm:$0xff]
    %v1015 = vadd.f32 %v919, %v952
    %v1016 = vadd.f32 %v920, %v954
    %v1017 = vadd.f32 %v921, %v956
    %v1018 = vadd.f32 %v922, %v958
    %v1019 = vadd.f32 %v923, %v960
    %v1020 = vadd.f32 %v924, %v962
    %v1021 = vadd.f32 %v925, %v964
    %v1022 = vadd.f32 %v926, %v966
    %v1023 = vadd.f32 %v927, %v968
    %v1024 = vadd.f32 %v928, %v970
    %v1025 = vadd.f32 %v929, %v972
    %v1026 = vadd.f32 %v930, %v974
    %v1027 = vadd.f32 %v931, %v976
    %v1028 = vadd.f32 %v932, %v978
    %v1029 = vadd.f32 %v933, %v980
    %v1030 = vadd.f32 %v934, %v982
    %v1031 = vadd.f32 %v935, %v984
    %v1032 = vadd.f32 %v936, %v986
    %v1033 = vadd.f32 %v937, %v988
    %v1034 = vadd.f32 %v938, %v990
    %v1035 = vadd.f32 %v939, %v992
    %v1036 = vadd.f32 %v940, %v994
    %v1037 = vadd.f32 %v941, %v996
    %v1038 = vadd.f32 %v942, %v998
    %v1039 = vadd.f32 %v943, %v1000
    %v1040 = vadd.f32 %v944, %v1002
    %v1041 = vadd.f32 %v945, %v1004
    %v1042 = vadd.f32 %v946, %v1006
    %v1043 = vadd.f32 %v947, %v1008
    %v1044 = vadd.f32 %v948, %v1010
    %v1045 = vadd.f32 %v949, %v1012
    %v1046 = vadd.f32 %v950, %v1014
    %s1047 = scalar_lea.vmem %s759, 3
    %v1048 = vld [vmem:[%s1047] ss:$4 sm:$0xff]
    %s1049 = scalar_lea.vmem %s759, 131
    %v1050 = vld [vmem:[%s1049] ss:$4 sm:$0xff]
    %s1051 = scalar_lea.vmem %s759, 259
    %v1052 = vld [vmem:[%s1051] ss:$4 sm:$0xff]
    %s1053 = scalar_lea.vmem %s759, 387
    %v1054 = vld [vmem:[%s1053] ss:$4 sm:$0xff]
    %s1055 = scalar_lea.vmem %s759, 515
    %v1056 = vld [vmem:[%s1055] ss:$4 sm:$0xff]
    %s1057 = scalar_lea.vmem %s759, 643
    %v1058 = vld [vmem:[%s1057] ss:$4 sm:$0xff]
    %s1059 = scalar_lea.vmem %s759, 771
    %v1060 = vld [vmem:[%s1059] ss:$4 sm:$0xff]
    %s1061 = scalar_lea.vmem %s759, 899
    %v1062 = vld [vmem:[%s1061] ss:$4 sm:$0xff]
    %s1063 = scalar_lea.vmem %s759, 1027
    %v1064 = vld [vmem:[%s1063] ss:$4 sm:$0xff]
    %s1065 = scalar_lea.vmem %s759, 1155
    %v1066 = vld [vmem:[%s1065] ss:$4 sm:$0xff]
    %s1067 = scalar_lea.vmem %s759, 1283
    %v1068 = vld [vmem:[%s1067] ss:$4 sm:$0xff]
    %s1069 = scalar_lea.vmem %s759, 1411
    %v1070 = vld [vmem:[%s1069] ss:$4 sm:$0xff]
    %s1071 = scalar_lea.vmem %s759, 1539
    %v1072 = vld [vmem:[%s1071] ss:$4 sm:$0xff]
    %s1073 = scalar_lea.vmem %s759, 1667
    %v1074 = vld [vmem:[%s1073] ss:$4 sm:$0xff]
    %s1075 = scalar_lea.vmem %s759, 1795
    %v1076 = vld [vmem:[%s1075] ss:$4 sm:$0xff]
    %s1077 = scalar_lea.vmem %s759, 1923
    %v1078 = vld [vmem:[%s1077] ss:$4 sm:$0xff]
    %s1079 = scalar_lea.vmem %s759, 2051
    %v1080 = vld [vmem:[%s1079] ss:$4 sm:$0xff]
    %s1081 = scalar_lea.vmem %s759, 2179
    %v1082 = vld [vmem:[%s1081] ss:$4 sm:$0xff]
    %s1083 = scalar_lea.vmem %s759, 2307
    %v1084 = vld [vmem:[%s1083] ss:$4 sm:$0xff]
    %s1085 = scalar_lea.vmem %s759, 2435
    %v1086 = vld [vmem:[%s1085] ss:$4 sm:$0xff]
    %s1087 = scalar_lea.vmem %s759, 2563
    %v1088 = vld [vmem:[%s1087] ss:$4 sm:$0xff]
    %s1089 = scalar_lea.vmem %s759, 2691
    %v1090 = vld [vmem:[%s1089] ss:$4 sm:$0xff]
    %s1091 = scalar_lea.vmem %s759, 2819
    %v1092 = vld [vmem:[%s1091] ss:$4 sm:$0xff]
    %s1093 = scalar_lea.vmem %s759, 2947
    %v1094 = vld [vmem:[%s1093] ss:$4 sm:$0xff]
    %s1095 = scalar_lea.vmem %s759, 3075
    %v1096 = vld [vmem:[%s1095] ss:$4 sm:$0xff]
    %s1097 = scalar_lea.vmem %s759, 3203
    %v1098 = vld [vmem:[%s1097] ss:$4 sm:$0xff]
    %s1099 = scalar_lea.vmem %s759, 3331
    %v1100 = vld [vmem:[%s1099] ss:$4 sm:$0xff]
    %s1101 = scalar_lea.vmem %s759, 3459
    %v1102 = vld [vmem:[%s1101] ss:$4 sm:$0xff]
    %s1103 = scalar_lea.vmem %s759, 3587
    %v1104 = vld [vmem:[%s1103] ss:$4 sm:$0xff]
    %s1105 = scalar_lea.vmem %s759, 3715
    %v1106 = vld [vmem:[%s1105] ss:$4 sm:$0xff]
    %s1107 = scalar_lea.vmem %s759, 3843
    %v1108 = vld [vmem:[%s1107] ss:$4 sm:$0xff]
    %s1109 = scalar_lea.vmem %s759, 3971
    %v1110 = vld [vmem:[%s1109] ss:$4 sm:$0xff]
    %v1111 = vadd.f32 %v1015, %v1048
    %v1112 = vadd.f32 %v1016, %v1050
    %v1113 = vadd.f32 %v1017, %v1052
    %v1114 = vadd.f32 %v1018, %v1054
    %v1115 = vadd.f32 %v1019, %v1056
    %v1116 = vadd.f32 %v1020, %v1058
    %v1117 = vadd.f32 %v1021, %v1060
    %v1118 = vadd.f32 %v1022, %v1062
    %v1119 = vadd.f32 %v1023, %v1064
    %v1120 = vadd.f32 %v1024, %v1066
    %v1121 = vadd.f32 %v1025, %v1068
    %v1122 = vadd.f32 %v1026, %v1070
    %v1123 = vadd.f32 %v1027, %v1072
    %v1124 = vadd.f32 %v1028, %v1074
    %v1125 = vadd.f32 %v1029, %v1076
    %v1126 = vadd.f32 %v1030, %v1078
    %v1127 = vadd.f32 %v1031, %v1080
    %v1128 = vadd.f32 %v1032, %v1082
    %v1129 = vadd.f32 %v1033, %v1084
    %v1130 = vadd.f32 %v1034, %v1086
    %v1131 = vadd.f32 %v1035, %v1088
    %v1132 = vadd.f32 %v1036, %v1090
    %v1133 = vadd.f32 %v1037, %v1092
    %v1134 = vadd.f32 %v1038, %v1094
    %v1135 = vadd.f32 %v1039, %v1096
    %v1136 = vadd.f32 %v1040, %v1098
    %v1137 = vadd.f32 %v1041, %v1100
    %v1138 = vadd.f32 %v1042, %v1102
    %v1139 = vadd.f32 %v1043, %v1104
    %v1140 = vadd.f32 %v1044, %v1106
    %v1141 = vadd.f32 %v1045, %v1108
    %v1142 = vadd.f32 %v1046, %v1110
    %s1143 = scalar_lea.vmem %s2, 64
    %v1144 = vld [vmem:[%s1143] ss:$4 sm:$0xff]
    %s1145 = scalar_lea.vmem %s1143, 128
    %v1146 = vld [vmem:[%s1145] ss:$4 sm:$0xff]
    %s1147 = scalar_lea.vmem %s1143, 256
    %v1148 = vld [vmem:[%s1147] ss:$4 sm:$0xff]
    %s1149 = scalar_lea.vmem %s1143, 384
    %v1150 = vld [vmem:[%s1149] ss:$4 sm:$0xff]
    %s1151 = scalar_lea.vmem %s1143, 512
    %v1152 = vld [vmem:[%s1151] ss:$4 sm:$0xff]
    %s1153 = scalar_lea.vmem %s1143, 640
    %v1154 = vld [vmem:[%s1153] ss:$4 sm:$0xff]
    %s1155 = scalar_lea.vmem %s1143, 768
    %v1156 = vld [vmem:[%s1155] ss:$4 sm:$0xff]
    %s1157 = scalar_lea.vmem %s1143, 896
    %v1158 = vld [vmem:[%s1157] ss:$4 sm:$0xff]
    %s1159 = scalar_lea.vmem %s1143, 1024
    %v1160 = vld [vmem:[%s1159] ss:$4 sm:$0xff]
    %s1161 = scalar_lea.vmem %s1143, 1152
    %v1162 = vld [vmem:[%s1161] ss:$4 sm:$0xff]
    %s1163 = scalar_lea.vmem %s1143, 1280
    %v1164 = vld [vmem:[%s1163] ss:$4 sm:$0xff]
    %s1165 = scalar_lea.vmem %s1143, 1408
    %v1166 = vld [vmem:[%s1165] ss:$4 sm:$0xff]
    %s1167 = scalar_lea.vmem %s1143, 1536
    %v1168 = vld [vmem:[%s1167] ss:$4 sm:$0xff]
    %s1169 = scalar_lea.vmem %s1143, 1664
    %v1170 = vld [vmem:[%s1169] ss:$4 sm:$0xff]
    %s1171 = scalar_lea.vmem %s1143, 1792
    %v1172 = vld [vmem:[%s1171] ss:$4 sm:$0xff]
    %s1173 = scalar_lea.vmem %s1143, 1920
    %v1174 = vld [vmem:[%s1173] ss:$4 sm:$0xff]
    %s1175 = scalar_lea.vmem %s1143, 2048
    %v1176 = vld [vmem:[%s1175] ss:$4 sm:$0xff]
    %s1177 = scalar_lea.vmem %s1143, 2176
    %v1178 = vld [vmem:[%s1177] ss:$4 sm:$0xff]
    %s1179 = scalar_lea.vmem %s1143, 2304
    %v1180 = vld [vmem:[%s1179] ss:$4 sm:$0xff]
    %s1181 = scalar_lea.vmem %s1143, 2432
    %v1182 = vld [vmem:[%s1181] ss:$4 sm:$0xff]
    %s1183 = scalar_lea.vmem %s1143, 2560
    %v1184 = vld [vmem:[%s1183] ss:$4 sm:$0xff]
    %s1185 = scalar_lea.vmem %s1143, 2688
    %v1186 = vld [vmem:[%s1185] ss:$4 sm:$0xff]
    %s1187 = scalar_lea.vmem %s1143, 2816
    %v1188 = vld [vmem:[%s1187] ss:$4 sm:$0xff]
    %s1189 = scalar_lea.vmem %s1143, 2944
    %v1190 = vld [vmem:[%s1189] ss:$4 sm:$0xff]
    %s1191 = scalar_lea.vmem %s1143, 3072
    %v1192 = vld [vmem:[%s1191] ss:$4 sm:$0xff]
    %s1193 = scalar_lea.vmem %s1143, 3200
    %v1194 = vld [vmem:[%s1193] ss:$4 sm:$0xff]
    %s1195 = scalar_lea.vmem %s1143, 3328
    %v1196 = vld [vmem:[%s1195] ss:$4 sm:$0xff]
    %s1197 = scalar_lea.vmem %s1143, 3456
    %v1198 = vld [vmem:[%s1197] ss:$4 sm:$0xff]
    %s1199 = scalar_lea.vmem %s1143, 3584
    %v1200 = vld [vmem:[%s1199] ss:$4 sm:$0xff]
    %s1201 = scalar_lea.vmem %s1143, 3712
    %v1202 = vld [vmem:[%s1201] ss:$4 sm:$0xff]
    %s1203 = scalar_lea.vmem %s1143, 3840
    %v1204 = vld [vmem:[%s1203] ss:$4 sm:$0xff]
    %s1205 = scalar_lea.vmem %s1143, 3968
    %v1206 = vld [vmem:[%s1205] ss:$4 sm:$0xff]
    %v1207 = vadd.f32 %v1111, %v1144
    %v1208 = vadd.f32 %v1112, %v1146
    %v1209 = vadd.f32 %v1113, %v1148
    %v1210 = vadd.f32 %v1114, %v1150
    %v1211 = vadd.f32 %v1115, %v1152
    %v1212 = vadd.f32 %v1116, %v1154
    %v1213 = vadd.f32 %v1117, %v1156
    %v1214 = vadd.f32 %v1118, %v1158
    %v1215 = vadd.f32 %v1119, %v1160
    %v1216 = vadd.f32 %v1120, %v1162
    %v1217 = vadd.f32 %v1121, %v1164
    %v1218 = vadd.f32 %v1122, %v1166
    %v1219 = vadd.f32 %v1123, %v1168
    %v1220 = vadd.f32 %v1124, %v1170
    %v1221 = vadd.f32 %v1125, %v1172
    %v1222 = vadd.f32 %v1126, %v1174
    %v1223 = vadd.f32 %v1127, %v1176
    %v1224 = vadd.f32 %v1128, %v1178
    %v1225 = vadd.f32 %v1129, %v1180
    %v1226 = vadd.f32 %v1130, %v1182
    %v1227 = vadd.f32 %v1131, %v1184
    %v1228 = vadd.f32 %v1132, %v1186
    %v1229 = vadd.f32 %v1133, %v1188
    %v1230 = vadd.f32 %v1134, %v1190
    %v1231 = vadd.f32 %v1135, %v1192
    %v1232 = vadd.f32 %v1136, %v1194
    %v1233 = vadd.f32 %v1137, %v1196
    %v1234 = vadd.f32 %v1138, %v1198
    %v1235 = vadd.f32 %v1139, %v1200
    %v1236 = vadd.f32 %v1140, %v1202
    %v1237 = vadd.f32 %v1141, %v1204
    %v1238 = vadd.f32 %v1142, %v1206
    %s1239 = scalar_lea.vmem %s1143, 1
    %v1240 = vld [vmem:[%s1239] ss:$4 sm:$0xff]
    %s1241 = scalar_lea.vmem %s1143, 129
    %v1242 = vld [vmem:[%s1241] ss:$4 sm:$0xff]
    %s1243 = scalar_lea.vmem %s1143, 257
    %v1244 = vld [vmem:[%s1243] ss:$4 sm:$0xff]
    %s1245 = scalar_lea.vmem %s1143, 385
    %v1246 = vld [vmem:[%s1245] ss:$4 sm:$0xff]
    %s1247 = scalar_lea.vmem %s1143, 513
    %v1248 = vld [vmem:[%s1247] ss:$4 sm:$0xff]
    %s1249 = scalar_lea.vmem %s1143, 641
    %v1250 = vld [vmem:[%s1249] ss:$4 sm:$0xff]
    %s1251 = scalar_lea.vmem %s1143, 769
    %v1252 = vld [vmem:[%s1251] ss:$4 sm:$0xff]
    %s1253 = scalar_lea.vmem %s1143, 897
    %v1254 = vld [vmem:[%s1253] ss:$4 sm:$0xff]
    %s1255 = scalar_lea.vmem %s1143, 1025
    %v1256 = vld [vmem:[%s1255] ss:$4 sm:$0xff]
    %s1257 = scalar_lea.vmem %s1143, 1153
    %v1258 = vld [vmem:[%s1257] ss:$4 sm:$0xff]
    %s1259 = scalar_lea.vmem %s1143, 1281
    %v1260 = vld [vmem:[%s1259] ss:$4 sm:$0xff]
    %s1261 = scalar_lea.vmem %s1143, 1409
    %v1262 = vld [vmem:[%s1261] ss:$4 sm:$0xff]
    %s1263 = scalar_lea.vmem %s1143, 1537
    %v1264 = vld [vmem:[%s1263] ss:$4 sm:$0xff]
    %s1265 = scalar_lea.vmem %s1143, 1665
    %v1266 = vld [vmem:[%s1265] ss:$4 sm:$0xff]
    %s1267 = scalar_lea.vmem %s1143, 1793
    %v1268 = vld [vmem:[%s1267] ss:$4 sm:$0xff]
    %s1269 = scalar_lea.vmem %s1143, 1921
    %v1270 = vld [vmem:[%s1269] ss:$4 sm:$0xff]
    %s1271 = scalar_lea.vmem %s1143, 2049
    %v1272 = vld [vmem:[%s1271] ss:$4 sm:$0xff]
    %s1273 = scalar_lea.vmem %s1143, 2177
    %v1274 = vld [vmem:[%s1273] ss:$4 sm:$0xff]
    %s1275 = scalar_lea.vmem %s1143, 2305
    %v1276 = vld [vmem:[%s1275] ss:$4 sm:$0xff]
    %s1277 = scalar_lea.vmem %s1143, 2433
    %v1278 = vld [vmem:[%s1277] ss:$4 sm:$0xff]
    %s1279 = scalar_lea.vmem %s1143, 2561
    %v1280 = vld [vmem:[%s1279] ss:$4 sm:$0xff]
    %s1281 = scalar_lea.vmem %s1143, 2689
    %v1282 = vld [vmem:[%s1281] ss:$4 sm:$0xff]
    %s1283 = scalar_lea.vmem %s1143, 2817
    %v1284 = vld [vmem:[%s1283] ss:$4 sm:$0xff]
    %s1285 = scalar_lea.vmem %s1143, 2945
    %v1286 = vld [vmem:[%s1285] ss:$4 sm:$0xff]
    %s1287 = scalar_lea.vmem %s1143, 3073
    %v1288 = vld [vmem:[%s1287] ss:$4 sm:$0xff]
    %s1289 = scalar_lea.vmem %s1143, 3201
    %v1290 = vld [vmem:[%s1289] ss:$4 sm:$0xff]
    %s1291 = scalar_lea.vmem %s1143, 3329
    %v1292 = vld [vmem:[%s1291] ss:$4 sm:$0xff]
    %s1293 = scalar_lea.vmem %s1143, 3457
    %v1294 = vld [vmem:[%s1293] ss:$4 sm:$0xff]
    %s1295 = scalar_lea.vmem %s1143, 3585
    %v1296 = vld [vmem:[%s1295] ss:$4 sm:$0xff]
    %s1297 = scalar_lea.vmem %s1143, 3713
    %v1298 = vld [vmem:[%s1297] ss:$4 sm:$0xff]
    %s1299 = scalar_lea.vmem %s1143, 3841
    %v1300 = vld [vmem:[%s1299] ss:$4 sm:$0xff]
    %s1301 = scalar_lea.vmem %s1143, 3969
    %v1302 = vld [vmem:[%s1301] ss:$4 sm:$0xff]
    %v1303 = vadd.f32 %v1207, %v1240
    %v1304 = vadd.f32 %v1208, %v1242
    %v1305 = vadd.f32 %v1209, %v1244
    %v1306 = vadd.f32 %v1210, %v1246
    %v1307 = vadd.f32 %v1211, %v1248
    %v1308 = vadd.f32 %v1212, %v1250
    %v1309 = vadd.f32 %v1213, %v1252
    %v1310 = vadd.f32 %v1214, %v1254
    %v1311 = vadd.f32 %v1215, %v1256
    %v1312 = vadd.f32 %v1216, %v1258
    %v1313 = vadd.f32 %v1217, %v1260
    %v1314 = vadd.f32 %v1218, %v1262
    %v1315 = vadd.f32 %v1219, %v1264
    %v1316 = vadd.f32 %v1220, %v1266
    %v1317 = vadd.f32 %v1221, %v1268
    %v1318 = vadd.f32 %v1222, %v1270
    %v1319 = vadd.f32 %v1223, %v1272
    %v1320 = vadd.f32 %v1224, %v1274
    %v1321 = vadd.f32 %v1225, %v1276
    %v1322 = vadd.f32 %v1226, %v1278
    %v1323 = vadd.f32 %v1227, %v1280
    %v1324 = vadd.f32 %v1228, %v1282
    %v1325 = vadd.f32 %v1229, %v1284
    %v1326 = vadd.f32 %v1230, %v1286
    %v1327 = vadd.f32 %v1231, %v1288
    %v1328 = vadd.f32 %v1232, %v1290
    %v1329 = vadd.f32 %v1233, %v1292
    %v1330 = vadd.f32 %v1234, %v1294
    %v1331 = vadd.f32 %v1235, %v1296
    %v1332 = vadd.f32 %v1236, %v1298
    %v1333 = vadd.f32 %v1237, %v1300
    %v1334 = vadd.f32 %v1238, %v1302
    %s1335 = scalar_lea.vmem %s1143, 2
    %v1336 = vld [vmem:[%s1335] ss:$4 sm:$0xff]
    %s1337 = scalar_lea.vmem %s1143, 130
    %v1338 = vld [vmem:[%s1337] ss:$4 sm:$0xff]
    %s1339 = scalar_lea.vmem %s1143, 258
    %v1340 = vld [vmem:[%s1339] ss:$4 sm:$0xff]
    %s1341 = scalar_lea.vmem %s1143, 386
    %v1342 = vld [vmem:[%s1341] ss:$4 sm:$0xff]
    %s1343 = scalar_lea.vmem %s1143, 514
    %v1344 = vld [vmem:[%s1343] ss:$4 sm:$0xff]
    %s1345 = scalar_lea.vmem %s1143, 642
    %v1346 = vld [vmem:[%s1345] ss:$4 sm:$0xff]
    %s1347 = scalar_lea.vmem %s1143, 770
    %v1348 = vld [vmem:[%s1347] ss:$4 sm:$0xff]
    %s1349 = scalar_lea.vmem %s1143, 898
    %v1350 = vld [vmem:[%s1349] ss:$4 sm:$0xff]
    %s1351 = scalar_lea.vmem %s1143, 1026
    %v1352 = vld [vmem:[%s1351] ss:$4 sm:$0xff]
    %s1353 = scalar_lea.vmem %s1143, 1154
    %v1354 = vld [vmem:[%s1353] ss:$4 sm:$0xff]
    %s1355 = scalar_lea.vmem %s1143, 1282
    %v1356 = vld [vmem:[%s1355] ss:$4 sm:$0xff]
    %s1357 = scalar_lea.vmem %s1143, 1410
    %v1358 = vld [vmem:[%s1357] ss:$4 sm:$0xff]
    %s1359 = scalar_lea.vmem %s1143, 1538
    %v1360 = vld [vmem:[%s1359] ss:$4 sm:$0xff]
    %s1361 = scalar_lea.vmem %s1143, 1666
    %v1362 = vld [vmem:[%s1361] ss:$4 sm:$0xff]
    %s1363 = scalar_lea.vmem %s1143, 1794
    %v1364 = vld [vmem:[%s1363] ss:$4 sm:$0xff]
    %s1365 = scalar_lea.vmem %s1143, 1922
    %v1366 = vld [vmem:[%s1365] ss:$4 sm:$0xff]
    %s1367 = scalar_lea.vmem %s1143, 2050
    %v1368 = vld [vmem:[%s1367] ss:$4 sm:$0xff]
    %s1369 = scalar_lea.vmem %s1143, 2178
    %v1370 = vld [vmem:[%s1369] ss:$4 sm:$0xff]
    %s1371 = scalar_lea.vmem %s1143, 2306
    %v1372 = vld [vmem:[%s1371] ss:$4 sm:$0xff]
    %s1373 = scalar_lea.vmem %s1143, 2434
    %v1374 = vld [vmem:[%s1373] ss:$4 sm:$0xff]
    %s1375 = scalar_lea.vmem %s1143, 2562
    %v1376 = vld [vmem:[%s1375] ss:$4 sm:$0xff]
    %s1377 = scalar_lea.vmem %s1143, 2690
    %v1378 = vld [vmem:[%s1377] ss:$4 sm:$0xff]
    %s1379 = scalar_lea.vmem %s1143, 2818
    %v1380 = vld [vmem:[%s1379] ss:$4 sm:$0xff]
    %s1381 = scalar_lea.vmem %s1143, 2946
    %v1382 = vld [vmem:[%s1381] ss:$4 sm:$0xff]
    %s1383 = scalar_lea.vmem %s1143, 3074
    %v1384 = vld [vmem:[%s1383] ss:$4 sm:$0xff]
    %s1385 = scalar_lea.vmem %s1143, 3202
    %v1386 = vld [vmem:[%s1385] ss:$4 sm:$0xff]
    %s1387 = scalar_lea.vmem %s1143, 3330
    %v1388 = vld [vmem:[%s1387] ss:$4 sm:$0xff]
    %s1389 = scalar_lea.vmem %s1143, 3458
    %v1390 = vld [vmem:[%s1389] ss:$4 sm:$0xff]
    %s1391 = scalar_lea.vmem %s1143, 3586
    %v1392 = vld [vmem:[%s1391] ss:$4 sm:$0xff]
    %s1393 = scalar_lea.vmem %s1143, 3714
    %v1394 = vld [vmem:[%s1393] ss:$4 sm:$0xff]
    %s1395 = scalar_lea.vmem %s1143, 3842
    %v1396 = vld [vmem:[%s1395] ss:$4 sm:$0xff]
    %s1397 = scalar_lea.vmem %s1143, 3970
    %v1398 = vld [vmem:[%s1397] ss:$4 sm:$0xff]
    %v1399 = vadd.f32 %v1303, %v1336
    %v1400 = vadd.f32 %v1304, %v1338
    %v1401 = vadd.f32 %v1305, %v1340
    %v1402 = vadd.f32 %v1306, %v1342
    %v1403 = vadd.f32 %v1307, %v1344
    %v1404 = vadd.f32 %v1308, %v1346
    %v1405 = vadd.f32 %v1309, %v1348
    %v1406 = vadd.f32 %v1310, %v1350
    %v1407 = vadd.f32 %v1311, %v1352
    %v1408 = vadd.f32 %v1312, %v1354
    %v1409 = vadd.f32 %v1313, %v1356
    %v1410 = vadd.f32 %v1314, %v1358
    %v1411 = vadd.f32 %v1315, %v1360
    %v1412 = vadd.f32 %v1316, %v1362
    %v1413 = vadd.f32 %v1317, %v1364
    %v1414 = vadd.f32 %v1318, %v1366
    %v1415 = vadd.f32 %v1319, %v1368
    %v1416 = vadd.f32 %v1320, %v1370
    %v1417 = vadd.f32 %v1321, %v1372
    %v1418 = vadd.f32 %v1322, %v1374
    %v1419 = vadd.f32 %v1323, %v1376
    %v1420 = vadd.f32 %v1324, %v1378
    %v1421 = vadd.f32 %v1325, %v1380
    %v1422 = vadd.f32 %v1326, %v1382
    %v1423 = vadd.f32 %v1327, %v1384
    %v1424 = vadd.f32 %v1328, %v1386
    %v1425 = vadd.f32 %v1329, %v1388
    %v1426 = vadd.f32 %v1330, %v1390
    %v1427 = vadd.f32 %v1331, %v1392
    %v1428 = vadd.f32 %v1332, %v1394
    %v1429 = vadd.f32 %v1333, %v1396
    %v1430 = vadd.f32 %v1334, %v1398
    %s1431 = scalar_lea.vmem %s1143, 3
    %v1432 = vld [vmem:[%s1431] ss:$4 sm:$0xff]
    %s1433 = scalar_lea.vmem %s1143, 131
    %v1434 = vld [vmem:[%s1433] ss:$4 sm:$0xff]
    %s1435 = scalar_lea.vmem %s1143, 259
    %v1436 = vld [vmem:[%s1435] ss:$4 sm:$0xff]
    %s1437 = scalar_lea.vmem %s1143, 387
    %v1438 = vld [vmem:[%s1437] ss:$4 sm:$0xff]
    %s1439 = scalar_lea.vmem %s1143, 515
    %v1440 = vld [vmem:[%s1439] ss:$4 sm:$0xff]
    %s1441 = scalar_lea.vmem %s1143, 643
    %v1442 = vld [vmem:[%s1441] ss:$4 sm:$0xff]
    %s1443 = scalar_lea.vmem %s1143, 771
    %v1444 = vld [vmem:[%s1443] ss:$4 sm:$0xff]
    %s1445 = scalar_lea.vmem %s1143, 899
    %v1446 = vld [vmem:[%s1445] ss:$4 sm:$0xff]
    %s1447 = scalar_lea.vmem %s1143, 1027
    %v1448 = vld [vmem:[%s1447] ss:$4 sm:$0xff]
    %s1449 = scalar_lea.vmem %s1143, 1155
    %v1450 = vld [vmem:[%s1449] ss:$4 sm:$0xff]
    %s1451 = scalar_lea.vmem %s1143, 1283
    %v1452 = vld [vmem:[%s1451] ss:$4 sm:$0xff]
    %s1453 = scalar_lea.vmem %s1143, 1411
    %v1454 = vld [vmem:[%s1453] ss:$4 sm:$0xff]
    %s1455 = scalar_lea.vmem %s1143, 1539
    %v1456 = vld [vmem:[%s1455] ss:$4 sm:$0xff]
    %s1457 = scalar_lea.vmem %s1143, 1667
    %v1458 = vld [vmem:[%s1457] ss:$4 sm:$0xff]
    %s1459 = scalar_lea.vmem %s1143, 1795
    %v1460 = vld [vmem:[%s1459] ss:$4 sm:$0xff]
    %s1461 = scalar_lea.vmem %s1143, 1923
    %v1462 = vld [vmem:[%s1461] ss:$4 sm:$0xff]
    %s1463 = scalar_lea.vmem %s1143, 2051
    %v1464 = vld [vmem:[%s1463] ss:$4 sm:$0xff]
    %s1465 = scalar_lea.vmem %s1143, 2179
    %v1466 = vld [vmem:[%s1465] ss:$4 sm:$0xff]
    %s1467 = scalar_lea.vmem %s1143, 2307
    %v1468 = vld [vmem:[%s1467] ss:$4 sm:$0xff]
    %s1469 = scalar_lea.vmem %s1143, 2435
    %v1470 = vld [vmem:[%s1469] ss:$4 sm:$0xff]
    %s1471 = scalar_lea.vmem %s1143, 2563
    %v1472 = vld [vmem:[%s1471] ss:$4 sm:$0xff]
    %s1473 = scalar_lea.vmem %s1143, 2691
    %v1474 = vld [vmem:[%s1473] ss:$4 sm:$0xff]
    %s1475 = scalar_lea.vmem %s1143, 2819
    %v1476 = vld [vmem:[%s1475] ss:$4 sm:$0xff]
    %s1477 = scalar_lea.vmem %s1143, 2947
    %v1478 = vld [vmem:[%s1477] ss:$4 sm:$0xff]
    %s1479 = scalar_lea.vmem %s1143, 3075
    %v1480 = vld [vmem:[%s1479] ss:$4 sm:$0xff]
    %s1481 = scalar_lea.vmem %s1143, 3203
    %v1482 = vld [vmem:[%s1481] ss:$4 sm:$0xff]
    %s1483 = scalar_lea.vmem %s1143, 3331
    %v1484 = vld [vmem:[%s1483] ss:$4 sm:$0xff]
    %s1485 = scalar_lea.vmem %s1143, 3459
    %v1486 = vld [vmem:[%s1485] ss:$4 sm:$0xff]
    %s1487 = scalar_lea.vmem %s1143, 3587
    %v1488 = vld [vmem:[%s1487] ss:$4 sm:$0xff]
    %s1489 = scalar_lea.vmem %s1143, 3715
    %v1490 = vld [vmem:[%s1489] ss:$4 sm:$0xff]
    %s1491 = scalar_lea.vmem %s1143, 3843
    %v1492 = vld [vmem:[%s1491] ss:$4 sm:$0xff]
    %s1493 = scalar_lea.vmem %s1143, 3971
    %v1494 = vld [vmem:[%s1493] ss:$4 sm:$0xff]
    %v1495 = vadd.f32 %v1399, %v1432
    %v1496 = vadd.f32 %v1400, %v1434
    %v1497 = vadd.f32 %v1401, %v1436
    %v1498 = vadd.f32 %v1402, %v1438
    %v1499 = vadd.f32 %v1403, %v1440
    %v1500 = vadd.f32 %v1404, %v1442
    %v1501 = vadd.f32 %v1405, %v1444
    %v1502 = vadd.f32 %v1406, %v1446
    %v1503 = vadd.f32 %v1407, %v1448
    %v1504 = vadd.f32 %v1408, %v1450
    %v1505 = vadd.f32 %v1409, %v1452
    %v1506 = vadd.f32 %v1410, %v1454
    %v1507 = vadd.f32 %v1411, %v1456
    %v1508 = vadd.f32 %v1412, %v1458
    %v1509 = vadd.f32 %v1413, %v1460
    %v1510 = vadd.f32 %v1414, %v1462
    %v1511 = vadd.f32 %v1415, %v1464
    %v1512 = vadd.f32 %v1416, %v1466
    %v1513 = vadd.f32 %v1417, %v1468
    %v1514 = vadd.f32 %v1418, %v1470
    %v1515 = vadd.f32 %v1419, %v1472
    %v1516 = vadd.f32 %v1420, %v1474
    %v1517 = vadd.f32 %v1421, %v1476
    %v1518 = vadd.f32 %v1422, %v1478
    %v1519 = vadd.f32 %v1423, %v1480
    %v1520 = vadd.f32 %v1424, %v1482
    %v1521 = vadd.f32 %v1425, %v1484
    %v1522 = vadd.f32 %v1426, %v1486
    %v1523 = vadd.f32 %v1427, %v1488
    %v1524 = vadd.f32 %v1428, %v1490
    %v1525 = vadd.f32 %v1429, %v1492
    %v1526 = vadd.f32 %v1430, %v1494
    %s1527 = scalar_lea.vmem %s2, 96
    %v1528 = vld [vmem:[%s1527] ss:$4 sm:$0xff]
    %s1529 = scalar_lea.vmem %s1527, 128
    %v1530 = vld [vmem:[%s1529] ss:$4 sm:$0xff]
    %s1531 = scalar_lea.vmem %s1527, 256
    %v1532 = vld [vmem:[%s1531] ss:$4 sm:$0xff]
    %s1533 = scalar_lea.vmem %s1527, 384
    %v1534 = vld [vmem:[%s1533] ss:$4 sm:$0xff]
    %s1535 = scalar_lea.vmem %s1527, 512
    %v1536 = vld [vmem:[%s1535] ss:$4 sm:$0xff]
    %s1537 = scalar_lea.vmem %s1527, 640
    %v1538 = vld [vmem:[%s1537] ss:$4 sm:$0xff]
    %s1539 = scalar_lea.vmem %s1527, 768
    %v1540 = vld [vmem:[%s1539] ss:$4 sm:$0xff]
    %s1541 = scalar_lea.vmem %s1527, 896
    %v1542 = vld [vmem:[%s1541] ss:$4 sm:$0xff]
    %s1543 = scalar_lea.vmem %s1527, 1024
    %v1544 = vld [vmem:[%s1543] ss:$4 sm:$0xff]
    %s1545 = scalar_lea.vmem %s1527, 1152
    %v1546 = vld [vmem:[%s1545] ss:$4 sm:$0xff]
    %s1547 = scalar_lea.vmem %s1527, 1280
    %v1548 = vld [vmem:[%s1547] ss:$4 sm:$0xff]
    %s1549 = scalar_lea.vmem %s1527, 1408
    %v1550 = vld [vmem:[%s1549] ss:$4 sm:$0xff]
    %s1551 = scalar_lea.vmem %s1527, 1536
    %v1552 = vld [vmem:[%s1551] ss:$4 sm:$0xff]
    %s1553 = scalar_lea.vmem %s1527, 1664
    %v1554 = vld [vmem:[%s1553] ss:$4 sm:$0xff]
    %s1555 = scalar_lea.vmem %s1527, 1792
    %v1556 = vld [vmem:[%s1555] ss:$4 sm:$0xff]
    %s1557 = scalar_lea.vmem %s1527, 1920
    %v1558 = vld [vmem:[%s1557] ss:$4 sm:$0xff]
    %s1559 = scalar_lea.vmem %s1527, 2048
    %v1560 = vld [vmem:[%s1559] ss:$4 sm:$0xff]
    %s1561 = scalar_lea.vmem %s1527, 2176
    %v1562 = vld [vmem:[%s1561] ss:$4 sm:$0xff]
    %s1563 = scalar_lea.vmem %s1527, 2304
    %v1564 = vld [vmem:[%s1563] ss:$4 sm:$0xff]
    %s1565 = scalar_lea.vmem %s1527, 2432
    %v1566 = vld [vmem:[%s1565] ss:$4 sm:$0xff]
    %s1567 = scalar_lea.vmem %s1527, 2560
    %v1568 = vld [vmem:[%s1567] ss:$4 sm:$0xff]
    %s1569 = scalar_lea.vmem %s1527, 2688
    %v1570 = vld [vmem:[%s1569] ss:$4 sm:$0xff]
    %s1571 = scalar_lea.vmem %s1527, 2816
    %v1572 = vld [vmem:[%s1571] ss:$4 sm:$0xff]
    %s1573 = scalar_lea.vmem %s1527, 2944
    %v1574 = vld [vmem:[%s1573] ss:$4 sm:$0xff]
    %s1575 = scalar_lea.vmem %s1527, 3072
    %v1576 = vld [vmem:[%s1575] ss:$4 sm:$0xff]
    %s1577 = scalar_lea.vmem %s1527, 3200
    %v1578 = vld [vmem:[%s1577] ss:$4 sm:$0xff]
    %s1579 = scalar_lea.vmem %s1527, 3328
    %v1580 = vld [vmem:[%s1579] ss:$4 sm:$0xff]
    %s1581 = scalar_lea.vmem %s1527, 3456
    %v1582 = vld [vmem:[%s1581] ss:$4 sm:$0xff]
    %s1583 = scalar_lea.vmem %s1527, 3584
    %v1584 = vld [vmem:[%s1583] ss:$4 sm:$0xff]
    %s1585 = scalar_lea.vmem %s1527, 3712
    %v1586 = vld [vmem:[%s1585] ss:$4 sm:$0xff]
    %s1587 = scalar_lea.vmem %s1527, 3840
    %v1588 = vld [vmem:[%s1587] ss:$4 sm:$0xff]
    %s1589 = scalar_lea.vmem %s1527, 3968
    %v1590 = vld [vmem:[%s1589] ss:$4 sm:$0xff]
    %v1591 = vadd.f32 %v1495, %v1528
    %v1592 = vadd.f32 %v1496, %v1530
    %v1593 = vadd.f32 %v1497, %v1532
    %v1594 = vadd.f32 %v1498, %v1534
    %v1595 = vadd.f32 %v1499, %v1536
    %v1596 = vadd.f32 %v1500, %v1538
    %v1597 = vadd.f32 %v1501, %v1540
    %v1598 = vadd.f32 %v1502, %v1542
    %v1599 = vadd.f32 %v1503, %v1544
    %v1600 = vadd.f32 %v1504, %v1546
    %v1601 = vadd.f32 %v1505, %v1548
    %v1602 = vadd.f32 %v1506, %v1550
    %v1603 = vadd.f32 %v1507, %v1552
    %v1604 = vadd.f32 %v1508, %v1554
    %v1605 = vadd.f32 %v1509, %v1556
    %v1606 = vadd.f32 %v1510, %v1558
    %v1607 = vadd.f32 %v1511, %v1560
    %v1608 = vadd.f32 %v1512, %v1562
    %v1609 = vadd.f32 %v1513, %v1564
    %v1610 = vadd.f32 %v1514, %v1566
    %v1611 = vadd.f32 %v1515, %v1568
    %v1612 = vadd.f32 %v1516, %v1570
    %v1613 = vadd.f32 %v1517, %v1572
    %v1614 = vadd.f32 %v1518, %v1574
    %v1615 = vadd.f32 %v1519, %v1576
    %v1616 = vadd.f32 %v1520, %v1578
    %v1617 = vadd.f32 %v1521, %v1580
    %v1618 = vadd.f32 %v1522, %v1582
    %v1619 = vadd.f32 %v1523, %v1584
    %v1620 = vadd.f32 %v1524, %v1586
    %v1621 = vadd.f32 %v1525, %v1588
    %v1622 = vadd.f32 %v1526, %v1590
    %s1623 = scalar_lea.vmem %s1527, 1
    %v1624 = vld [vmem:[%s1623] ss:$4 sm:$0xff]
    %s1625 = scalar_lea.vmem %s1527, 129
    %v1626 = vld [vmem:[%s1625] ss:$4 sm:$0xff]
    %s1627 = scalar_lea.vmem %s1527, 257
    %v1628 = vld [vmem:[%s1627] ss:$4 sm:$0xff]
    %s1629 = scalar_lea.vmem %s1527, 385
    %v1630 = vld [vmem:[%s1629] ss:$4 sm:$0xff]
    %s1631 = scalar_lea.vmem %s1527, 513
    %v1632 = vld [vmem:[%s1631] ss:$4 sm:$0xff]
    %s1633 = scalar_lea.vmem %s1527, 641
    %v1634 = vld [vmem:[%s1633] ss:$4 sm:$0xff]
    %s1635 = scalar_lea.vmem %s1527, 769
    %v1636 = vld [vmem:[%s1635] ss:$4 sm:$0xff]
    %s1637 = scalar_lea.vmem %s1527, 897
    %v1638 = vld [vmem:[%s1637] ss:$4 sm:$0xff]
    %s1639 = scalar_lea.vmem %s1527, 1025
    %v1640 = vld [vmem:[%s1639] ss:$4 sm:$0xff]
    %s1641 = scalar_lea.vmem %s1527, 1153
    %v1642 = vld [vmem:[%s1641] ss:$4 sm:$0xff]
    %s1643 = scalar_lea.vmem %s1527, 1281
    %v1644 = vld [vmem:[%s1643] ss:$4 sm:$0xff]
    %s1645 = scalar_lea.vmem %s1527, 1409
    %v1646 = vld [vmem:[%s1645] ss:$4 sm:$0xff]
    %s1647 = scalar_lea.vmem %s1527, 1537
    %v1648 = vld [vmem:[%s1647] ss:$4 sm:$0xff]
    %s1649 = scalar_lea.vmem %s1527, 1665
    %v1650 = vld [vmem:[%s1649] ss:$4 sm:$0xff]
    %s1651 = scalar_lea.vmem %s1527, 1793
    %v1652 = vld [vmem:[%s1651] ss:$4 sm:$0xff]
    %s1653 = scalar_lea.vmem %s1527, 1921
    %v1654 = vld [vmem:[%s1653] ss:$4 sm:$0xff]
    %s1655 = scalar_lea.vmem %s1527, 2049
    %v1656 = vld [vmem:[%s1655] ss:$4 sm:$0xff]
    %s1657 = scalar_lea.vmem %s1527, 2177
    %v1658 = vld [vmem:[%s1657] ss:$4 sm:$0xff]
    %s1659 = scalar_lea.vmem %s1527, 2305
    %v1660 = vld [vmem:[%s1659] ss:$4 sm:$0xff]
    %s1661 = scalar_lea.vmem %s1527, 2433
    %v1662 = vld [vmem:[%s1661] ss:$4 sm:$0xff]
    %s1663 = scalar_lea.vmem %s1527, 2561
    %v1664 = vld [vmem:[%s1663] ss:$4 sm:$0xff]
    %s1665 = scalar_lea.vmem %s1527, 2689
    %v1666 = vld [vmem:[%s1665] ss:$4 sm:$0xff]
    %s1667 = scalar_lea.vmem %s1527, 2817
    %v1668 = vld [vmem:[%s1667] ss:$4 sm:$0xff]
    %s1669 = scalar_lea.vmem %s1527, 2945
    %v1670 = vld [vmem:[%s1669] ss:$4 sm:$0xff]
    %s1671 = scalar_lea.vmem %s1527, 3073
    %v1672 = vld [vmem:[%s1671] ss:$4 sm:$0xff]
    %s1673 = scalar_lea.vmem %s1527, 3201
    %v1674 = vld [vmem:[%s1673] ss:$4 sm:$0xff]
    %s1675 = scalar_lea.vmem %s1527, 3329
    %v1676 = vld [vmem:[%s1675] ss:$4 sm:$0xff]
    %s1677 = scalar_lea.vmem %s1527, 3457
    %v1678 = vld [vmem:[%s1677] ss:$4 sm:$0xff]
    %s1679 = scalar_lea.vmem %s1527, 3585
    %v1680 = vld [vmem:[%s1679] ss:$4 sm:$0xff]
    %s1681 = scalar_lea.vmem %s1527, 3713
    %v1682 = vld [vmem:[%s1681] ss:$4 sm:$0xff]
    %s1683 = scalar_lea.vmem %s1527, 3841
    %v1684 = vld [vmem:[%s1683] ss:$4 sm:$0xff]
    %s1685 = scalar_lea.vmem %s1527, 3969
    %v1686 = vld [vmem:[%s1685] ss:$4 sm:$0xff]
    %v1687 = vadd.f32 %v1591, %v1624
    %v1688 = vadd.f32 %v1592, %v1626
    %v1689 = vadd.f32 %v1593, %v1628
    %v1690 = vadd.f32 %v1594, %v1630
    %v1691 = vadd.f32 %v1595, %v1632
    %v1692 = vadd.f32 %v1596, %v1634
    %v1693 = vadd.f32 %v1597, %v1636
    %v1694 = vadd.f32 %v1598, %v1638
    %v1695 = vadd.f32 %v1599, %v1640
    %v1696 = vadd.f32 %v1600, %v1642
    %v1697 = vadd.f32 %v1601, %v1644
    %v1698 = vadd.f32 %v1602, %v1646
    %v1699 = vadd.f32 %v1603, %v1648
    %v1700 = vadd.f32 %v1604, %v1650
    %v1701 = vadd.f32 %v1605, %v1652
    %v1702 = vadd.f32 %v1606, %v1654
    %v1703 = vadd.f32 %v1607, %v1656
    %v1704 = vadd.f32 %v1608, %v1658
    %v1705 = vadd.f32 %v1609, %v1660
    %v1706 = vadd.f32 %v1610, %v1662
    %v1707 = vadd.f32 %v1611, %v1664
    %v1708 = vadd.f32 %v1612, %v1666
    %v1709 = vadd.f32 %v1613, %v1668
    %v1710 = vadd.f32 %v1614, %v1670
    %v1711 = vadd.f32 %v1615, %v1672
    %v1712 = vadd.f32 %v1616, %v1674
    %v1713 = vadd.f32 %v1617, %v1676
    %v1714 = vadd.f32 %v1618, %v1678
    %v1715 = vadd.f32 %v1619, %v1680
    %v1716 = vadd.f32 %v1620, %v1682
    %v1717 = vadd.f32 %v1621, %v1684
    %v1718 = vadd.f32 %v1622, %v1686
    %s1719 = scalar_lea.vmem %s1527, 2
    %v1720 = vld [vmem:[%s1719] ss:$4 sm:$0xff]
    %s1721 = scalar_lea.vmem %s1527, 130
    %v1722 = vld [vmem:[%s1721] ss:$4 sm:$0xff]
    %s1723 = scalar_lea.vmem %s1527, 258
    %v1724 = vld [vmem:[%s1723] ss:$4 sm:$0xff]
    %s1725 = scalar_lea.vmem %s1527, 386
    %v1726 = vld [vmem:[%s1725] ss:$4 sm:$0xff]
    %s1727 = scalar_lea.vmem %s1527, 514
    %v1728 = vld [vmem:[%s1727] ss:$4 sm:$0xff]
    %s1729 = scalar_lea.vmem %s1527, 642
    %v1730 = vld [vmem:[%s1729] ss:$4 sm:$0xff]
    %s1731 = scalar_lea.vmem %s1527, 770
    %v1732 = vld [vmem:[%s1731] ss:$4 sm:$0xff]
    %s1733 = scalar_lea.vmem %s1527, 898
    %v1734 = vld [vmem:[%s1733] ss:$4 sm:$0xff]
    %s1735 = scalar_lea.vmem %s1527, 1026
    %v1736 = vld [vmem:[%s1735] ss:$4 sm:$0xff]
    %s1737 = scalar_lea.vmem %s1527, 1154
    %v1738 = vld [vmem:[%s1737] ss:$4 sm:$0xff]
    %s1739 = scalar_lea.vmem %s1527, 1282
    %v1740 = vld [vmem:[%s1739] ss:$4 sm:$0xff]
    %s1741 = scalar_lea.vmem %s1527, 1410
    %v1742 = vld [vmem:[%s1741] ss:$4 sm:$0xff]
    %s1743 = scalar_lea.vmem %s1527, 1538
    %v1744 = vld [vmem:[%s1743] ss:$4 sm:$0xff]
    %s1745 = scalar_lea.vmem %s1527, 1666
    %v1746 = vld [vmem:[%s1745] ss:$4 sm:$0xff]
    %s1747 = scalar_lea.vmem %s1527, 1794
    %v1748 = vld [vmem:[%s1747] ss:$4 sm:$0xff]
    %s1749 = scalar_lea.vmem %s1527, 1922
    %v1750 = vld [vmem:[%s1749] ss:$4 sm:$0xff]
    %s1751 = scalar_lea.vmem %s1527, 2050
    %v1752 = vld [vmem:[%s1751] ss:$4 sm:$0xff]
    %s1753 = scalar_lea.vmem %s1527, 2178
    %v1754 = vld [vmem:[%s1753] ss:$4 sm:$0xff]
    %s1755 = scalar_lea.vmem %s1527, 2306
    %v1756 = vld [vmem:[%s1755] ss:$4 sm:$0xff]
    %s1757 = scalar_lea.vmem %s1527, 2434
    %v1758 = vld [vmem:[%s1757] ss:$4 sm:$0xff]
    %s1759 = scalar_lea.vmem %s1527, 2562
    %v1760 = vld [vmem:[%s1759] ss:$4 sm:$0xff]
    %s1761 = scalar_lea.vmem %s1527, 2690
    %v1762 = vld [vmem:[%s1761] ss:$4 sm:$0xff]
    %s1763 = scalar_lea.vmem %s1527, 2818
    %v1764 = vld [vmem:[%s1763] ss:$4 sm:$0xff]
    %s1765 = scalar_lea.vmem %s1527, 2946
    %v1766 = vld [vmem:[%s1765] ss:$4 sm:$0xff]
    %s1767 = scalar_lea.vmem %s1527, 3074
    %v1768 = vld [vmem:[%s1767] ss:$4 sm:$0xff]
    %s1769 = scalar_lea.vmem %s1527, 3202
    %v1770 = vld [vmem:[%s1769] ss:$4 sm:$0xff]
    %s1771 = scalar_lea.vmem %s1527, 3330
    %v1772 = vld [vmem:[%s1771] ss:$4 sm:$0xff]
    %s1773 = scalar_lea.vmem %s1527, 3458
    %v1774 = vld [vmem:[%s1773] ss:$4 sm:$0xff]
    %s1775 = scalar_lea.vmem %s1527, 3586
    %v1776 = vld [vmem:[%s1775] ss:$4 sm:$0xff]
    %s1777 = scalar_lea.vmem %s1527, 3714
    %v1778 = vld [vmem:[%s1777] ss:$4 sm:$0xff]
    %s1779 = scalar_lea.vmem %s1527, 3842
    %v1780 = vld [vmem:[%s1779] ss:$4 sm:$0xff]
    %s1781 = scalar_lea.vmem %s1527, 3970
    %v1782 = vld [vmem:[%s1781] ss:$4 sm:$0xff]
    %v1783 = vadd.f32 %v1687, %v1720
    %v1784 = vadd.f32 %v1688, %v1722
    %v1785 = vadd.f32 %v1689, %v1724
    %v1786 = vadd.f32 %v1690, %v1726
    %v1787 = vadd.f32 %v1691, %v1728
    %v1788 = vadd.f32 %v1692, %v1730
    %v1789 = vadd.f32 %v1693, %v1732
    %v1790 = vadd.f32 %v1694, %v1734
    %v1791 = vadd.f32 %v1695, %v1736
    %v1792 = vadd.f32 %v1696, %v1738
    %v1793 = vadd.f32 %v1697, %v1740
    %v1794 = vadd.f32 %v1698, %v1742
    %v1795 = vadd.f32 %v1699, %v1744
    %v1796 = vadd.f32 %v1700, %v1746
    %v1797 = vadd.f32 %v1701, %v1748
    %v1798 = vadd.f32 %v1702, %v1750
    %v1799 = vadd.f32 %v1703, %v1752
    %v1800 = vadd.f32 %v1704, %v1754
    %v1801 = vadd.f32 %v1705, %v1756
    %v1802 = vadd.f32 %v1706, %v1758
    %v1803 = vadd.f32 %v1707, %v1760
    %v1804 = vadd.f32 %v1708, %v1762
    %v1805 = vadd.f32 %v1709, %v1764
    %v1806 = vadd.f32 %v1710, %v1766
    %v1807 = vadd.f32 %v1711, %v1768
    %v1808 = vadd.f32 %v1712, %v1770
    %v1809 = vadd.f32 %v1713, %v1772
    %v1810 = vadd.f32 %v1714, %v1774
    %v1811 = vadd.f32 %v1715, %v1776
    %v1812 = vadd.f32 %v1716, %v1778
    %v1813 = vadd.f32 %v1717, %v1780
    %v1814 = vadd.f32 %v1718, %v1782
    %s1815 = scalar_lea.vmem %s1527, 3
    %v1816 = vld [vmem:[%s1815] ss:$4 sm:$0xff]
    %s1817 = scalar_lea.vmem %s1527, 131
    %v1818 = vld [vmem:[%s1817] ss:$4 sm:$0xff]
    %s1819 = scalar_lea.vmem %s1527, 259
    %v1820 = vld [vmem:[%s1819] ss:$4 sm:$0xff]
    %s1821 = scalar_lea.vmem %s1527, 387
    %v1822 = vld [vmem:[%s1821] ss:$4 sm:$0xff]
    %s1823 = scalar_lea.vmem %s1527, 515
    %v1824 = vld [vmem:[%s1823] ss:$4 sm:$0xff]
    %s1825 = scalar_lea.vmem %s1527, 643
    %v1826 = vld [vmem:[%s1825] ss:$4 sm:$0xff]
    %s1827 = scalar_lea.vmem %s1527, 771
    %v1828 = vld [vmem:[%s1827] ss:$4 sm:$0xff]
    %s1829 = scalar_lea.vmem %s1527, 899
    %v1830 = vld [vmem:[%s1829] ss:$4 sm:$0xff]
    %s1831 = scalar_lea.vmem %s1527, 1027
    %v1832 = vld [vmem:[%s1831] ss:$4 sm:$0xff]
    %s1833 = scalar_lea.vmem %s1527, 1155
    %v1834 = vld [vmem:[%s1833] ss:$4 sm:$0xff]
    %s1835 = scalar_lea.vmem %s1527, 1283
    %v1836 = vld [vmem:[%s1835] ss:$4 sm:$0xff]
    %s1837 = scalar_lea.vmem %s1527, 1411
    %v1838 = vld [vmem:[%s1837] ss:$4 sm:$0xff]
    %s1839 = scalar_lea.vmem %s1527, 1539
    %v1840 = vld [vmem:[%s1839] ss:$4 sm:$0xff]
    %s1841 = scalar_lea.vmem %s1527, 1667
    %v1842 = vld [vmem:[%s1841] ss:$4 sm:$0xff]
    %s1843 = scalar_lea.vmem %s1527, 1795
    %v1844 = vld [vmem:[%s1843] ss:$4 sm:$0xff]
    %s1845 = scalar_lea.vmem %s1527, 1923
    %v1846 = vld [vmem:[%s1845] ss:$4 sm:$0xff]
    %s1847 = scalar_lea.vmem %s1527, 2051
    %v1848 = vld [vmem:[%s1847] ss:$4 sm:$0xff]
    %s1849 = scalar_lea.vmem %s1527, 2179
    %v1850 = vld [vmem:[%s1849] ss:$4 sm:$0xff]
    %s1851 = scalar_lea.vmem %s1527, 2307
    %v1852 = vld [vmem:[%s1851] ss:$4 sm:$0xff]
    %s1853 = scalar_lea.vmem %s1527, 2435
    %v1854 = vld [vmem:[%s1853] ss:$4 sm:$0xff]
    %s1855 = scalar_lea.vmem %s1527, 2563
    %v1856 = vld [vmem:[%s1855] ss:$4 sm:$0xff]
    %s1857 = scalar_lea.vmem %s1527, 2691
    %v1858 = vld [vmem:[%s1857] ss:$4 sm:$0xff]
    %s1859 = scalar_lea.vmem %s1527, 2819
    %v1860 = vld [vmem:[%s1859] ss:$4 sm:$0xff]
    %s1861 = scalar_lea.vmem %s1527, 2947
    %v1862 = vld [vmem:[%s1861] ss:$4 sm:$0xff]
    %s1863 = scalar_lea.vmem %s1527, 3075
    %v1864 = vld [vmem:[%s1863] ss:$4 sm:$0xff]
    %s1865 = scalar_lea.vmem %s1527, 3203
    %v1866 = vld [vmem:[%s1865] ss:$4 sm:$0xff]
    %s1867 = scalar_lea.vmem %s1527, 3331
    %v1868 = vld [vmem:[%s1867] ss:$4 sm:$0xff]
    %s1869 = scalar_lea.vmem %s1527, 3459
    %v1870 = vld [vmem:[%s1869] ss:$4 sm:$0xff]
    %s1871 = scalar_lea.vmem %s1527, 3587
    %v1872 = vld [vmem:[%s1871] ss:$4 sm:$0xff]
    %s1873 = scalar_lea.vmem %s1527, 3715
    %v1874 = vld [vmem:[%s1873] ss:$4 sm:$0xff]
    %s1875 = scalar_lea.vmem %s1527, 3843
    %v1876 = vld [vmem:[%s1875] ss:$4 sm:$0xff]
    %s1877 = scalar_lea.vmem %s1527, 3971
    %v1878 = vld [vmem:[%s1877] ss:$4 sm:$0xff]
    %v1879 = vadd.f32 %v1783, %v1816
    %v1880 = vadd.f32 %v1784, %v1818
    %v1881 = vadd.f32 %v1785, %v1820
    %v1882 = vadd.f32 %v1786, %v1822
    %v1883 = vadd.f32 %v1787, %v1824
    %v1884 = vadd.f32 %v1788, %v1826
    %v1885 = vadd.f32 %v1789, %v1828
    %v1886 = vadd.f32 %v1790, %v1830
    %v1887 = vadd.f32 %v1791, %v1832
    %v1888 = vadd.f32 %v1792, %v1834
    %v1889 = vadd.f32 %v1793, %v1836
    %v1890 = vadd.f32 %v1794, %v1838
    %v1891 = vadd.f32 %v1795, %v1840
    %v1892 = vadd.f32 %v1796, %v1842
    %v1893 = vadd.f32 %v1797, %v1844
    %v1894 = vadd.f32 %v1798, %v1846
    %v1895 = vadd.f32 %v1799, %v1848
    %v1896 = vadd.f32 %v1800, %v1850
    %v1897 = vadd.f32 %v1801, %v1852
    %v1898 = vadd.f32 %v1802, %v1854
    %v1899 = vadd.f32 %v1803, %v1856
    %v1900 = vadd.f32 %v1804, %v1858
    %v1901 = vadd.f32 %v1805, %v1860
    %v1902 = vadd.f32 %v1806, %v1862
    %v1903 = vadd.f32 %v1807, %v1864
    %v1904 = vadd.f32 %v1808, %v1866
    %v1905 = vadd.f32 %v1809, %v1868
    %v1906 = vadd.f32 %v1810, %v1870
    %v1907 = vadd.f32 %v1811, %v1872
    %v1908 = vadd.f32 %v1812, %v1874
    %v1909 = vadd.f32 %v1813, %v1876
    %v1910 = vadd.f32 %v1814, %v1878
    %v1911 = vmul.f32 %v1879, 0.0625
    %v1912 = vmul.f32 %v1880, 0.0625
    %v1913 = vmul.f32 %v1881, 0.0625
    %v1914 = vmul.f32 %v1882, 0.0625
    %v1915 = vmul.f32 %v1883, 0.0625
    %v1916 = vmul.f32 %v1884, 0.0625
    %v1917 = vmul.f32 %v1885, 0.0625
    %v1918 = vmul.f32 %v1886, 0.0625
    %v1919 = vmul.f32 %v1887, 0.0625
    %v1920 = vmul.f32 %v1888, 0.0625
    %v1921 = vmul.f32 %v1889, 0.0625
    %v1922 = vmul.f32 %v1890, 0.0625
    %v1923 = vmul.f32 %v1891, 0.0625
    %v1924 = vmul.f32 %v1892, 0.0625
    %v1925 = vmul.f32 %v1893, 0.0625
    %v1926 = vmul.f32 %v1894, 0.0625
    %v1927 = vmul.f32 %v1895, 0.0625
    %v1928 = vmul.f32 %v1896, 0.0625
    %v1929 = vmul.f32 %v1897, 0.0625
    %v1930 = vmul.f32 %v1898, 0.0625
    %v1931 = vmul.f32 %v1899, 0.0625
    %v1932 = vmul.f32 %v1900, 0.0625
    %v1933 = vmul.f32 %v1901, 0.0625
    %v1934 = vmul.f32 %v1902, 0.0625
    %v1935 = vmul.f32 %v1903, 0.0625
    %v1936 = vmul.f32 %v1904, 0.0625
    %v1937 = vmul.f32 %v1905, 0.0625
    %v1938 = vmul.f32 %v1906, 0.0625
    %v1939 = vmul.f32 %v1907, 0.0625
    %v1940 = vmul.f32 %v1908, 0.0625
    %v1941 = vmul.f32 %v1909, 0.0625
    %v1942 = vmul.f32 %v1910, 0.0625
    %vm1943 = vcmask 261120
    %1944 = vst.msk [vmem:[#allocation2] sm:$0xff] %vm1943, 0.0
    %vm1945 = vcmask 254976
    %1946 = vst.msk [vmem:[#allocation2 + $0x8] sm:$0x3] %vm1945, 0.0
    %1947 = vst.msk [vmem:[#allocation2 + $0xa0] sm:$0xff] %vm1943, 0.0
    %1948 = vst.msk [vmem:[#allocation2 + $0xa8] sm:$0x3] %vm1945, 0.0
    %1949 = vst.msk [vmem:[#allocation2 + $0x140] sm:$0xff] %vm1943, 0.0
    %1950 = vst.msk [vmem:[#allocation2 + $0x148] sm:$0x3] %vm1945, 0.0
    %1951 = vst.msk [vmem:[#allocation2 + $0x1e0] sm:$0xff] %vm1943, 0.0
    %1952 = vst.msk [vmem:[#allocation2 + $0x1e8] sm:$0x3] %vm1945, 0.0
    %s1953 = scalar_lea.vmem [#allocation2], 144
    %1954 = vst.msk [vmem:[%s1953] sm:$0xff] %vm1943, 0.0
    %1955 = vst.msk [vmem:[%s1953 + $0x8] sm:$0x3] %vm1945, 0.0
    %1956 = vst.msk [vmem:[%s1953 + $0xa0] sm:$0xff] %vm1943, 0.0
    %1957 = vst.msk [vmem:[%s1953 + $0xa8] sm:$0x3] %vm1945, 0.0
    %1958 = vst.msk [vmem:[%s1953 + $0x140] sm:$0xff] %vm1943, 0.0
    %1959 = vst.msk [vmem:[%s1953 + $0x148] sm:$0x3] %vm1945, 0.0
    %1960 = vst.msk [vmem:[%s1953 + $0x1e0] sm:$0xff] %vm1943, 0.0
    %1961 = vst.msk [vmem:[%s1953 + $0x1e8] sm:$0x3] %vm1945, 0.0
    %vm1962 = vcmask 253952
    %1963 = vst.msk [vmem:[#allocation2] sm:$0x1] %vm1962, 0.0
    %1964 = vst.msk [vmem:[#allocation2 + $0x10] sm:$0x1] %vm1962, 0.0
    %1965 = vst.msk [vmem:[#allocation2 + $0x20] sm:$0x1] %vm1962, 0.0
    %1966 = vst.msk [vmem:[#allocation2 + $0x30] sm:$0x1] %vm1962, 0.0
    %1967 = vst.msk [vmem:[#allocation2 + $0x40] sm:$0x1] %vm1962, 0.0
    %1968 = vst.msk [vmem:[#allocation2 + $0x50] sm:$0x1] %vm1962, 0.0
    %1969 = vst.msk [vmem:[#allocation2 + $0x60] sm:$0x1] %vm1962, 0.0
    %1970 = vst.msk [vmem:[#allocation2 + $0x70] sm:$0x1] %vm1962, 0.0
    %1971 = vst.msk [vmem:[#allocation2 + $0x80] sm:$0x1] %vm1962, 0.0
    %1972 = vst.msk [vmem:[#allocation2 + $0x90] sm:$0x1] %vm1962, 0.0
    %1973 = vst.msk [vmem:[#allocation2 + $0xa0] sm:$0x1] %vm1962, 0.0
    %1974 = vst.msk [vmem:[#allocation2 + $0xb0] sm:$0x1] %vm1962, 0.0
    %1975 = vst.msk [vmem:[#allocation2 + $0xc0] sm:$0x1] %vm1962, 0.0
    %1976 = vst.msk [vmem:[#allocation2 + $0xd0] sm:$0x1] %vm1962, 0.0
    %1977 = vst.msk [vmem:[#allocation2 + $0xe0] sm:$0x1] %vm1962, 0.0
    %1978 = vst.msk [vmem:[#allocation2 + $0xf0] sm:$0x1] %vm1962, 0.0
    %1979 = vst.msk [vmem:[#allocation2 + $0x100] sm:$0x1] %vm1962, 0.0
    %1980 = vst.msk [vmem:[#allocation2 + $0x110] sm:$0x1] %vm1962, 0.0
    %1981 = vst.msk [vmem:[#allocation2 + $0x120] sm:$0x1] %vm1962, 0.0
    %1982 = vst.msk [vmem:[#allocation2 + $0x130] sm:$0x1] %vm1962, 0.0
    %1983 = vst.msk [vmem:[#allocation2 + $0x140] sm:$0x1] %vm1962, 0.0
    %1984 = vst.msk [vmem:[#allocation2 + $0x150] sm:$0x1] %vm1962, 0.0
    %1985 = vst.msk [vmem:[#allocation2 + $0x160] sm:$0x1] %vm1962, 0.0
    %1986 = vst.msk [vmem:[#allocation2 + $0x170] sm:$0x1] %vm1962, 0.0
    %1987 = vst.msk [vmem:[#allocation2 + $0x180] sm:$0x1] %vm1962, 0.0
    %1988 = vst.msk [vmem:[#allocation2 + $0x190] sm:$0x1] %vm1962, 0.0
    %1989 = vst.msk [vmem:[#allocation2 + $0x1a0] sm:$0x1] %vm1962, 0.0
    %1990 = vst.msk [vmem:[#allocation2 + $0x1b0] sm:$0x1] %vm1962, 0.0
    %1991 = vst.msk [vmem:[#allocation2 + $0x1c0] sm:$0x1] %vm1962, 0.0
    %1992 = vst.msk [vmem:[#allocation2 + $0x1d0] sm:$0x1] %vm1962, 0.0
    %1993 = vst.msk [vmem:[#allocation2 + $0x1e0] sm:$0x1] %vm1962, 0.0
    %1994 = vst.msk [vmem:[#allocation2 + $0x1f0] sm:$0x1] %vm1962, 0.0
    %1995 = vst.msk [vmem:[#allocation2 + $0x200] sm:$0x1] %vm1962, 0.0
    %1996 = vst.msk [vmem:[#allocation2 + $0x210] sm:$0x1] %vm1962, 0.0
    %1997 = vst.msk [vmem:[#allocation2 + $0x220] sm:$0x1] %vm1962, 0.0
    %1998 = vst.msk [vmem:[#allocation2 + $0x230] sm:$0x1] %vm1962, 0.0
    %1999 = vst.msk [vmem:[#allocation2 + $0x240] sm:$0x1] %vm1962, 0.0
    %2000 = vst.msk [vmem:[#allocation2 + $0x250] sm:$0x1] %vm1962, 0.0
    %2001 = vst.msk [vmem:[#allocation2 + $0x260] sm:$0x1] %vm1962, 0.0
    %2002 = vst.msk [vmem:[#allocation2 + $0x270] sm:$0x1] %vm1962, 0.0
    %2003 = vst.msk [vmem:[#allocation2 + $0x9] sm:$0x1] %vm1962, 0.0
    %2004 = vst.msk [vmem:[#allocation2 + $0x19] sm:$0x1] %vm1962, 0.0
    %2005 = vst.msk [vmem:[#allocation2 + $0x29] sm:$0x1] %vm1962, 0.0
    %2006 = vst.msk [vmem:[#allocation2 + $0x39] sm:$0x1] %vm1962, 0.0
    %2007 = vst.msk [vmem:[#allocation2 + $0x49] sm:$0x1] %vm1962, 0.0
    %2008 = vst.msk [vmem:[#allocation2 + $0x59] sm:$0x1] %vm1962, 0.0
    %2009 = vst.msk [vmem:[#allocation2 + $0x69] sm:$0x1] %vm1962, 0.0
    %2010 = vst.msk [vmem:[#allocation2 + $0x79] sm:$0x1] %vm1962, 0.0
    %2011 = vst.msk [vmem:[#allocation2 + $0x89] sm:$0x1] %vm1962, 0.0
    %2012 = vst.msk [vmem:[#allocation2 + $0x99] sm:$0x1] %vm1962, 0.0
    %2013 = vst.msk [vmem:[#allocation2 + $0xa9] sm:$0x1] %vm1962, 0.0
    %2014 = vst.msk [vmem:[#allocation2 + $0xb9] sm:$0x1] %vm1962, 0.0
    %2015 = vst.msk [vmem:[#allocation2 + $0xc9] sm:$0x1] %vm1962, 0.0
    %2016 = vst.msk [vmem:[#allocation2 + $0xd9] sm:$0x1] %vm1962, 0.0
    %2017 = vst.msk [vmem:[#allocation2 + $0xe9] sm:$0x1] %vm1962, 0.0
    %2018 = vst.msk [vmem:[#allocation2 + $0xf9] sm:$0x1] %vm1962, 0.0
    %2019 = vst.msk [vmem:[#allocation2 + $0x109] sm:$0x1] %vm1962, 0.0
    %2020 = vst.msk [vmem:[#allocation2 + $0x119] sm:$0x1] %vm1962, 0.0
    %2021 = vst.msk [vmem:[#allocation2 + $0x129] sm:$0x1] %vm1962, 0.0
    %2022 = vst.msk [vmem:[#allocation2 + $0x139] sm:$0x1] %vm1962, 0.0
    %2023 = vst.msk [vmem:[#allocation2 + $0x149] sm:$0x1] %vm1962, 0.0
    %2024 = vst.msk [vmem:[#allocation2 + $0x159] sm:$0x1] %vm1962, 0.0
    %2025 = vst.msk [vmem:[#allocation2 + $0x169] sm:$0x1] %vm1962, 0.0
    %2026 = vst.msk [vmem:[#allocation2 + $0x179] sm:$0x1] %vm1962, 0.0
    %2027 = vst.msk [vmem:[#allocation2 + $0x189] sm:$0x1] %vm1962, 0.0
    %2028 = vst.msk [vmem:[#allocation2 + $0x199] sm:$0x1] %vm1962, 0.0
    %2029 = vst.msk [vmem:[#allocation2 + $0x1a9] sm:$0x1] %vm1962, 0.0
    %2030 = vst.msk [vmem:[#allocation2 + $0x1b9] sm:$0x1] %vm1962, 0.0
    %2031 = vst.msk [vmem:[#allocation2 + $0x1c9] sm:$0x1] %vm1962, 0.0
    %2032 = vst.msk [vmem:[#allocation2 + $0x1d9] sm:$0x1] %vm1962, 0.0
    %2033 = vst.msk [vmem:[#allocation2 + $0x1e9] sm:$0x1] %vm1962, 0.0
    %2034 = vst.msk [vmem:[#allocation2 + $0x1f9] sm:$0x1] %vm1962, 0.0
    %2035 = vst.msk [vmem:[#allocation2 + $0x209] sm:$0x1] %vm1962, 0.0
    %2036 = vst.msk [vmem:[#allocation2 + $0x219] sm:$0x1] %vm1962, 0.0
    %2037 = vst.msk [vmem:[#allocation2 + $0x229] sm:$0x1] %vm1962, 0.0
    %2038 = vst.msk [vmem:[#allocation2 + $0x239] sm:$0x1] %vm1962, 0.0
    %2039 = vst.msk [vmem:[#allocation2 + $0x249] sm:$0x1] %vm1962, 0.0
    %2040 = vst.msk [vmem:[#allocation2 + $0x259] sm:$0x1] %vm1962, 0.0
    %2041 = vst.msk [vmem:[#allocation2 + $0x269] sm:$0x1] %vm1962, 0.0
    %2042 = vst.msk [vmem:[#allocation2 + $0x279] sm:$0x1] %vm1962, 0.0
    %v2043 = vld [vmem:[%s3] sm:$0xff]
    %v2044 = vld [vmem:[%s3 + $0x8] sm:$0xff]
    %v2045 = vld [vmem:[%s3 + $0x10] sm:$0xff]
    %v2046 = vld [vmem:[%s3 + $0x18] sm:$0xff]
    %v2047 = vld [vmem:[%s3 + $0x20] sm:$0xff]
    %v2048 = vld [vmem:[%s3 + $0x28] sm:$0xff]
    %v2049 = vld [vmem:[%s3 + $0x30] sm:$0xff]
    %v2050 = vld [vmem:[%s3 + $0x38] sm:$0xff]
    %v2051 = vld [vmem:[%s3 + $0x40] sm:$0xff]
    %v2052 = vld [vmem:[%s3 + $0x48] sm:$0xff]
    %v2053 = vld [vmem:[%s3 + $0x50] sm:$0xff]
    %v2054 = vld [vmem:[%s3 + $0x58] sm:$0xff]
    %v2055 = vld [vmem:[%s3 + $0x60] sm:$0xff]
    %v2056 = vld [vmem:[%s3 + $0x68] sm:$0xff]
    %v2057 = vld [vmem:[%s3 + $0x70] sm:$0xff]
    %v2058 = vld [vmem:[%s3 + $0x78] sm:$0xff]
    %v2059 = vld [vmem:[%s3 + $0x80] sm:$0xff]
    %v2060 = vld [vmem:[%s3 + $0x88] sm:$0xff]
    %v2061 = vld [vmem:[%s3 + $0x90] sm:$0xff]
    %v2062 = vld [vmem:[%s3 + $0x98] sm:$0xff]
    %v2063 = vld [vmem:[%s3 + $0xa0] sm:$0xff]
    %v2064 = vld [vmem:[%s3 + $0xa8] sm:$0xff]
    %v2065 = vld [vmem:[%s3 + $0xb0] sm:$0xff]
    %v2066 = vld [vmem:[%s3 + $0xb8] sm:$0xff]
    %v2067 = vld [vmem:[%s3 + $0xc0] sm:$0xff]
    %v2068 = vld [vmem:[%s3 + $0xc8] sm:$0xff]
    %v2069 = vld [vmem:[%s3 + $0xd0] sm:$0xff]
    %v2070 = vld [vmem:[%s3 + $0xd8] sm:$0xff]
    %v2071 = vld [vmem:[%s3 + $0xe0] sm:$0xff]
    %v2072 = vld [vmem:[%s3 + $0xe8] sm:$0xff]
    %v2073 = vld [vmem:[%s3 + $0xf0] sm:$0xff]
    %v2074 = vld [vmem:[%s3 + $0xf8] sm:$0xff]
    %v2075 = vld [vmem:[%s0] sm:$0xff]
    %v2076 = vld [vmem:[%s0 + $0x8] sm:$0xff]
    %v2077 = vld [vmem:[%s0 + $0x10] sm:$0xff]
    %v2078 = vld [vmem:[%s0 + $0x18] sm:$0xff]
    %v2079 = vld [vmem:[%s0 + $0x20] sm:$0xff]
    %v2080 = vld [vmem:[%s0 + $0x28] sm:$0xff]
    %v2081 = vld [vmem:[%s0 + $0x30] sm:$0xff]
    %v2082 = vld [vmem:[%s0 + $0x38] sm:$0xff]
    %v2083 = vld [vmem:[%s0 + $0x40] sm:$0xff]
    %v2084 = vld [vmem:[%s0 + $0x48] sm:$0xff]
    %v2085 = vld [vmem:[%s0 + $0x50] sm:$0xff]
    %v2086 = vld [vmem:[%s0 + $0x58] sm:$0xff]
    %v2087 = vld [vmem:[%s0 + $0x60] sm:$0xff]
    %v2088 = vld [vmem:[%s0 + $0x68] sm:$0xff]
    %v2089 = vld [vmem:[%s0 + $0x70] sm:$0xff]
    %v2090 = vld [vmem:[%s0 + $0x78] sm:$0xff]
    %v2091 = vld [vmem:[%s0 + $0x80] sm:$0xff]
    %v2092 = vld [vmem:[%s0 + $0x88] sm:$0xff]
    %v2093 = vld [vmem:[%s0 + $0x90] sm:$0xff]
    %v2094 = vld [vmem:[%s0 + $0x98] sm:$0xff]
    %v2095 = vld [vmem:[%s0 + $0xa0] sm:$0xff]
    %v2096 = vld [vmem:[%s0 + $0xa8] sm:$0xff]
    %v2097 = vld [vmem:[%s0 + $0xb0] sm:$0xff]
    %v2098 = vld [vmem:[%s0 + $0xb8] sm:$0xff]
    %v2099 = vld [vmem:[%s0 + $0xc0] sm:$0xff]
    %v2100 = vld [vmem:[%s0 + $0xc8] sm:$0xff]
    %v2101 = vld [vmem:[%s0 + $0xd0] sm:$0xff]
    %v2102 = vld [vmem:[%s0 + $0xd8] sm:$0xff]
    %v2103 = vld [vmem:[%s0 + $0xe0] sm:$0xff]
    %v2104 = vld [vmem:[%s0 + $0xe8] sm:$0xff]
    %v2105 = vld [vmem:[%s0 + $0xf0] sm:$0xff]
    %v2106 = vld [vmem:[%s0 + $0xf8] sm:$0xff]
    %s2107 = scalar_lea.vmem [#allocation2], 16
    %vm2108 = vcmask 64512
    %2109 = vst.msk [vmem:[%s2107 + $0x1] sm:$0xff] %vm2108, %v2075
    %2110 = vst.msk [vmem:[%s2107 + $0x11] sm:$0xff] %vm2108, %v2076
    %2111 = vst.msk [vmem:[%s2107 + $0x21] sm:$0xff] %vm2108, %v2077
    %2112 = vst.msk [vmem:[%s2107 + $0x31] sm:$0xff] %vm2108, %v2078
    %2113 = vst.msk [vmem:[%s2107 + $0x41] sm:$0xff] %vm2108, %v2079
    %2114 = vst.msk [vmem:[%s2107 + $0x51] sm:$0xff] %vm2108, %v2080
    %2115 = vst.msk [vmem:[%s2107 + $0x61] sm:$0xff] %vm2108, %v2081
    %2116 = vst.msk [vmem:[%s2107 + $0x71] sm:$0xff] %vm2108, %v2082
    %2117 = vst.msk [vmem:[%s2107 + $0xa1] sm:$0xff] %vm2108, %v2083
    %2118 = vst.msk [vmem:[%s2107 + $0xb1] sm:$0xff] %vm2108, %v2084
    %2119 = vst.msk [vmem:[%s2107 + $0xc1] sm:$0xff] %vm2108, %v2085
    %2120 = vst.msk [vmem:[%s2107 + $0xd1] sm:$0xff] %vm2108, %v2086
    %2121 = vst.msk [vmem:[%s2107 + $0xe1] sm:$0xff] %vm2108, %v2087
    %2122 = vst.msk [vmem:[%s2107 + $0xf1] sm:$0xff] %vm2108, %v2088
    %2123 = vst.msk [vmem:[%s2107 + $0x101] sm:$0xff] %vm2108, %v2089
    %2124 = vst.msk [vmem:[%s2107 + $0x111] sm:$0xff] %vm2108, %v2090
    %2125 = vst.msk [vmem:[%s2107 + $0x141] sm:$0xff] %vm2108, %v2091
    %2126 = vst.msk [vmem:[%s2107 + $0x151] sm:$0xff] %vm2108, %v2092
    %2127 = vst.msk [vmem:[%s2107 + $0x161] sm:$0xff] %vm2108, %v2093
    %2128 = vst.msk [vmem:[%s2107 + $0x171] sm:$0xff] %vm2108, %v2094
    %2129 = vst.msk [vmem:[%s2107 + $0x181] sm:$0xff] %vm2108, %v2095
    %2130 = vst.msk [vmem:[%s2107 + $0x191] sm:$0xff] %vm2108, %v2096
    %2131 = vst.msk [vmem:[%s2107 + $0x1a1] sm:$0xff] %vm2108, %v2097
    %2132 = vst.msk [vmem:[%s2107 + $0x1b1] sm:$0xff] %vm2108, %v2098
    %2133 = vst.msk [vmem:[%s2107 + $0x1e1] sm:$0xff] %vm2108, %v2099
    %2134 = vst.msk [vmem:[%s2107 + $0x1f1] sm:$0xff] %vm2108, %v2100
    %2135 = vst.msk [vmem:[%s2107 + $0x201] sm:$0xff] %vm2108, %v2101
    %2136 = vst.msk [vmem:[%s2107 + $0x211] sm:$0xff] %vm2108, %v2102
    %2137 = vst.msk [vmem:[%s2107 + $0x221] sm:$0xff] %vm2108, %v2103
    %2138 = vst.msk [vmem:[%s2107 + $0x231] sm:$0xff] %vm2108, %v2104
    %2139 = vst.msk [vmem:[%s2107 + $0x241] sm:$0xff] %vm2108, %v2105
    %2140 = vst.msk [vmem:[%s2107 + $0x251] sm:$0xff] %vm2108, %v2106
    %2173 = vrot.lane.b32.xlu0 %v376, 8
    %v2174 = vpop.permute.xlu0 %2173
    %2175 = vrot.lane.b32.xlu0 %v377, 8
    %v2176 = vpop.permute.xlu0 %2175
    %2177 = vrot.lane.b32.xlu0 %v378, 8
    %v2178 = vpop.permute.xlu0 %2177
    %2179 = vrot.lane.b32.xlu0 %v379, 8
    %v2180 = vpop.permute.xlu0 %2179
    %2181 = vrot.lane.b32.xlu0 %v380, 8
    %v2182 = vpop.permute.xlu0 %2181
    %2183 = vrot.lane.b32.xlu0 %v381, 8
    %v2184 = vpop.permute.xlu0 %2183
    %2185 = vrot.lane.b32.xlu0 %v382, 8
    %v2186 = vpop.permute.xlu0 %2185
    %2187 = vrot.lane.b32.xlu0 %v383, 8
    %v2188 = vpop.permute.xlu0 %2187
    %2189 = vrot.lane.b32.xlu0 %v384, 8
    %v2190 = vpop.permute.xlu0 %2189
    %2191 = vrot.lane.b32.xlu0 %v385, 8
    %v2192 = vpop.permute.xlu0 %2191
    %2193 = vrot.lane.b32.xlu0 %v386, 8
    %v2194 = vpop.permute.xlu0 %2193
    %2195 = vrot.lane.b32.xlu0 %v387, 8
    %v2196 = vpop.permute.xlu0 %2195
    %2197 = vrot.lane.b32.xlu0 %v388, 8
    %v2198 = vpop.permute.xlu0 %2197
    %2199 = vrot.lane.b32.xlu0 %v389, 8
    %v2200 = vpop.permute.xlu0 %2199
    %2201 = vrot.lane.b32.xlu0 %v390, 8
    %v2202 = vpop.permute.xlu0 %2201
    %2203 = vrot.lane.b32.xlu0 %v391, 8
    %v2204 = vpop.permute.xlu0 %2203
    %2205 = vrot.lane.b32.xlu0 %v392, 8
    %v2206 = vpop.permute.xlu0 %2205
    %2207 = vrot.lane.b32.xlu0 %v393, 8
    %v2208 = vpop.permute.xlu0 %2207
    %2209 = vrot.lane.b32.xlu0 %v394, 8
    %v2210 = vpop.permute.xlu0 %2209
    %2211 = vrot.lane.b32.xlu0 %v395, 8
    %v2212 = vpop.permute.xlu0 %2211
    %2213 = vrot.lane.b32.xlu0 %v396, 8
    %v2214 = vpop.permute.xlu0 %2213
    %2215 = vrot.lane.b32.xlu0 %v397, 8
    %v2216 = vpop.permute.xlu0 %2215
    %2217 = vrot.lane.b32.xlu0 %v398, 8
    %v2218 = vpop.permute.xlu0 %2217
    %2219 = vrot.lane.b32.xlu0 %v399, 8
    %v2220 = vpop.permute.xlu0 %2219
    %2221 = vrot.lane.b32.xlu0 %v400, 8
    %v2222 = vpop.permute.xlu0 %2221
    %2223 = vrot.lane.b32.xlu0 %v401, 8
    %v2224 = vpop.permute.xlu0 %2223
    %2225 = vrot.lane.b32.xlu0 %v402, 8
    %v2226 = vpop.permute.xlu0 %2225
    %2227 = vrot.lane.b32.xlu0 %v403, 8
    %v2228 = vpop.permute.xlu0 %2227
    %2229 = vrot.lane.b32.xlu0 %v404, 8
    %v2230 = vpop.permute.xlu0 %2229
    %2231 = vrot.lane.b32.xlu0 %v405, 8
    %v2232 = vpop.permute.xlu0 %2231
    %2233 = vrot.lane.b32.xlu0 %v406, 8
    %v2234 = vpop.permute.xlu0 %2233
    %2235 = vrot.lane.b32.xlu0 %v407, 8
    %v2236 = vpop.permute.xlu0 %2235
    %vm2269 = vcmask 130112
    %2270 = vst.msk [vmem:[%s2107 + $0x1] sm:$0xff] %vm2269, %v2174
    %2271 = vst.msk [vmem:[%s2107 + $0x11] sm:$0xff] %vm2269, %v2176
    %2272 = vst.msk [vmem:[%s2107 + $0x21] sm:$0xff] %vm2269, %v2178
    %2273 = vst.msk [vmem:[%s2107 + $0x31] sm:$0xff] %vm2269, %v2180
    %2274 = vst.msk [vmem:[%s2107 + $0x41] sm:$0xff] %vm2269, %v2182
    %2275 = vst.msk [vmem:[%s2107 + $0x51] sm:$0xff] %vm2269, %v2184
    %2276 = vst.msk [vmem:[%s2107 + $0x61] sm:$0xff] %vm2269, %v2186
    %2277 = vst.msk [vmem:[%s2107 + $0x71] sm:$0xff] %vm2269, %v2188
    %2278 = vst.msk [vmem:[%s2107 + $0xa1] sm:$0xff] %vm2269, %v2190
    %2279 = vst.msk [vmem:[%s2107 + $0xb1] sm:$0xff] %vm2269, %v2192
    %2280 = vst.msk [vmem:[%s2107 + $0xc1] sm:$0xff] %vm2269, %v2194
    %2281 = vst.msk [vmem:[%s2107 + $0xd1] sm:$0xff] %vm2269, %v2196
    %2282 = vst.msk [vmem:[%s2107 + $0xe1] sm:$0xff] %vm2269, %v2198
    %2283 = vst.msk [vmem:[%s2107 + $0xf1] sm:$0xff] %vm2269, %v2200
    %2284 = vst.msk [vmem:[%s2107 + $0x101] sm:$0xff] %vm2269, %v2202
    %2285 = vst.msk [vmem:[%s2107 + $0x111] sm:$0xff] %vm2269, %v2204
    %2286 = vst.msk [vmem:[%s2107 + $0x141] sm:$0xff] %vm2269, %v2206
    %2287 = vst.msk [vmem:[%s2107 + $0x151] sm:$0xff] %vm2269, %v2208
    %2288 = vst.msk [vmem:[%s2107 + $0x161] sm:$0xff] %vm2269, %v2210
    %2289 = vst.msk [vmem:[%s2107 + $0x171] sm:$0xff] %vm2269, %v2212
    %2290 = vst.msk [vmem:[%s2107 + $0x181] sm:$0xff] %vm2269, %v2214
    %2291 = vst.msk [vmem:[%s2107 + $0x191] sm:$0xff] %vm2269, %v2216
    %2292 = vst.msk [vmem:[%s2107 + $0x1a1] sm:$0xff] %vm2269, %v2218
    %2293 = vst.msk [vmem:[%s2107 + $0x1b1] sm:$0xff] %vm2269, %v2220
    %2294 = vst.msk [vmem:[%s2107 + $0x1e1] sm:$0xff] %vm2269, %v2222
    %2295 = vst.msk [vmem:[%s2107 + $0x1f1] sm:$0xff] %vm2269, %v2224
    %2296 = vst.msk [vmem:[%s2107 + $0x201] sm:$0xff] %vm2269, %v2226
    %2297 = vst.msk [vmem:[%s2107 + $0x211] sm:$0xff] %vm2269, %v2228
    %2298 = vst.msk [vmem:[%s2107 + $0x221] sm:$0xff] %vm2269, %v2230
    %2299 = vst.msk [vmem:[%s2107 + $0x231] sm:$0xff] %vm2269, %v2232
    %2300 = vst.msk [vmem:[%s2107 + $0x241] sm:$0xff] %vm2269, %v2234
    %2301 = vst.msk [vmem:[%s2107 + $0x251] sm:$0xff] %vm2269, %v2236
    %2334 = vrot.lane.b32.xlu0 %v1911, 16
    %v2335 = vpop.permute.xlu0 %2334
    %2336 = vrot.lane.b32.xlu0 %v1912, 16
    %v2337 = vpop.permute.xlu0 %2336
    %2338 = vrot.lane.b32.xlu0 %v1913, 16
    %v2339 = vpop.permute.xlu0 %2338
    %2340 = vrot.lane.b32.xlu0 %v1914, 16
    %v2341 = vpop.permute.xlu0 %2340
    %2342 = vrot.lane.b32.xlu0 %v1915, 16
    %v2343 = vpop.permute.xlu0 %2342
    %2344 = vrot.lane.b32.xlu0 %v1916, 16
    %v2345 = vpop.permute.xlu0 %2344
    %2346 = vrot.lane.b32.xlu0 %v1917, 16
    %v2347 = vpop.permute.xlu0 %2346
    %2348 = vrot.lane.b32.xlu0 %v1918, 16
    %v2349 = vpop.permute.xlu0 %2348
    %2350 = vrot.lane.b32.xlu0 %v1919, 16
    %v2351 = vpop.permute.xlu0 %2350
    %2352 = vrot.lane.b32.xlu0 %v1920, 16
    %v2353 = vpop.permute.xlu0 %2352
    %2354 = vrot.lane.b32.xlu0 %v1921, 16
    %v2355 = vpop.permute.xlu0 %2354
    %2356 = vrot.lane.b32.xlu0 %v1922, 16
    %v2357 = vpop.permute.xlu0 %2356
    %2358 = vrot.lane.b32.xlu0 %v1923, 16
    %v2359 = vpop.permute.xlu0 %2358
    %2360 = vrot.lane.b32.xlu0 %v1924, 16
    %v2361 = vpop.permute.xlu0 %2360
    %2362 = vrot.lane.b32.xlu0 %v1925, 16
    %v2363 = vpop.permute.xlu0 %2362
    %2364 = vrot.lane.b32.xlu0 %v1926, 16
    %v2365 = vpop.permute.xlu0 %2364
    %2366 = vrot.lane.b32.xlu0 %v1927, 16
    %v2367 = vpop.permute.xlu0 %2366
    %2368 = vrot.lane.b32.xlu0 %v1928, 16
    %v2369 = vpop.permute.xlu0 %2368
    %2370 = vrot.lane.b32.xlu0 %v1929, 16
    %v2371 = vpop.permute.xlu0 %2370
    %2372 = vrot.lane.b32.xlu0 %v1930, 16
    %v2373 = vpop.permute.xlu0 %2372
    %2374 = vrot.lane.b32.xlu0 %v1931, 16
    %v2375 = vpop.permute.xlu0 %2374
    %2376 = vrot.lane.b32.xlu0 %v1932, 16
    %v2377 = vpop.permute.xlu0 %2376
    %2378 = vrot.lane.b32.xlu0 %v1933, 16
    %v2379 = vpop.permute.xlu0 %2378
    %2380 = vrot.lane.b32.xlu0 %v1934, 16
    %v2381 = vpop.permute.xlu0 %2380
    %2382 = vrot.lane.b32.xlu0 %v1935, 16
    %v2383 = vpop.permute.xlu0 %2382
    %2384 = vrot.lane.b32.xlu0 %v1936, 16
    %v2385 = vpop.permute.xlu0 %2384
    %2386 = vrot.lane.b32.xlu0 %v1937, 16
    %v2387 = vpop.permute.xlu0 %2386
    %2388 = vrot.lane.b32.xlu0 %v1938, 16
    %v2389 = vpop.permute.xlu0 %2388
    %2390 = vrot.lane.b32.xlu0 %v1939, 16
    %v2391 = vpop.permute.xlu0 %2390
    %2392 = vrot.lane.b32.xlu0 %v1940, 16
    %v2393 = vpop.permute.xlu0 %2392
    %2394 = vrot.lane.b32.xlu0 %v1941, 16
    %v2395 = vpop.permute.xlu0 %2394
    %2396 = vrot.lane.b32.xlu0 %v1942, 16
    %v2397 = vpop.permute.xlu0 %2396
    %vm2430 = vcmask 195712
    %2431 = vst.msk [vmem:[%s2107 + $0x1] sm:$0xff] %vm2430, %v2335
    %2432 = vst.msk [vmem:[%s2107 + $0x11] sm:$0xff] %vm2430, %v2337
    %2433 = vst.msk [vmem:[%s2107 + $0x21] sm:$0xff] %vm2430, %v2339
    %2434 = vst.msk [vmem:[%s2107 + $0x31] sm:$0xff] %vm2430, %v2341
    %2435 = vst.msk [vmem:[%s2107 + $0x41] sm:$0xff] %vm2430, %v2343
    %2436 = vst.msk [vmem:[%s2107 + $0x51] sm:$0xff] %vm2430, %v2345
    %2437 = vst.msk [vmem:[%s2107 + $0x61] sm:$0xff] %vm2430, %v2347
    %2438 = vst.msk [vmem:[%s2107 + $0x71] sm:$0xff] %vm2430, %v2349
    %2439 = vst.msk [vmem:[%s2107 + $0xa1] sm:$0xff] %vm2430, %v2351
    %2440 = vst.msk [vmem:[%s2107 + $0xb1] sm:$0xff] %vm2430, %v2353
    %2441 = vst.msk [vmem:[%s2107 + $0xc1] sm:$0xff] %vm2430, %v2355
    %2442 = vst.msk [vmem:[%s2107 + $0xd1] sm:$0xff] %vm2430, %v2357
    %2443 = vst.msk [vmem:[%s2107 + $0xe1] sm:$0xff] %vm2430, %v2359
    %2444 = vst.msk [vmem:[%s2107 + $0xf1] sm:$0xff] %vm2430, %v2361
    %2445 = vst.msk [vmem:[%s2107 + $0x101] sm:$0xff] %vm2430, %v2363
    %2446 = vst.msk [vmem:[%s2107 + $0x111] sm:$0xff] %vm2430, %v2365
    %2447 = vst.msk [vmem:[%s2107 + $0x141] sm:$0xff] %vm2430, %v2367
    %2448 = vst.msk [vmem:[%s2107 + $0x151] sm:$0xff] %vm2430, %v2369
    %2449 = vst.msk [vmem:[%s2107 + $0x161] sm:$0xff] %vm2430, %v2371
    %2450 = vst.msk [vmem:[%s2107 + $0x171] sm:$0xff] %vm2430, %v2373
    %2451 = vst.msk [vmem:[%s2107 + $0x181] sm:$0xff] %vm2430, %v2375
    %2452 = vst.msk [vmem:[%s2107 + $0x191] sm:$0xff] %vm2430, %v2377
    %2453 = vst.msk [vmem:[%s2107 + $0x1a1] sm:$0xff] %vm2430, %v2379
    %2454 = vst.msk [vmem:[%s2107 + $0x1b1] sm:$0xff] %vm2430, %v2381
    %2455 = vst.msk [vmem:[%s2107 + $0x1e1] sm:$0xff] %vm2430, %v2383
    %2456 = vst.msk [vmem:[%s2107 + $0x1f1] sm:$0xff] %vm2430, %v2385
    %2457 = vst.msk [vmem:[%s2107 + $0x201] sm:$0xff] %vm2430, %v2387
    %2458 = vst.msk [vmem:[%s2107 + $0x211] sm:$0xff] %vm2430, %v2389
    %2459 = vst.msk [vmem:[%s2107 + $0x221] sm:$0xff] %vm2430, %v2391
    %2460 = vst.msk [vmem:[%s2107 + $0x231] sm:$0xff] %vm2430, %v2393
    %2461 = vst.msk [vmem:[%s2107 + $0x241] sm:$0xff] %vm2430, %v2395
    %2462 = vst.msk [vmem:[%s2107 + $0x251] sm:$0xff] %vm2430, %v2397
    %2495 = vrot.lane.b32.xlu0 %v2043, 24
    %v2496 = vpop.permute.xlu0 %2495
    %2497 = vrot.lane.b32.xlu0 %v2044, 24
    %v2498 = vpop.permute.xlu0 %2497
    %2499 = vrot.lane.b32.xlu0 %v2045, 24
    %v2500 = vpop.permute.xlu0 %2499
    %2501 = vrot.lane.b32.xlu0 %v2046, 24
    %v2502 = vpop.permute.xlu0 %2501
    %2503 = vrot.lane.b32.xlu0 %v2047, 24
    %v2504 = vpop.permute.xlu0 %2503
    %2505 = vrot.lane.b32.xlu0 %v2048, 24
    %v2506 = vpop.permute.xlu0 %2505
    %2507 = vrot.lane.b32.xlu0 %v2049, 24
    %v2508 = vpop.permute.xlu0 %2507
    %2509 = vrot.lane.b32.xlu0 %v2050, 24
    %v2510 = vpop.permute.xlu0 %2509
    %2511 = vrot.lane.b32.xlu0 %v2051, 24
    %v2512 = vpop.permute.xlu0 %2511
    %2513 = vrot.lane.b32.xlu0 %v2052, 24
    %v2514 = vpop.permute.xlu0 %2513
    %2515 = vrot.lane.b32.xlu0 %v2053, 24
    %v2516 = vpop.permute.xlu0 %2515
    %2517 = vrot.lane.b32.xlu0 %v2054, 24
    %v2518 = vpop.permute.xlu0 %2517
    %2519 = vrot.lane.b32.xlu0 %v2055, 24
    %v2520 = vpop.permute.xlu0 %2519
    %2521 = vrot.lane.b32.xlu0 %v2056, 24
    %v2522 = vpop.permute.xlu0 %2521
    %2523 = vrot.lane.b32.xlu0 %v2057, 24
    %v2524 = vpop.permute.xlu0 %2523
    %2525 = vrot.lane.b32.xlu0 %v2058, 24
    %v2526 = vpop.permute.xlu0 %2525
    %2527 = vrot.lane.b32.xlu0 %v2059, 24
    %v2528 = vpop.permute.xlu0 %2527
    %2529 = vrot.lane.b32.xlu0 %v2060, 24
    %v2530 = vpop.permute.xlu0 %2529
    %2531 = vrot.lane.b32.xlu0 %v2061, 24
    %v2532 = vpop.permute.xlu0 %2531
    %2533 = vrot.lane.b32.xlu0 %v2062, 24
    %v2534 = vpop.permute.xlu0 %2533
    %2535 = vrot.lane.b32.xlu0 %v2063, 24
    %v2536 = vpop.permute.xlu0 %2535
    %2537 = vrot.lane.b32.xlu0 %v2064, 24
    %v2538 = vpop.permute.xlu0 %2537
    %2539 = vrot.lane.b32.xlu0 %v2065, 24
    %v2540 = vpop.permute.xlu0 %2539
    %2541 = vrot.lane.b32.xlu0 %v2066, 24
    %v2542 = vpop.permute.xlu0 %2541
    %2543 = vrot.lane.b32.xlu0 %v2067, 24
    %v2544 = vpop.permute.xlu0 %2543
    %2545 = vrot.lane.b32.xlu0 %v2068, 24
    %v2546 = vpop.permute.xlu0 %2545
    %2547 = vrot.lane.b32.xlu0 %v2069, 24
    %v2548 = vpop.permute.xlu0 %2547
    %2549 = vrot.lane.b32.xlu0 %v2070, 24
    %v2550 = vpop.permute.xlu0 %2549
    %2551 = vrot.lane.b32.xlu0 %v2071, 24
    %v2552 = vpop.permute.xlu0 %2551
    %2553 = vrot.lane.b32.xlu0 %v2072, 24
    %v2554 = vpop.permute.xlu0 %2553
    %2555 = vrot.lane.b32.xlu0 %v2073, 24
    %v2556 = vpop.permute.xlu0 %2555
    %2557 = vrot.lane.b32.xlu0 %v2074, 24
    %v2558 = vpop.permute.xlu0 %2557
    %vm2591 = vcmask 261312
    %2592 = vst.msk [vmem:[%s2107 + $0x1] sm:$0xff] %vm2591, %v2496
    %2593 = vst.msk [vmem:[%s2107 + $0x11] sm:$0xff] %vm2591, %v2498
    %2594 = vst.msk [vmem:[%s2107 + $0x21] sm:$0xff] %vm2591, %v2500
    %2595 = vst.msk [vmem:[%s2107 + $0x31] sm:$0xff] %vm2591, %v2502
    %2596 = vst.msk [vmem:[%s2107 + $0x41] sm:$0xff] %vm2591, %v2504
    %2597 = vst.msk [vmem:[%s2107 + $0x51] sm:$0xff] %vm2591, %v2506
    %2598 = vst.msk [vmem:[%s2107 + $0x61] sm:$0xff] %vm2591, %v2508
    %2599 = vst.msk [vmem:[%s2107 + $0x71] sm:$0xff] %vm2591, %v2510
    %2600 = vst.msk [vmem:[%s2107 + $0xa1] sm:$0xff] %vm2591, %v2512
    %2601 = vst.msk [vmem:[%s2107 + $0xb1] sm:$0xff] %vm2591, %v2514
    %2602 = vst.msk [vmem:[%s2107 + $0xc1] sm:$0xff] %vm2591, %v2516
    %2603 = vst.msk [vmem:[%s2107 + $0xd1] sm:$0xff] %vm2591, %v2518
    %2604 = vst.msk [vmem:[%s2107 + $0xe1] sm:$0xff] %vm2591, %v2520
    %2605 = vst.msk [vmem:[%s2107 + $0xf1] sm:$0xff] %vm2591, %v2522
    %2606 = vst.msk [vmem:[%s2107 + $0x101] sm:$0xff] %vm2591, %v2524
    %2607 = vst.msk [vmem:[%s2107 + $0x111] sm:$0xff] %vm2591, %v2526
    %2608 = vst.msk [vmem:[%s2107 + $0x141] sm:$0xff] %vm2591, %v2528
    %2609 = vst.msk [vmem:[%s2107 + $0x151] sm:$0xff] %vm2591, %v2530
    %2610 = vst.msk [vmem:[%s2107 + $0x161] sm:$0xff] %vm2591, %v2532
    %2611 = vst.msk [vmem:[%s2107 + $0x171] sm:$0xff] %vm2591, %v2534
    %2612 = vst.msk [vmem:[%s2107 + $0x181] sm:$0xff] %vm2591, %v2536
    %2613 = vst.msk [vmem:[%s2107 + $0x191] sm:$0xff] %vm2591, %v2538
    %2614 = vst.msk [vmem:[%s2107 + $0x1a1] sm:$0xff] %vm2591, %v2540
    %2615 = vst.msk [vmem:[%s2107 + $0x1b1] sm:$0xff] %vm2591, %v2542
    %2616 = vst.msk [vmem:[%s2107 + $0x1e1] sm:$0xff] %vm2591, %v2544
    %2617 = vst.msk [vmem:[%s2107 + $0x1f1] sm:$0xff] %vm2591, %v2546
    %2618 = vst.msk [vmem:[%s2107 + $0x201] sm:$0xff] %vm2591, %v2548
    %2619 = vst.msk [vmem:[%s2107 + $0x211] sm:$0xff] %vm2591, %v2550
    %2620 = vst.msk [vmem:[%s2107 + $0x221] sm:$0xff] %vm2591, %v2552
    %2621 = vst.msk [vmem:[%s2107 + $0x231] sm:$0xff] %vm2591, %v2554
    %2622 = vst.msk [vmem:[%s2107 + $0x241] sm:$0xff] %vm2591, %v2556
    %2623 = vst.msk [vmem:[%s2107 + $0x251] sm:$0xff] %vm2591, %v2558
    %v2624 = vld [vmem:[#allocation2] sm:$0xff]
    %v2625 = vld [vmem:[#allocation2 + $0x10] sm:$0xff]
    %v2626 = vld [vmem:[#allocation2 + $0x20] sm:$0xff]
    %v2627 = vld [vmem:[#allocation2 + $0x30] sm:$0xff]
    %v2628 = vld [vmem:[#allocation2 + $0x40] sm:$0xff]
    %v2629 = vld [vmem:[#allocation2 + $0x50] sm:$0xff]
    %v2630 = vld [vmem:[#allocation2 + $0x60] sm:$0xff]
    %v2631 = vld [vmem:[#allocation2 + $0x70] sm:$0xff]
    %v2632 = vld [vmem:[#allocation2 + $0xa0] sm:$0xff]
    %v2633 = vld [vmem:[#allocation2 + $0xb0] sm:$0xff]
    %v2634 = vld [vmem:[#allocation2 + $0xc0] sm:$0xff]
    %v2635 = vld [vmem:[#allocation2 + $0xd0] sm:$0xff]
    %v2636 = vld [vmem:[#allocation2 + $0xe0] sm:$0xff]
    %v2637 = vld [vmem:[#allocation2 + $0xf0] sm:$0xff]
    %v2638 = vld [vmem:[#allocation2 + $0x100] sm:$0xff]
    %v2639 = vld [vmem:[#allocation2 + $0x110] sm:$0xff]
    %v2640 = vld [vmem:[#allocation2 + $0x140] sm:$0xff]
    %v2641 = vld [vmem:[#allocation2 + $0x150] sm:$0xff]
    %v2642 = vld [vmem:[#allocation2 + $0x160] sm:$0xff]
    %v2643 = vld [vmem:[#allocation2 + $0x170] sm:$0xff]
    %v2644 = vld [vmem:[#allocation2 + $0x180] sm:$0xff]
    %v2645 = vld [vmem:[#allocation2 + $0x190] sm:$0xff]
    %v2646 = vld [vmem:[#allocation2 + $0x1a0] sm:$0xff]
    %v2647 = vld [vmem:[#allocation2 + $0x1b0] sm:$0xff]
    %v2648 = vld [vmem:[#allocation2 + $0x1e0] sm:$0xff]
    %v2649 = vld [vmem:[#allocation2 + $0x1f0] sm:$0xff]
    %v2650 = vld [vmem:[#allocation2 + $0x200] sm:$0xff]
    %v2651 = vld [vmem:[#allocation2 + $0x210] sm:$0xff]
    %v2652 = vld [vmem:[#allocation2 + $0x220] sm:$0xff]
    %v2653 = vld [vmem:[#allocation2 + $0x230] sm:$0xff]
    %v2654 = vld [vmem:[#allocation2 + $0x240] sm:$0xff]
    %v2655 = vld [vmem:[#allocation2 + $0x250] sm:$0xff]
    %v2656 = vld [vmem:[#allocation2 + $0x1] sm:$0xff]
    %v2657 = vld [vmem:[#allocation2 + $0x11] sm:$0xff]
    %v2658 = vld [vmem:[#allocation2 + $0x21] sm:$0xff]
    %v2659 = vld [vmem:[#allocation2 + $0x31] sm:$0xff]
    %v2660 = vld [vmem:[#allocation2 + $0x41] sm:$0xff]
    %v2661 = vld [vmem:[#allocation2 + $0x51] sm:$0xff]
    %v2662 = vld [vmem:[#allocation2 + $0x61] sm:$0xff]
    %v2663 = vld [vmem:[#allocation2 + $0x71] sm:$0xff]
    %v2664 = vld [vmem:[#allocation2 + $0xa1] sm:$0xff]
    %v2665 = vld [vmem:[#allocation2 + $0xb1] sm:$0xff]
    %v2666 = vld [vmem:[#allocation2 + $0xc1] sm:$0xff]
    %v2667 = vld [vmem:[#allocation2 + $0xd1] sm:$0xff]
    %v2668 = vld [vmem:[#allocation2 + $0xe1] sm:$0xff]
    %v2669 = vld [vmem:[#allocation2 + $0xf1] sm:$0xff]
    %v2670 = vld [vmem:[#allocation2 + $0x101] sm:$0xff]
    %v2671 = vld [vmem:[#allocation2 + $0x111] sm:$0xff]
    %v2672 = vld [vmem:[#allocation2 + $0x141] sm:$0xff]
    %v2673 = vld [vmem:[#allocation2 + $0x151] sm:$0xff]
    %v2674 = vld [vmem:[#allocation2 + $0x161] sm:$0xff]
    %v2675 = vld [vmem:[#allocation2 + $0x171] sm:$0xff]
    %v2676 = vld [vmem:[#allocation2 + $0x181] sm:$0xff]
    %v2677 = vld [vmem:[#allocation2 + $0x191] sm:$0xff]
    %v2678 = vld [vmem:[#allocation2 + $0x1a1] sm:$0xff]
    %v2679 = vld [vmem:[#allocation2 + $0x1b1] sm:$0xff]
    %v2680 = vld [vmem:[#allocation2 + $0x1e1] sm:$0xff]
    %v2681 = vld [vmem:[#allocation2 + $0x1f1] sm:$0xff]
    %v2682 = vld [vmem:[#allocation2 + $0x201] sm:$0xff]
    %v2683 = vld [vmem:[#allocation2 + $0x211] sm:$0xff]
    %v2684 = vld [vmem:[#allocation2 + $0x221] sm:$0xff]
    %v2685 = vld [vmem:[#allocation2 + $0x231] sm:$0xff]
    %v2686 = vld [vmem:[#allocation2 + $0x241] sm:$0xff]
    %v2687 = vld [vmem:[#allocation2 + $0x251] sm:$0xff]
    %v2688 = vld [vmem:[#allocation2 + $0x2] sm:$0xff]
    %v2689 = vld [vmem:[#allocation2 + $0x12] sm:$0xff]
    %v2690 = vld [vmem:[#allocation2 + $0x22] sm:$0xff]
    %v2691 = vld [vmem:[#allocation2 + $0x32] sm:$0xff]
    %v2692 = vld [vmem:[#allocation2 + $0x42] sm:$0xff]
    %v2693 = vld [vmem:[#allocation2 + $0x52] sm:$0xff]
    %v2694 = vld [vmem:[#allocation2 + $0x62] sm:$0xff]
    %v2695 = vld [vmem:[#allocation2 + $0x72] sm:$0xff]
    %v2696 = vld [vmem:[#allocation2 + $0xa2] sm:$0xff]
    %v2697 = vld [vmem:[#allocation2 + $0xb2] sm:$0xff]
    %v2698 = vld [vmem:[#allocation2 + $0xc2] sm:$0xff]
    %v2699 = vld [vmem:[#allocation2 + $0xd2] sm:$0xff]
    %v2700 = vld [vmem:[#allocation2 + $0xe2] sm:$0xff]
    %v2701 = vld [vmem:[#allocation2 + $0xf2] sm:$0xff]
    %v2702 = vld [vmem:[#allocation2 + $0x102] sm:$0xff]
    %v2703 = vld [vmem:[#allocation2 + $0x112] sm:$0xff]
    %v2704 = vld [vmem:[#allocation2 + $0x142] sm:$0xff]
    %v2705 = vld [vmem:[#allocation2 + $0x152] sm:$0xff]
    %v2706 = vld [vmem:[#allocation2 + $0x162] sm:$0xff]
    %v2707 = vld [vmem:[#allocation2 + $0x172] sm:$0xff]
    %v2708 = vld [vmem:[#allocation2 + $0x182] sm:$0xff]
    %v2709 = vld [vmem:[#allocation2 + $0x192] sm:$0xff]
    %v2710 = vld [vmem:[#allocation2 + $0x1a2] sm:$0xff]
    %v2711 = vld [vmem:[#allocation2 + $0x1b2] sm:$0xff]
    %v2712 = vld [vmem:[#allocation2 + $0x1e2] sm:$0xff]
    %v2713 = vld [vmem:[#allocation2 + $0x1f2] sm:$0xff]
    %v2714 = vld [vmem:[#allocation2 + $0x202] sm:$0xff]
    %v2715 = vld [vmem:[#allocation2 + $0x212] sm:$0xff]
    %v2716 = vld [vmem:[#allocation2 + $0x222] sm:$0xff]
    %v2717 = vld [vmem:[#allocation2 + $0x232] sm:$0xff]
    %v2718 = vld [vmem:[#allocation2 + $0x242] sm:$0xff]
    %v2719 = vld [vmem:[#allocation2 + $0x252] sm:$0xff]
    %v2720 = vld [vmem:[%s2107] sm:$0xff]
    %v2721 = vld [vmem:[%s2107 + $0x10] sm:$0xff]
    %v2722 = vld [vmem:[%s2107 + $0x20] sm:$0xff]
    %v2723 = vld [vmem:[%s2107 + $0x30] sm:$0xff]
    %v2724 = vld [vmem:[%s2107 + $0x40] sm:$0xff]
    %v2725 = vld [vmem:[%s2107 + $0x50] sm:$0xff]
    %v2726 = vld [vmem:[%s2107 + $0x60] sm:$0xff]
    %v2727 = vld [vmem:[%s2107 + $0x70] sm:$0xff]
    %v2728 = vld [vmem:[%s2107 + $0xa0] sm:$0xff]
    %v2729 = vld [vmem:[%s2107 + $0xb0] sm:$0xff]
    %v2730 = vld [vmem:[%s2107 + $0xc0] sm:$0xff]
    %v2731 = vld [vmem:[%s2107 + $0xd0] sm:$0xff]
    %v2732 = vld [vmem:[%s2107 + $0xe0] sm:$0xff]
    %v2733 = vld [vmem:[%s2107 + $0xf0] sm:$0xff]
    %v2734 = vld [vmem:[%s2107 + $0x100] sm:$0xff]
    %v2735 = vld [vmem:[%s2107 + $0x110] sm:$0xff]
    %v2736 = vld [vmem:[%s2107 + $0x140] sm:$0xff]
    %v2737 = vld [vmem:[%s2107 + $0x150] sm:$0xff]
    %v2738 = vld [vmem:[%s2107 + $0x160] sm:$0xff]
    %v2739 = vld [vmem:[%s2107 + $0x170] sm:$0xff]
    %v2740 = vld [vmem:[%s2107 + $0x180] sm:$0xff]
    %v2741 = vld [vmem:[%s2107 + $0x190] sm:$0xff]
    %v2742 = vld [vmem:[%s2107 + $0x1a0] sm:$0xff]
    %v2743 = vld [vmem:[%s2107 + $0x1b0] sm:$0xff]
    %v2744 = vld [vmem:[%s2107 + $0x1e0] sm:$0xff]
    %v2745 = vld [vmem:[%s2107 + $0x1f0] sm:$0xff]
    %v2746 = vld [vmem:[%s2107 + $0x200] sm:$0xff]
    %v2747 = vld [vmem:[%s2107 + $0x210] sm:$0xff]
    %v2748 = vld [vmem:[%s2107 + $0x220] sm:$0xff]
    %v2749 = vld [vmem:[%s2107 + $0x230] sm:$0xff]
    %v2750 = vld [vmem:[%s2107 + $0x240] sm:$0xff]
    %v2751 = vld [vmem:[%s2107 + $0x250] sm:$0xff]
    %v2752 = vld [vmem:[%s2107 + $0x1] sm:$0xff]
    %v2753 = vld [vmem:[%s2107 + $0x11] sm:$0xff]
    %v2754 = vld [vmem:[%s2107 + $0x21] sm:$0xff]
    %v2755 = vld [vmem:[%s2107 + $0x31] sm:$0xff]
    %v2756 = vld [vmem:[%s2107 + $0x41] sm:$0xff]
    %v2757 = vld [vmem:[%s2107 + $0x51] sm:$0xff]
    %v2758 = vld [vmem:[%s2107 + $0x61] sm:$0xff]
    %v2759 = vld [vmem:[%s2107 + $0x71] sm:$0xff]
    %v2760 = vld [vmem:[%s2107 + $0xa1] sm:$0xff]
    %v2761 = vld [vmem:[%s2107 + $0xb1] sm:$0xff]
    %v2762 = vld [vmem:[%s2107 + $0xc1] sm:$0xff]
    %v2763 = vld [vmem:[%s2107 + $0xd1] sm:$0xff]
    %v2764 = vld [vmem:[%s2107 + $0xe1] sm:$0xff]
    %v2765 = vld [vmem:[%s2107 + $0xf1] sm:$0xff]
    %v2766 = vld [vmem:[%s2107 + $0x101] sm:$0xff]
    %v2767 = vld [vmem:[%s2107 + $0x111] sm:$0xff]
    %v2768 = vld [vmem:[%s2107 + $0x141] sm:$0xff]
    %v2769 = vld [vmem:[%s2107 + $0x151] sm:$0xff]
    %v2770 = vld [vmem:[%s2107 + $0x161] sm:$0xff]
    %v2771 = vld [vmem:[%s2107 + $0x171] sm:$0xff]
    %v2772 = vld [vmem:[%s2107 + $0x181] sm:$0xff]
    %v2773 = vld [vmem:[%s2107 + $0x191] sm:$0xff]
    %v2774 = vld [vmem:[%s2107 + $0x1a1] sm:$0xff]
    %v2775 = vld [vmem:[%s2107 + $0x1b1] sm:$0xff]
    %v2776 = vld [vmem:[%s2107 + $0x1e1] sm:$0xff]
    %v2777 = vld [vmem:[%s2107 + $0x1f1] sm:$0xff]
    %v2778 = vld [vmem:[%s2107 + $0x201] sm:$0xff]
    %v2779 = vld [vmem:[%s2107 + $0x211] sm:$0xff]
    %v2780 = vld [vmem:[%s2107 + $0x221] sm:$0xff]
    %v2781 = vld [vmem:[%s2107 + $0x231] sm:$0xff]
    %v2782 = vld [vmem:[%s2107 + $0x241] sm:$0xff]
    %v2783 = vld [vmem:[%s2107 + $0x251] sm:$0xff]
    %v2784 = vld [vmem:[%s2107 + $0x2] sm:$0xff]
    %v2785 = vld [vmem:[%s2107 + $0x12] sm:$0xff]
    %v2786 = vld [vmem:[%s2107 + $0x22] sm:$0xff]
    %v2787 = vld [vmem:[%s2107 + $0x32] sm:$0xff]
    %v2788 = vld [vmem:[%s2107 + $0x42] sm:$0xff]
    %v2789 = vld [vmem:[%s2107 + $0x52] sm:$0xff]
    %v2790 = vld [vmem:[%s2107 + $0x62] sm:$0xff]
    %v2791 = vld [vmem:[%s2107 + $0x72] sm:$0xff]
    %v2792 = vld [vmem:[%s2107 + $0xa2] sm:$0xff]
    %v2793 = vld [vmem:[%s2107 + $0xb2] sm:$0xff]
    %v2794 = vld [vmem:[%s2107 + $0xc2] sm:$0xff]
    %v2795 = vld [vmem:[%s2107 + $0xd2] sm:$0xff]
    %v2796 = vld [vmem:[%s2107 + $0xe2] sm:$0xff]
    %v2797 = vld [vmem:[%s2107 + $0xf2] sm:$0xff]
    %v2798 = vld [vmem:[%s2107 + $0x102] sm:$0xff]
    %v2799 = vld [vmem:[%s2107 + $0x112] sm:$0xff]
    %v2800 = vld [vmem:[%s2107 + $0x142] sm:$0xff]
    %v2801 = vld [vmem:[%s2107 + $0x152] sm:$0xff]
    %v2802 = vld [vmem:[%s2107 + $0x162] sm:$0xff]
    %v2803 = vld [vmem:[%s2107 + $0x172] sm:$0xff]
    %v2804 = vld [vmem:[%s2107 + $0x182] sm:$0xff]
    %v2805 = vld [vmem:[%s2107 + $0x192] sm:$0xff]
    %v2806 = vld [vmem:[%s2107 + $0x1a2] sm:$0xff]
    %v2807 = vld [vmem:[%s2107 + $0x1b2] sm:$0xff]
    %v2808 = vld [vmem:[%s2107 + $0x1e2] sm:$0xff]
    %v2809 = vld [vmem:[%s2107 + $0x1f2] sm:$0xff]
    %v2810 = vld [vmem:[%s2107 + $0x202] sm:$0xff]
    %v2811 = vld [vmem:[%s2107 + $0x212] sm:$0xff]
    %v2812 = vld [vmem:[%s2107 + $0x222] sm:$0xff]
    %v2813 = vld [vmem:[%s2107 + $0x232] sm:$0xff]
    %v2814 = vld [vmem:[%s2107 + $0x242] sm:$0xff]
    %v2815 = vld [vmem:[%s2107 + $0x252] sm:$0xff]
    %s2816 = scalar_lea.vmem [#allocation2], 32
    %v2817 = vld [vmem:[%s2816] sm:$0xff]
    %v2818 = vld [vmem:[%s2816 + $0x10] sm:$0xff]
    %v2819 = vld [vmem:[%s2816 + $0x20] sm:$0xff]
    %v2820 = vld [vmem:[%s2816 + $0x30] sm:$0xff]
    %v2821 = vld [vmem:[%s2816 + $0x40] sm:$0xff]
    %v2822 = vld [vmem:[%s2816 + $0x50] sm:$0xff]
    %v2823 = vld [vmem:[%s2816 + $0x60] sm:$0xff]
    %v2824 = vld [vmem:[%s2816 + $0x70] sm:$0xff]
    %v2825 = vld [vmem:[%s2816 + $0xa0] sm:$0xff]
    %v2826 = vld [vmem:[%s2816 + $0xb0] sm:$0xff]
    %v2827 = vld [vmem:[%s2816 + $0xc0] sm:$0xff]
    %v2828 = vld [vmem:[%s2816 + $0xd0] sm:$0xff]
    %v2829 = vld [vmem:[%s2816 + $0xe0] sm:$0xff]
    %v2830 = vld [vmem:[%s2816 + $0xf0] sm:$0xff]
    %v2831 = vld [vmem:[%s2816 + $0x100] sm:$0xff]
    %v2832 = vld [vmem:[%s2816 + $0x110] sm:$0xff]
    %v2833 = vld [vmem:[%s2816 + $0x140] sm:$0xff]
    %v2834 = vld [vmem:[%s2816 + $0x150] sm:$0xff]
    %v2835 = vld [vmem:[%s2816 + $0x160] sm:$0xff]
    %v2836 = vld [vmem:[%s2816 + $0x170] sm:$0xff]
    %v2837 = vld [vmem:[%s2816 + $0x180] sm:$0xff]
    %v2838 = vld [vmem:[%s2816 + $0x190] sm:$0xff]
    %v2839 = vld [vmem:[%s2816 + $0x1a0] sm:$0xff]
    %v2840 = vld [vmem:[%s2816 + $0x1b0] sm:$0xff]
    %v2841 = vld [vmem:[%s2816 + $0x1e0] sm:$0xff]
    %v2842 = vld [vmem:[%s2816 + $0x1f0] sm:$0xff]
    %v2843 = vld [vmem:[%s2816 + $0x200] sm:$0xff]
    %v2844 = vld [vmem:[%s2816 + $0x210] sm:$0xff]
    %v2845 = vld [vmem:[%s2816 + $0x220] sm:$0xff]
    %v2846 = vld [vmem:[%s2816 + $0x230] sm:$0xff]
    %v2847 = vld [vmem:[%s2816 + $0x240] sm:$0xff]
    %v2848 = vld [vmem:[%s2816 + $0x250] sm:$0xff]
    %v2849 = vld [vmem:[%s2816 + $0x1] sm:$0xff]
    %v2850 = vld [vmem:[%s2816 + $0x11] sm:$0xff]
    %v2851 = vld [vmem:[%s2816 + $0x21] sm:$0xff]
    %v2852 = vld [vmem:[%s2816 + $0x31] sm:$0xff]
    %v2853 = vld [vmem:[%s2816 + $0x41] sm:$0xff]
    %v2854 = vld [vmem:[%s2816 + $0x51] sm:$0xff]
    %v2855 = vld [vmem:[%s2816 + $0x61] sm:$0xff]
    %v2856 = vld [vmem:[%s2816 + $0x71] sm:$0xff]
    %v2857 = vld [vmem:[%s2816 + $0xa1] sm:$0xff]
    %v2858 = vld [vmem:[%s2816 + $0xb1] sm:$0xff]
    %v2859 = vld [vmem:[%s2816 + $0xc1] sm:$0xff]
    %v2860 = vld [vmem:[%s2816 + $0xd1] sm:$0xff]
    %v2861 = vld [vmem:[%s2816 + $0xe1] sm:$0xff]
    %v2862 = vld [vmem:[%s2816 + $0xf1] sm:$0xff]
    %v2863 = vld [vmem:[%s2816 + $0x101] sm:$0xff]
    %v2864 = vld [vmem:[%s2816 + $0x111] sm:$0xff]
    %v2865 = vld [vmem:[%s2816 + $0x141] sm:$0xff]
    %v2866 = vld [vmem:[%s2816 + $0x151] sm:$0xff]
    %v2867 = vld [vmem:[%s2816 + $0x161] sm:$0xff]
    %v2868 = vld [vmem:[%s2816 + $0x171] sm:$0xff]
    %v2869 = vld [vmem:[%s2816 + $0x181] sm:$0xff]
    %v2870 = vld [vmem:[%s2816 + $0x191] sm:$0xff]
    %v2871 = vld [vmem:[%s2816 + $0x1a1] sm:$0xff]
    %v2872 = vld [vmem:[%s2816 + $0x1b1] sm:$0xff]
    %v2873 = vld [vmem:[%s2816 + $0x1e1] sm:$0xff]
    %v2874 = vld [vmem:[%s2816 + $0x1f1] sm:$0xff]
    %v2875 = vld [vmem:[%s2816 + $0x201] sm:$0xff]
    %v2876 = vld [vmem:[%s2816 + $0x211] sm:$0xff]
    %v2877 = vld [vmem:[%s2816 + $0x221] sm:$0xff]
    %v2878 = vld [vmem:[%s2816 + $0x231] sm:$0xff]
    %v2879 = vld [vmem:[%s2816 + $0x241] sm:$0xff]
    %v2880 = vld [vmem:[%s2816 + $0x251] sm:$0xff]
    %v2881 = vld [vmem:[%s2816 + $0x2] sm:$0xff]
    %v2882 = vld [vmem:[%s2816 + $0x12] sm:$0xff]
    %v2883 = vld [vmem:[%s2816 + $0x22] sm:$0xff]
    %v2884 = vld [vmem:[%s2816 + $0x32] sm:$0xff]
    %v2885 = vld [vmem:[%s2816 + $0x42] sm:$0xff]
    %v2886 = vld [vmem:[%s2816 + $0x52] sm:$0xff]
    %v2887 = vld [vmem:[%s2816 + $0x62] sm:$0xff]
    %v2888 = vld [vmem:[%s2816 + $0x72] sm:$0xff]
    %v2889 = vld [vmem:[%s2816 + $0xa2] sm:$0xff]
    %v2890 = vld [vmem:[%s2816 + $0xb2] sm:$0xff]
    %v2891 = vld [vmem:[%s2816 + $0xc2] sm:$0xff]
    %v2892 = vld [vmem:[%s2816 + $0xd2] sm:$0xff]
    %v2893 = vld [vmem:[%s2816 + $0xe2] sm:$0xff]
    %v2894 = vld [vmem:[%s2816 + $0xf2] sm:$0xff]
    %v2895 = vld [vmem:[%s2816 + $0x102] sm:$0xff]
    %v2896 = vld [vmem:[%s2816 + $0x112] sm:$0xff]
    %v2897 = vld [vmem:[%s2816 + $0x142] sm:$0xff]
    %v2898 = vld [vmem:[%s2816 + $0x152] sm:$0xff]
    %v2899 = vld [vmem:[%s2816 + $0x162] sm:$0xff]
    %v2900 = vld [vmem:[%s2816 + $0x172] sm:$0xff]
    %v2901 = vld [vmem:[%s2816 + $0x182] sm:$0xff]
    %v2902 = vld [vmem:[%s2816 + $0x192] sm:$0xff]
    %v2903 = vld [vmem:[%s2816 + $0x1a2] sm:$0xff]
    %v2904 = vld [vmem:[%s2816 + $0x1b2] sm:$0xff]
    %v2905 = vld [vmem:[%s2816 + $0x1e2] sm:$0xff]
    %v2906 = vld [vmem:[%s2816 + $0x1f2] sm:$0xff]
    %v2907 = vld [vmem:[%s2816 + $0x202] sm:$0xff]
    %v2908 = vld [vmem:[%s2816 + $0x212] sm:$0xff]
    %v2909 = vld [vmem:[%s2816 + $0x222] sm:$0xff]
    %v2910 = vld [vmem:[%s2816 + $0x232] sm:$0xff]
    %v2911 = vld [vmem:[%s2816 + $0x242] sm:$0xff]
    %v2912 = vld [vmem:[%s2816 + $0x252] sm:$0xff]
    %2945 = vrot.lane.b32.xlu0 %v2656, 32
    %v2946 = vpop.permute.xlu0 %2945
    %2947 = vrot.lane.b32.xlu0 %v2657, 32
    %v2948 = vpop.permute.xlu0 %2947
    %2949 = vrot.lane.b32.xlu0 %v2658, 32
    %v2950 = vpop.permute.xlu0 %2949
    %2951 = vrot.lane.b32.xlu0 %v2659, 32
    %v2952 = vpop.permute.xlu0 %2951
    %2953 = vrot.lane.b32.xlu0 %v2660, 32
    %v2954 = vpop.permute.xlu0 %2953
    %2955 = vrot.lane.b32.xlu0 %v2661, 32
    %v2956 = vpop.permute.xlu0 %2955
    %2957 = vrot.lane.b32.xlu0 %v2662, 32
    %v2958 = vpop.permute.xlu0 %2957
    %2959 = vrot.lane.b32.xlu0 %v2663, 32
    %v2960 = vpop.permute.xlu0 %2959
    %2961 = vrot.lane.b32.xlu0 %v2664, 32
    %v2962 = vpop.permute.xlu0 %2961
    %2963 = vrot.lane.b32.xlu0 %v2665, 32
    %v2964 = vpop.permute.xlu0 %2963
    %2965 = vrot.lane.b32.xlu0 %v2666, 32
    %v2966 = vpop.permute.xlu0 %2965
    %2967 = vrot.lane.b32.xlu0 %v2667, 32
    %v2968 = vpop.permute.xlu0 %2967
    %2969 = vrot.lane.b32.xlu0 %v2668, 32
    %v2970 = vpop.permute.xlu0 %2969
    %2971 = vrot.lane.b32.xlu0 %v2669, 32
    %v2972 = vpop.permute.xlu0 %2971
    %2973 = vrot.lane.b32.xlu0 %v2670, 32
    %v2974 = vpop.permute.xlu0 %2973
    %2975 = vrot.lane.b32.xlu0 %v2671, 32
    %v2976 = vpop.permute.xlu0 %2975
    %2977 = vrot.lane.b32.xlu0 %v2672, 32
    %v2978 = vpop.permute.xlu0 %2977
    %2979 = vrot.lane.b32.xlu0 %v2673, 32
    %v2980 = vpop.permute.xlu0 %2979
    %2981 = vrot.lane.b32.xlu0 %v2674, 32
    %v2982 = vpop.permute.xlu0 %2981
    %2983 = vrot.lane.b32.xlu0 %v2675, 32
    %v2984 = vpop.permute.xlu0 %2983
    %2985 = vrot.lane.b32.xlu0 %v2676, 32
    %v2986 = vpop.permute.xlu0 %2985
    %2987 = vrot.lane.b32.xlu0 %v2677, 32
    %v2988 = vpop.permute.xlu0 %2987
    %2989 = vrot.lane.b32.xlu0 %v2678, 32
    %v2990 = vpop.permute.xlu0 %2989
    %2991 = vrot.lane.b32.xlu0 %v2679, 32
    %v2992 = vpop.permute.xlu0 %2991
    %2993 = vrot.lane.b32.xlu0 %v2680, 32
    %v2994 = vpop.permute.xlu0 %2993
    %2995 = vrot.lane.b32.xlu0 %v2681, 32
    %v2996 = vpop.permute.xlu0 %2995
    %2997 = vrot.lane.b32.xlu0 %v2682, 32
    %v2998 = vpop.permute.xlu0 %2997
    %2999 = vrot.lane.b32.xlu0 %v2683, 32
    %v3000 = vpop.permute.xlu0 %2999
    %3001 = vrot.lane.b32.xlu0 %v2684, 32
    %v3002 = vpop.permute.xlu0 %3001
    %3003 = vrot.lane.b32.xlu0 %v2685, 32
    %v3004 = vpop.permute.xlu0 %3003
    %3005 = vrot.lane.b32.xlu0 %v2686, 32
    %v3006 = vpop.permute.xlu0 %3005
    %3007 = vrot.lane.b32.xlu0 %v2687, 32
    %v3008 = vpop.permute.xlu0 %3007
    %3073 = vrot.lane.b32.xlu0 %v2688, 64
    %v3074 = vpop.permute.xlu0 %3073
    %3075 = vrot.lane.b32.xlu0 %v2689, 64
    %v3076 = vpop.permute.xlu0 %3075
    %3077 = vrot.lane.b32.xlu0 %v2690, 64
    %v3078 = vpop.permute.xlu0 %3077
    %3079 = vrot.lane.b32.xlu0 %v2691, 64
    %v3080 = vpop.permute.xlu0 %3079
    %3081 = vrot.lane.b32.xlu0 %v2692, 64
    %v3082 = vpop.permute.xlu0 %3081
    %3083 = vrot.lane.b32.xlu0 %v2693, 64
    %v3084 = vpop.permute.xlu0 %3083
    %3085 = vrot.lane.b32.xlu0 %v2694, 64
    %v3086 = vpop.permute.xlu0 %3085
    %3087 = vrot.lane.b32.xlu0 %v2695, 64
    %v3088 = vpop.permute.xlu0 %3087
    %3089 = vrot.lane.b32.xlu0 %v2696, 64
    %v3090 = vpop.permute.xlu0 %3089
    %3091 = vrot.lane.b32.xlu0 %v2697, 64
    %v3092 = vpop.permute.xlu0 %3091
    %3093 = vrot.lane.b32.xlu0 %v2698, 64
    %v3094 = vpop.permute.xlu0 %3093
    %3095 = vrot.lane.b32.xlu0 %v2699, 64
    %v3096 = vpop.permute.xlu0 %3095
    %3097 = vrot.lane.b32.xlu0 %v2700, 64
    %v3098 = vpop.permute.xlu0 %3097
    %3099 = vrot.lane.b32.xlu0 %v2701, 64
    %v3100 = vpop.permute.xlu0 %3099
    %3101 = vrot.lane.b32.xlu0 %v2702, 64
    %v3102 = vpop.permute.xlu0 %3101
    %3103 = vrot.lane.b32.xlu0 %v2703, 64
    %v3104 = vpop.permute.xlu0 %3103
    %3105 = vrot.lane.b32.xlu0 %v2704, 64
    %v3106 = vpop.permute.xlu0 %3105
    %3107 = vrot.lane.b32.xlu0 %v2705, 64
    %v3108 = vpop.permute.xlu0 %3107
    %3109 = vrot.lane.b32.xlu0 %v2706, 64
    %v3110 = vpop.permute.xlu0 %3109
    %3111 = vrot.lane.b32.xlu0 %v2707, 64
    %v3112 = vpop.permute.xlu0 %3111
    %3113 = vrot.lane.b32.xlu0 %v2708, 64
    %v3114 = vpop.permute.xlu0 %3113
    %3115 = vrot.lane.b32.xlu0 %v2709, 64
    %v3116 = vpop.permute.xlu0 %3115
    %3117 = vrot.lane.b32.xlu0 %v2710, 64
    %v3118 = vpop.permute.xlu0 %3117
    %3119 = vrot.lane.b32.xlu0 %v2711, 64
    %v3120 = vpop.permute.xlu0 %3119
    %3121 = vrot.lane.b32.xlu0 %v2712, 64
    %v3122 = vpop.permute.xlu0 %3121
    %3123 = vrot.lane.b32.xlu0 %v2713, 64
    %v3124 = vpop.permute.xlu0 %3123
    %3125 = vrot.lane.b32.xlu0 %v2714, 64
    %v3126 = vpop.permute.xlu0 %3125
    %3127 = vrot.lane.b32.xlu0 %v2715, 64
    %v3128 = vpop.permute.xlu0 %3127
    %3129 = vrot.lane.b32.xlu0 %v2716, 64
    %v3130 = vpop.permute.xlu0 %3129
    %3131 = vrot.lane.b32.xlu0 %v2717, 64
    %v3132 = vpop.permute.xlu0 %3131
    %3133 = vrot.lane.b32.xlu0 %v2718, 64
    %v3134 = vpop.permute.xlu0 %3133
    %3135 = vrot.lane.b32.xlu0 %v2719, 64
    %v3136 = vpop.permute.xlu0 %3135
    %3201 = vrot.lane.b32.xlu0 %v2720, 96
    %v3202 = vpop.permute.xlu0 %3201
    %3203 = vrot.lane.b32.xlu0 %v2721, 96
    %v3204 = vpop.permute.xlu0 %3203
    %3205 = vrot.lane.b32.xlu0 %v2722, 96
    %v3206 = vpop.permute.xlu0 %3205
    %3207 = vrot.lane.b32.xlu0 %v2723, 96
    %v3208 = vpop.permute.xlu0 %3207
    %3209 = vrot.lane.b32.xlu0 %v2724, 96
    %v3210 = vpop.permute.xlu0 %3209
    %3211 = vrot.lane.b32.xlu0 %v2725, 96
    %v3212 = vpop.permute.xlu0 %3211
    %3213 = vrot.lane.b32.xlu0 %v2726, 96
    %v3214 = vpop.permute.xlu0 %3213
    %3215 = vrot.lane.b32.xlu0 %v2727, 96
    %v3216 = vpop.permute.xlu0 %3215
    %3217 = vrot.lane.b32.xlu0 %v2728, 96
    %v3218 = vpop.permute.xlu0 %3217
    %3219 = vrot.lane.b32.xlu0 %v2729, 96
    %v3220 = vpop.permute.xlu0 %3219
    %3221 = vrot.lane.b32.xlu0 %v2730, 96
    %v3222 = vpop.permute.xlu0 %3221
    %3223 = vrot.lane.b32.xlu0 %v2731, 96
    %v3224 = vpop.permute.xlu0 %3223
    %3225 = vrot.lane.b32.xlu0 %v2732, 96
    %v3226 = vpop.permute.xlu0 %3225
    %3227 = vrot.lane.b32.xlu0 %v2733, 96
    %v3228 = vpop.permute.xlu0 %3227
    %3229 = vrot.lane.b32.xlu0 %v2734, 96
    %v3230 = vpop.permute.xlu0 %3229
    %3231 = vrot.lane.b32.xlu0 %v2735, 96
    %v3232 = vpop.permute.xlu0 %3231
    %3233 = vrot.lane.b32.xlu0 %v2736, 96
    %v3234 = vpop.permute.xlu0 %3233
    %3235 = vrot.lane.b32.xlu0 %v2737, 96
    %v3236 = vpop.permute.xlu0 %3235
    %3237 = vrot.lane.b32.xlu0 %v2738, 96
    %v3238 = vpop.permute.xlu0 %3237
    %3239 = vrot.lane.b32.xlu0 %v2739, 96
    %v3240 = vpop.permute.xlu0 %3239
    %3241 = vrot.lane.b32.xlu0 %v2740, 96
    %v3242 = vpop.permute.xlu0 %3241
    %3243 = vrot.lane.b32.xlu0 %v2741, 96
    %v3244 = vpop.permute.xlu0 %3243
    %3245 = vrot.lane.b32.xlu0 %v2742, 96
    %v3246 = vpop.permute.xlu0 %3245
    %3247 = vrot.lane.b32.xlu0 %v2743, 96
    %v3248 = vpop.permute.xlu0 %3247
    %3249 = vrot.lane.b32.xlu0 %v2744, 96
    %v3250 = vpop.permute.xlu0 %3249
    %3251 = vrot.lane.b32.xlu0 %v2745, 96
    %v3252 = vpop.permute.xlu0 %3251
    %3253 = vrot.lane.b32.xlu0 %v2746, 96
    %v3254 = vpop.permute.xlu0 %3253
    %3255 = vrot.lane.b32.xlu0 %v2747, 96
    %v3256 = vpop.permute.xlu0 %3255
    %3257 = vrot.lane.b32.xlu0 %v2748, 96
    %v3258 = vpop.permute.xlu0 %3257
    %3259 = vrot.lane.b32.xlu0 %v2749, 96
    %v3260 = vpop.permute.xlu0 %3259
    %3261 = vrot.lane.b32.xlu0 %v2750, 96
    %v3262 = vpop.permute.xlu0 %3261
    %3263 = vrot.lane.b32.xlu0 %v2751, 96
    %v3264 = vpop.permute.xlu0 %3263
    %3329 = vrot.lane.b32.xlu0 %v2784, 32
    %v3330 = vpop.permute.xlu0 %3329
    %3331 = vrot.lane.b32.xlu0 %v2785, 32
    %v3332 = vpop.permute.xlu0 %3331
    %3333 = vrot.lane.b32.xlu0 %v2786, 32
    %v3334 = vpop.permute.xlu0 %3333
    %3335 = vrot.lane.b32.xlu0 %v2787, 32
    %v3336 = vpop.permute.xlu0 %3335
    %3337 = vrot.lane.b32.xlu0 %v2788, 32
    %v3338 = vpop.permute.xlu0 %3337
    %3339 = vrot.lane.b32.xlu0 %v2789, 32
    %v3340 = vpop.permute.xlu0 %3339
    %3341 = vrot.lane.b32.xlu0 %v2790, 32
    %v3342 = vpop.permute.xlu0 %3341
    %3343 = vrot.lane.b32.xlu0 %v2791, 32
    %v3344 = vpop.permute.xlu0 %3343
    %3345 = vrot.lane.b32.xlu0 %v2792, 32
    %v3346 = vpop.permute.xlu0 %3345
    %3347 = vrot.lane.b32.xlu0 %v2793, 32
    %v3348 = vpop.permute.xlu0 %3347
    %3349 = vrot.lane.b32.xlu0 %v2794, 32
    %v3350 = vpop.permute.xlu0 %3349
    %3351 = vrot.lane.b32.xlu0 %v2795, 32
    %v3352 = vpop.permute.xlu0 %3351
    %3353 = vrot.lane.b32.xlu0 %v2796, 32
    %v3354 = vpop.permute.xlu0 %3353
    %3355 = vrot.lane.b32.xlu0 %v2797, 32
    %v3356 = vpop.permute.xlu0 %3355
    %3357 = vrot.lane.b32.xlu0 %v2798, 32
    %v3358 = vpop.permute.xlu0 %3357
    %3359 = vrot.lane.b32.xlu0 %v2799, 32
    %v3360 = vpop.permute.xlu0 %3359
    %3361 = vrot.lane.b32.xlu0 %v2800, 32
    %v3362 = vpop.permute.xlu0 %3361
    %3363 = vrot.lane.b32.xlu0 %v2801, 32
    %v3364 = vpop.permute.xlu0 %3363
    %3365 = vrot.lane.b32.xlu0 %v2802, 32
    %v3366 = vpop.permute.xlu0 %3365
    %3367 = vrot.lane.b32.xlu0 %v2803, 32
    %v3368 = vpop.permute.xlu0 %3367
    %3369 = vrot.lane.b32.xlu0 %v2804, 32
    %v3370 = vpop.permute.xlu0 %3369
    %3371 = vrot.lane.b32.xlu0 %v2805, 32
    %v3372 = vpop.permute.xlu0 %3371
    %3373 = vrot.lane.b32.xlu0 %v2806, 32
    %v3374 = vpop.permute.xlu0 %3373
    %3375 = vrot.lane.b32.xlu0 %v2807, 32
    %v3376 = vpop.permute.xlu0 %3375
    %3377 = vrot.lane.b32.xlu0 %v2808, 32
    %v3378 = vpop.permute.xlu0 %3377
    %3379 = vrot.lane.b32.xlu0 %v2809, 32
    %v3380 = vpop.permute.xlu0 %3379
    %3381 = vrot.lane.b32.xlu0 %v2810, 32
    %v3382 = vpop.permute.xlu0 %3381
    %3383 = vrot.lane.b32.xlu0 %v2811, 32
    %v3384 = vpop.permute.xlu0 %3383
    %3385 = vrot.lane.b32.xlu0 %v2812, 32
    %v3386 = vpop.permute.xlu0 %3385
    %3387 = vrot.lane.b32.xlu0 %v2813, 32
    %v3388 = vpop.permute.xlu0 %3387
    %3389 = vrot.lane.b32.xlu0 %v2814, 32
    %v3390 = vpop.permute.xlu0 %3389
    %3391 = vrot.lane.b32.xlu0 %v2815, 32
    %v3392 = vpop.permute.xlu0 %3391
    %3457 = vrot.lane.b32.xlu0 %v2817, 64
    %v3458 = vpop.permute.xlu0 %3457
    %3459 = vrot.lane.b32.xlu0 %v2818, 64
    %v3460 = vpop.permute.xlu0 %3459
    %3461 = vrot.lane.b32.xlu0 %v2819, 64
    %v3462 = vpop.permute.xlu0 %3461
    %3463 = vrot.lane.b32.xlu0 %v2820, 64
    %v3464 = vpop.permute.xlu0 %3463
    %3465 = vrot.lane.b32.xlu0 %v2821, 64
    %v3466 = vpop.permute.xlu0 %3465
    %3467 = vrot.lane.b32.xlu0 %v2822, 64
    %v3468 = vpop.permute.xlu0 %3467
    %3469 = vrot.lane.b32.xlu0 %v2823, 64
    %v3470 = vpop.permute.xlu0 %3469
    %3471 = vrot.lane.b32.xlu0 %v2824, 64
    %v3472 = vpop.permute.xlu0 %3471
    %3473 = vrot.lane.b32.xlu0 %v2825, 64
    %v3474 = vpop.permute.xlu0 %3473
    %3475 = vrot.lane.b32.xlu0 %v2826, 64
    %v3476 = vpop.permute.xlu0 %3475
    %3477 = vrot.lane.b32.xlu0 %v2827, 64
    %v3478 = vpop.permute.xlu0 %3477
    %3479 = vrot.lane.b32.xlu0 %v2828, 64
    %v3480 = vpop.permute.xlu0 %3479
    %3481 = vrot.lane.b32.xlu0 %v2829, 64
    %v3482 = vpop.permute.xlu0 %3481
    %3483 = vrot.lane.b32.xlu0 %v2830, 64
    %v3484 = vpop.permute.xlu0 %3483
    %3485 = vrot.lane.b32.xlu0 %v2831, 64
    %v3486 = vpop.permute.xlu0 %3485
    %3487 = vrot.lane.b32.xlu0 %v2832, 64
    %v3488 = vpop.permute.xlu0 %3487
    %3489 = vrot.lane.b32.xlu0 %v2833, 64
    %v3490 = vpop.permute.xlu0 %3489
    %3491 = vrot.lane.b32.xlu0 %v2834, 64
    %v3492 = vpop.permute.xlu0 %3491
    %3493 = vrot.lane.b32.xlu0 %v2835, 64
    %v3494 = vpop.permute.xlu0 %3493
    %3495 = vrot.lane.b32.xlu0 %v2836, 64
    %v3496 = vpop.permute.xlu0 %3495
    %3497 = vrot.lane.b32.xlu0 %v2837, 64
    %v3498 = vpop.permute.xlu0 %3497
    %3499 = vrot.lane.b32.xlu0 %v2838, 64
    %v3500 = vpop.permute.xlu0 %3499
    %3501 = vrot.lane.b32.xlu0 %v2839, 64
    %v3502 = vpop.permute.xlu0 %3501
    %3503 = vrot.lane.b32.xlu0 %v2840, 64
    %v3504 = vpop.permute.xlu0 %3503
    %3505 = vrot.lane.b32.xlu0 %v2841, 64
    %v3506 = vpop.permute.xlu0 %3505
    %3507 = vrot.lane.b32.xlu0 %v2842, 64
    %v3508 = vpop.permute.xlu0 %3507
    %3509 = vrot.lane.b32.xlu0 %v2843, 64
    %v3510 = vpop.permute.xlu0 %3509
    %3511 = vrot.lane.b32.xlu0 %v2844, 64
    %v3512 = vpop.permute.xlu0 %3511
    %3513 = vrot.lane.b32.xlu0 %v2845, 64
    %v3514 = vpop.permute.xlu0 %3513
    %3515 = vrot.lane.b32.xlu0 %v2846, 64
    %v3516 = vpop.permute.xlu0 %3515
    %3517 = vrot.lane.b32.xlu0 %v2847, 64
    %v3518 = vpop.permute.xlu0 %3517
    %3519 = vrot.lane.b32.xlu0 %v2848, 64
    %v3520 = vpop.permute.xlu0 %3519
    %3585 = vrot.lane.b32.xlu0 %v2849, 96
    %v3586 = vpop.permute.xlu0 %3585
    %3587 = vrot.lane.b32.xlu0 %v2850, 96
    %v3588 = vpop.permute.xlu0 %3587
    %3589 = vrot.lane.b32.xlu0 %v2851, 96
    %v3590 = vpop.permute.xlu0 %3589
    %3591 = vrot.lane.b32.xlu0 %v2852, 96
    %v3592 = vpop.permute.xlu0 %3591
    %3593 = vrot.lane.b32.xlu0 %v2853, 96
    %v3594 = vpop.permute.xlu0 %3593
    %3595 = vrot.lane.b32.xlu0 %v2854, 96
    %v3596 = vpop.permute.xlu0 %3595
    %3597 = vrot.lane.b32.xlu0 %v2855, 96
    %v3598 = vpop.permute.xlu0 %3597
    %3599 = vrot.lane.b32.xlu0 %v2856, 96
    %v3600 = vpop.permute.xlu0 %3599
    %3601 = vrot.lane.b32.xlu0 %v2857, 96
    %v3602 = vpop.permute.xlu0 %3601
    %3603 = vrot.lane.b32.xlu0 %v2858, 96
    %v3604 = vpop.permute.xlu0 %3603
    %3605 = vrot.lane.b32.xlu0 %v2859, 96
    %v3606 = vpop.permute.xlu0 %3605
    %3607 = vrot.lane.b32.xlu0 %v2860, 96
    %v3608 = vpop.permute.xlu0 %3607
    %3609 = vrot.lane.b32.xlu0 %v2861, 96
    %v3610 = vpop.permute.xlu0 %3609
    %3611 = vrot.lane.b32.xlu0 %v2862, 96
    %v3612 = vpop.permute.xlu0 %3611
    %3613 = vrot.lane.b32.xlu0 %v2863, 96
    %v3614 = vpop.permute.xlu0 %3613
    %3615 = vrot.lane.b32.xlu0 %v2864, 96
    %v3616 = vpop.permute.xlu0 %3615
    %3617 = vrot.lane.b32.xlu0 %v2865, 96
    %v3618 = vpop.permute.xlu0 %3617
    %3619 = vrot.lane.b32.xlu0 %v2866, 96
    %v3620 = vpop.permute.xlu0 %3619
    %3621 = vrot.lane.b32.xlu0 %v2867, 96
    %v3622 = vpop.permute.xlu0 %3621
    %3623 = vrot.lane.b32.xlu0 %v2868, 96
    %v3624 = vpop.permute.xlu0 %3623
    %3625 = vrot.lane.b32.xlu0 %v2869, 96
    %v3626 = vpop.permute.xlu0 %3625
    %3627 = vrot.lane.b32.xlu0 %v2870, 96
    %v3628 = vpop.permute.xlu0 %3627
    %3629 = vrot.lane.b32.xlu0 %v2871, 96
    %v3630 = vpop.permute.xlu0 %3629
    %3631 = vrot.lane.b32.xlu0 %v2872, 96
    %v3632 = vpop.permute.xlu0 %3631
    %3633 = vrot.lane.b32.xlu0 %v2873, 96
    %v3634 = vpop.permute.xlu0 %3633
    %3635 = vrot.lane.b32.xlu0 %v2874, 96
    %v3636 = vpop.permute.xlu0 %3635
    %3637 = vrot.lane.b32.xlu0 %v2875, 96
    %v3638 = vpop.permute.xlu0 %3637
    %3639 = vrot.lane.b32.xlu0 %v2876, 96
    %v3640 = vpop.permute.xlu0 %3639
    %3641 = vrot.lane.b32.xlu0 %v2877, 96
    %v3642 = vpop.permute.xlu0 %3641
    %3643 = vrot.lane.b32.xlu0 %v2878, 96
    %v3644 = vpop.permute.xlu0 %3643
    %3645 = vrot.lane.b32.xlu0 %v2879, 96
    %v3646 = vpop.permute.xlu0 %3645
    %3647 = vrot.lane.b32.xlu0 %v2880, 96
    %v3648 = vpop.permute.xlu0 %3647
    %v3681 = vsel %vm1943, %v2624, %v2946
    %v3682 = vsel %vm1943, %v2625, %v2948
    %v3683 = vsel %vm1943, %v2626, %v2950
    %v3684 = vsel %vm1943, %v2627, %v2952
    %v3685 = vsel %vm1943, %v2628, %v2954
    %v3686 = vsel %vm1943, %v2629, %v2956
    %v3687 = vsel %vm1943, %v2630, %v2958
    %v3688 = vsel %vm1943, %v2631, %v2960
    %v3689 = vsel %vm1943, %v2632, %v2962
    %v3690 = vsel %vm1943, %v2633, %v2964
    %v3691 = vsel %vm1943, %v2634, %v2966
    %v3692 = vsel %vm1943, %v2635, %v2968
    %v3693 = vsel %vm1943, %v2636, %v2970
    %v3694 = vsel %vm1943, %v2637, %v2972
    %v3695 = vsel %vm1943, %v2638, %v2974
    %v3696 = vsel %vm1943, %v2639, %v2976
    %v3697 = vsel %vm1943, %v2640, %v2978
    %v3698 = vsel %vm1943, %v2641, %v2980
    %v3699 = vsel %vm1943, %v2642, %v2982
    %v3700 = vsel %vm1943, %v2643, %v2984
    %v3701 = vsel %vm1943, %v2644, %v2986
    %v3702 = vsel %vm1943, %v2645, %v2988
    %v3703 = vsel %vm1943, %v2646, %v2990
    %v3704 = vsel %vm1943, %v2647, %v2992
    %v3705 = vsel %vm1943, %v2648, %v2994
    %v3706 = vsel %vm1943, %v2649, %v2996
    %v3707 = vsel %vm1943, %v2650, %v2998
    %v3708 = vsel %vm1943, %v2651, %v3000
    %v3709 = vsel %vm1943, %v2652, %v3002
    %v3710 = vsel %vm1943, %v2653, %v3004
    %v3711 = vsel %vm1943, %v2654, %v3006
    %v3712 = vsel %vm1943, %v2655, %v3008
    %vm3713 = vcmask 523264
    %v3714 = vsel %vm3713, %v3681, %v3074
    %v3715 = vsel %vm3713, %v3682, %v3076
    %v3716 = vsel %vm3713, %v3683, %v3078
    %v3717 = vsel %vm3713, %v3684, %v3080
    %v3718 = vsel %vm3713, %v3685, %v3082
    %v3719 = vsel %vm3713, %v3686, %v3084
    %v3720 = vsel %vm3713, %v3687, %v3086
    %v3721 = vsel %vm3713, %v3688, %v3088
    %v3722 = vsel %vm3713, %v3689, %v3090
    %v3723 = vsel %vm3713, %v3690, %v3092
    %v3724 = vsel %vm3713, %v3691, %v3094
    %v3725 = vsel %vm3713, %v3692, %v3096
    %v3726 = vsel %vm3713, %v3693, %v3098
    %v3727 = vsel %vm3713, %v3694, %v3100
    %v3728 = vsel %vm3713, %v3695, %v3102
    %v3729 = vsel %vm3713, %v3696, %v3104
    %v3730 = vsel %vm3713, %v3697, %v3106
    %v3731 = vsel %vm3713, %v3698, %v3108
    %v3732 = vsel %vm3713, %v3699, %v3110
    %v3733 = vsel %vm3713, %v3700, %v3112
    %v3734 = vsel %vm3713, %v3701, %v3114
    %v3735 = vsel %vm3713, %v3702, %v3116
    %v3736 = vsel %vm3713, %v3703, %v3118
    %v3737 = vsel %vm3713, %v3704, %v3120
    %v3738 = vsel %vm3713, %v3705, %v3122
    %v3739 = vsel %vm3713, %v3706, %v3124
    %v3740 = vsel %vm3713, %v3707, %v3126
    %v3741 = vsel %vm3713, %v3708, %v3128
    %v3742 = vsel %vm3713, %v3709, %v3130
    %v3743 = vsel %vm3713, %v3710, %v3132
    %v3744 = vsel %vm3713, %v3711, %v3134
    %v3745 = vsel %vm3713, %v3712, %v3136
    %vm3746 = vcmask 785408
    %v3747 = vsel %vm3746, %v3714, %v3202
    %v3748 = vsel %vm3746, %v3715, %v3204
    %v3749 = vsel %vm3746, %v3716, %v3206
    %v3750 = vsel %vm3746, %v3717, %v3208
    %v3751 = vsel %vm3746, %v3718, %v3210
    %v3752 = vsel %vm3746, %v3719, %v3212
    %v3753 = vsel %vm3746, %v3720, %v3214
    %v3754 = vsel %vm3746, %v3721, %v3216
    %v3755 = vsel %vm3746, %v3722, %v3218
    %v3756 = vsel %vm3746, %v3723, %v3220
    %v3757 = vsel %vm3746, %v3724, %v3222
    %v3758 = vsel %vm3746, %v3725, %v3224
    %v3759 = vsel %vm3746, %v3726, %v3226
    %v3760 = vsel %vm3746, %v3727, %v3228
    %v3761 = vsel %vm3746, %v3728, %v3230
    %v3762 = vsel %vm3746, %v3729, %v3232
    %v3763 = vsel %vm3746, %v3730, %v3234
    %v3764 = vsel %vm3746, %v3731, %v3236
    %v3765 = vsel %vm3746, %v3732, %v3238
    %v3766 = vsel %vm3746, %v3733, %v3240
    %v3767 = vsel %vm3746, %v3734, %v3242
    %v3768 = vsel %vm3746, %v3735, %v3244
    %v3769 = vsel %vm3746, %v3736, %v3246
    %v3770 = vsel %vm3746, %v3737, %v3248
    %v3771 = vsel %vm3746, %v3738, %v3250
    %v3772 = vsel %vm3746, %v3739, %v3252
    %v3773 = vsel %vm3746, %v3740, %v3254
    %v3774 = vsel %vm3746, %v3741, %v3256
    %v3775 = vsel %vm3746, %v3742, %v3258
    %v3776 = vsel %vm3746, %v3743, %v3260
    %v3777 = vsel %vm3746, %v3744, %v3262
    %v3778 = vsel %vm3746, %v3745, %v3264
    %v3779 = vsel %vm1943, %v2752, %v3330
    %v3780 = vsel %vm1943, %v2753, %v3332
    %v3781 = vsel %vm1943, %v2754, %v3334
    %v3782 = vsel %vm1943, %v2755, %v3336
    %v3783 = vsel %vm1943, %v2756, %v3338
    %v3784 = vsel %vm1943, %v2757, %v3340
    %v3785 = vsel %vm1943, %v2758, %v3342
    %v3786 = vsel %vm1943, %v2759, %v3344
    %v3787 = vsel %vm1943, %v2760, %v3346
    %v3788 = vsel %vm1943, %v2761, %v3348
    %v3789 = vsel %vm1943, %v2762, %v3350
    %v3790 = vsel %vm1943, %v2763, %v3352
    %v3791 = vsel %vm1943, %v2764, %v3354
    %v3792 = vsel %vm1943, %v2765, %v3356
    %v3793 = vsel %vm1943, %v2766, %v3358
    %v3794 = vsel %vm1943, %v2767, %v3360
    %v3795 = vsel %vm1943, %v2768, %v3362
    %v3796 = vsel %vm1943, %v2769, %v3364
    %v3797 = vsel %vm1943, %v2770, %v3366
    %v3798 = vsel %vm1943, %v2771, %v3368
    %v3799 = vsel %vm1943, %v2772, %v3370
    %v3800 = vsel %vm1943, %v2773, %v3372
    %v3801 = vsel %vm1943, %v2774, %v3374
    %v3802 = vsel %vm1943, %v2775, %v3376
    %v3803 = vsel %vm1943, %v2776, %v3378
    %v3804 = vsel %vm1943, %v2777, %v3380
    %v3805 = vsel %vm1943, %v2778, %v3382
    %v3806 = vsel %vm1943, %v2779, %v3384
    %v3807 = vsel %vm1943, %v2780, %v3386
    %v3808 = vsel %vm1943, %v2781, %v3388
    %v3809 = vsel %vm1943, %v2782, %v3390
    %v3810 = vsel %vm1943, %v2783, %v3392
    %v3811 = vsel %vm3713, %v3779, %v3458
    %v3812 = vsel %vm3713, %v3780, %v3460
    %v3813 = vsel %vm3713, %v3781, %v3462
    %v3814 = vsel %vm3713, %v3782, %v3464
    %v3815 = vsel %vm3713, %v3783, %v3466
    %v3816 = vsel %vm3713, %v3784, %v3468
    %v3817 = vsel %vm3713, %v3785, %v3470
    %v3818 = vsel %vm3713, %v3786, %v3472
    %v3819 = vsel %vm3713, %v3787, %v3474
    %v3820 = vsel %vm3713, %v3788, %v3476
    %v3821 = vsel %vm3713, %v3789, %v3478
    %v3822 = vsel %vm3713, %v3790, %v3480
    %v3823 = vsel %vm3713, %v3791, %v3482
    %v3824 = vsel %vm3713, %v3792, %v3484
    %v3825 = vsel %vm3713, %v3793, %v3486
    %v3826 = vsel %vm3713, %v3794, %v3488
    %v3827 = vsel %vm3713, %v3795, %v3490
    %v3828 = vsel %vm3713, %v3796, %v3492
    %v3829 = vsel %vm3713, %v3797, %v3494
    %v3830 = vsel %vm3713, %v3798, %v3496
    %v3831 = vsel %vm3713, %v3799, %v3498
    %v3832 = vsel %vm3713, %v3800, %v3500
    %v3833 = vsel %vm3713, %v3801, %v3502
    %v3834 = vsel %vm3713, %v3802, %v3504
    %v3835 = vsel %vm3713, %v3803, %v3506
    %v3836 = vsel %vm3713, %v3804, %v3508
    %v3837 = vsel %vm3713, %v3805, %v3510
    %v3838 = vsel %vm3713, %v3806, %v3512
    %v3839 = vsel %vm3713, %v3807, %v3514
    %v3840 = vsel %vm3713, %v3808, %v3516
    %v3841 = vsel %vm3713, %v3809, %v3518
    %v3842 = vsel %vm3713, %v3810, %v3520
    %v3843 = vsel %vm3746, %v3811, %v3586
    %v3844 = vsel %vm3746, %v3812, %v3588
    %v3845 = vsel %vm3746, %v3813, %v3590
    %v3846 = vsel %vm3746, %v3814, %v3592
    %v3847 = vsel %vm3746, %v3815, %v3594
    %v3848 = vsel %vm3746, %v3816, %v3596
    %v3849 = vsel %vm3746, %v3817, %v3598
    %v3850 = vsel %vm3746, %v3818, %v3600
    %v3851 = vsel %vm3746, %v3819, %v3602
    %v3852 = vsel %vm3746, %v3820, %v3604
    %v3853 = vsel %vm3746, %v3821, %v3606
    %v3854 = vsel %vm3746, %v3822, %v3608
    %v3855 = vsel %vm3746, %v3823, %v3610
    %v3856 = vsel %vm3746, %v3824, %v3612
    %v3857 = vsel %vm3746, %v3825, %v3614
    %v3858 = vsel %vm3746, %v3826, %v3616
    %v3859 = vsel %vm3746, %v3827, %v3618
    %v3860 = vsel %vm3746, %v3828, %v3620
    %v3861 = vsel %vm3746, %v3829, %v3622
    %v3862 = vsel %vm3746, %v3830, %v3624
    %v3863 = vsel %vm3746, %v3831, %v3626
    %v3864 = vsel %vm3746, %v3832, %v3628
    %v3865 = vsel %vm3746, %v3833, %v3630
    %v3866 = vsel %vm3746, %v3834, %v3632
    %v3867 = vsel %vm3746, %v3835, %v3634
    %v3868 = vsel %vm3746, %v3836, %v3636
    %v3869 = vsel %vm3746, %v3837, %v3638
    %v3870 = vsel %vm3746, %v3838, %v3640
    %v3871 = vsel %vm3746, %v3839, %v3642
    %v3872 = vsel %vm3746, %v3840, %v3644
    %v3873 = vsel %vm3746, %v3841, %v3646
    %v3874 = vsel %vm3746, %v3842, %v3648
    %v3875 = vpack.c.bf16 %v3748, %v3747
    %v3876 = vpack.c.bf16 %v3844, %v3843
    %v3877 = vpack.c.bf16 %v2882, %v2881
    %v3878 = vpack.c.bf16 %v3750, %v3749
    %v3879 = vpack.c.bf16 %v3846, %v3845
    %v3880 = vpack.c.bf16 %v2884, %v2883
    %v3881 = vpack.c.bf16 %v3752, %v3751
    %v3882 = vpack.c.bf16 %v3848, %v3847
    %v3883 = vpack.c.bf16 %v2886, %v2885
    %v3884 = vpack.c.bf16 %v3754, %v3753
    %v3885 = vpack.c.bf16 %v3850, %v3849
    %v3886 = vpack.c.bf16 %v2888, %v2887
    %v3887 = vpack.c.bf16 %v3756, %v3755
    %v3888 = vpack.c.bf16 %v3852, %v3851
    %v3889 = vpack.c.bf16 %v2890, %v2889
    %v3890 = vpack.c.bf16 %v3758, %v3757
    %v3891 = vpack.c.bf16 %v3854, %v3853
    %v3892 = vpack.c.bf16 %v2892, %v2891
    %v3893 = vpack.c.bf16 %v3760, %v3759
    %v3894 = vpack.c.bf16 %v3856, %v3855
    %v3895 = vpack.c.bf16 %v2894, %v2893
    %v3896 = vpack.c.bf16 %v3762, %v3761
    %v3897 = vpack.c.bf16 %v3858, %v3857
    %v3898 = vpack.c.bf16 %v2896, %v2895
    %v3899 = vpack.c.bf16 %v3764, %v3763
    %v3900 = vpack.c.bf16 %v3860, %v3859
    %v3901 = vpack.c.bf16 %v2898, %v2897
    %v3902 = vpack.c.bf16 %v3766, %v3765
    %v3903 = vpack.c.bf16 %v3862, %v3861
    %v3904 = vpack.c.bf16 %v2900, %v2899
    %v3905 = vpack.c.bf16 %v3768, %v3767
    %v3906 = vpack.c.bf16 %v3864, %v3863
    %v3907 = vpack.c.bf16 %v2902, %v2901
    %v3908 = vpack.c.bf16 %v3770, %v3769
    %v3909 = vpack.c.bf16 %v3866, %v3865
    %v3910 = vpack.c.bf16 %v2904, %v2903
    %v3911 = vpack.c.bf16 %v3772, %v3771
    %v3912 = vpack.c.bf16 %v3868, %v3867
    %v3913 = vpack.c.bf16 %v2906, %v2905
    %v3914 = vpack.c.bf16 %v3774, %v3773
    %v3915 = vpack.c.bf16 %v3870, %v3869
    %v3916 = vpack.c.bf16 %v2908, %v2907
    %v3917 = vpack.c.bf16 %v3776, %v3775
    %v3918 = vpack.c.bf16 %v3872, %v3871
    %v3919 = vpack.c.bf16 %v2910, %v2909
    %v3920 = vpack.c.bf16 %v3778, %v3777
    %v3921 = vpack.c.bf16 %v3874, %v3873
    %v3922 = vpack.c.bf16 %v2912, %v2911
    %v3923 = vld [vmem:[%s4] sm:$0xf]
    %v3924 = vld [vmem:[%s4 + $0x4] sm:$0xf]
    %v3925 = vld [vmem:[%s4 + $0x8] sm:$0xf]
    %v3926 = vld [vmem:[%s4 + $0xc] sm:$0xf]
    %v3927 = vld [vmem:[%s4 + $0x10] sm:$0xf]
    %v3928 = vld [vmem:[%s4 + $0x14] sm:$0xf]
    %v3929 = vld [vmem:[%s4 + $0x18] sm:$0xf]
    %v3930 = vld [vmem:[%s4 + $0x1c] sm:$0xf]
    %v3931 = vld [vmem:[%s4 + $0x20] sm:$0xf]
    %v3932 = vld [vmem:[%s4 + $0x24] sm:$0xf]
    %v3933 = vld [vmem:[%s4 + $0x28] sm:$0xf]
    %v3934 = vld [vmem:[%s4 + $0x2c] sm:$0xf]
    %v3935 = vld [vmem:[%s4 + $0x30] sm:$0xf]
    %v3936 = vld [vmem:[%s4 + $0x34] sm:$0xf]
    %v3937 = vld [vmem:[%s4 + $0x38] sm:$0xf]
    %v3938 = vld [vmem:[%s4 + $0x3c] sm:$0xf]
    %v3939 = vld [vmem:[%s4 + $0x40] sm:$0xf]
    %v3940 = vld [vmem:[%s4 + $0x44] sm:$0xf]
    %v3941 = vld [vmem:[%s4 + $0x48] sm:$0xf]
    %v3942 = vld [vmem:[%s4 + $0x4c] sm:$0xf]
    %v3943 = vld [vmem:[%s4 + $0x50] sm:$0xf]
    %v3944 = vld [vmem:[%s4 + $0x54] sm:$0xf]
    %v3945 = vld [vmem:[%s4 + $0x58] sm:$0xf]
    %v3946 = vld [vmem:[%s4 + $0x5c] sm:$0xf]
    %v3947 = vld [vmem:[%s4 + $0x60] sm:$0xf]
    %v3948 = vld [vmem:[%s4 + $0x64] sm:$0xf]
    %v3949 = vld [vmem:[%s4 + $0x68] sm:$0xf]
    %v3950 = vld [vmem:[%s4 + $0x6c] sm:$0xf]
    %v3951 = vld [vmem:[%s4 + $0x70] sm:$0xf]
    %v3952 = vld [vmem:[%s4 + $0x74] sm:$0xf]
    %v3953 = vld [vmem:[%s4 + $0x78] sm:$0xf]
    %v3954 = vld [vmem:[%s4 + $0x7c] sm:$0xf]
    %v3955 = vld [vmem:[%s4 + $0x80] sm:$0xf]
    %v3956 = vld [vmem:[%s4 + $0x84] sm:$0xf]
    %v3957 = vld [vmem:[%s4 + $0x88] sm:$0xf]
    %v3958 = vld [vmem:[%s4 + $0x8c] sm:$0xf]
    %v3995 = vunpack.c.l.b16 %v3923
    %v3996 = vunpack.c.l.b16 %v3924
    %v3997 = vunpack.c.l.b16 %v3925
    %v3998 = vunpack.c.l.b16 %v3926
    %v3999 = vunpack.c.l.b16 %v3927
    %v4000 = vunpack.c.l.b16 %v3928
    %v4001 = vunpack.c.l.b16 %v3929
    %v4002 = vunpack.c.l.b16 %v3930
    %v4003 = vunpack.c.l.b16 %v3931
    %v4004 = vunpack.c.l.b16 %v3932
    %v4005 = vunpack.c.l.b16 %v3933
    %v4006 = vunpack.c.l.b16 %v3934
    %v4007 = vunpack.c.l.b16 %v3935
    %v4008 = vunpack.c.l.b16 %v3936
    %v4009 = vunpack.c.l.b16 %v3937
    %v4010 = vunpack.c.l.b16 %v3938
    %v4011 = vunpack.c.l.b16 %v3939
    %v4012 = vunpack.c.l.b16 %v3940
    %v4013 = vunpack.c.l.b16 %v3941
    %v4014 = vunpack.c.l.b16 %v3942
    %v4015 = vunpack.c.l.b16 %v3943
    %v4016 = vunpack.c.l.b16 %v3944
    %v4017 = vunpack.c.l.b16 %v3945
    %v4018 = vunpack.c.l.b16 %v3946
    %v4019 = vunpack.c.l.b16 %v3947
    %v4020 = vunpack.c.l.b16 %v3948
    %v4021 = vunpack.c.l.b16 %v3949
    %v4022 = vunpack.c.l.b16 %v3950
    %v4023 = vunpack.c.l.b16 %v3951
    %v4024 = vunpack.c.l.b16 %v3952
    %v4025 = vunpack.c.l.b16 %v3953
    %v4026 = vunpack.c.l.b16 %v3954
    %v4027 = vunpack.c.l.b16 %v3955
    %v4028 = vunpack.c.l.b16 %v3956
    %v4029 = vunpack.c.l.b16 %v3957
    %v4030 = vunpack.c.l.b16 %v3958
    %v4031 = vpack.c.b16 %v3996, %v3995
    %v4032 = vpack.c.b16 %v3998, %v3997
    %v4033 = vpack.c.b16 %v4000, %v3999
    %v4034 = vpack.c.b16 %v4002, %v4001
    %v4035 = vpack.c.b16 %v4004, %v4003
    %v4036 = vpack.c.b16 %v4006, %v4005
    %v4037 = vpack.c.b16 %v4008, %v4007
    %v4038 = vpack.c.b16 %v4010, %v4009
    %v4039 = vpack.c.b16 %v4012, %v4011
    %v4040 = vpack.c.b16 %v4014, %v4013
    %v4041 = vpack.c.b16 %v4016, %v4015
    %v4042 = vpack.c.b16 %v4018, %v4017
    %v4043 = vpack.c.b16 %v4020, %v4019
    %v4044 = vpack.c.b16 %v4022, %v4021
    %v4045 = vpack.c.b16 %v4024, %v4023
    %v4046 = vpack.c.b16 %v4026, %v4025
    %v4047 = vpack.c.b16 %v4028, %v4027
    %v4048 = vpack.c.b16 %v4030, %v4029
    %v4068 = vsel %vm1943, %v3877, 0
    %v4071 = vsel %vm1943, %v3880, 0
    %v4074 = vsel %vm1943, %v3883, 0
    %v4077 = vsel %vm1943, %v3886, 0
    %v4080 = vsel %vm1943, %v3889, 0
    %v4083 = vsel %vm1943, %v3892, 0
    %v4086 = vsel %vm1943, %v3895, 0
    %v4089 = vsel %vm1943, %v3898, 0
    %v4092 = vsel %vm1943, %v3901, 0
    %v4095 = vsel %vm1943, %v3904, 0
    %v4098 = vsel %vm1943, %v3907, 0
    %v4101 = vsel %vm1943, %v3910, 0
    %v4104 = vsel %vm1943, %v3913, 0
    %v4107 = vsel %vm1943, %v3916, 0
    %v4110 = vsel %vm1943, %v3919, 0
    %v4113 = vsel %vm1943, %v3922, 0
    %4115 = vmatprep.subr.bf16.mxu0 0
    %4116 = vmatpush1.bf16.msra.mxu0 %v4031
    %4117 = vmatprep.subr.bf16.mxu0 0
    %4118 = vmatpush1.bf16.msra.mxu0 %v4032
    %4119 = vmatprep.subr.bf16.mxu0 0
    %4120 = vmatpush1.bf16.msra.mxu0 %v4033
    %4121 = vmatprep.subr.bf16.mxu0 0
    %4122 = vmatpush1.bf16.msra.mxu0 %v4034
    %4123 = vmatprep.subr.bf16.mxu0 0
    %4124 = vmatpush1.bf16.msra.mxu0 %v4035
    %4125 = vmatprep.subr.bf16.mxu0 0
    %4126 = vmatpush1.bf16.msra.mxu0 %v4036
    %4127 = vmatprep.subr.bf16.mxu0 0
    %4128 = vmatpush1.bf16.msra.mxu0 %v4037
    %4129 = vmatprep.subr.bf16.mxu0 0
    %4130 = vmatpush1.bf16.msra.mxu0 %v4038
    %4131 = vmatprep.subr.bf16.mxu0 0
    %4132 = vmatpush1.bf16.msra.mxu0 %v4039
    %4133 = vmatprep.subr.bf16.mxu0 0
    %4134 = vmatpush1.bf16.msra.mxu0 %v4040
    %4135 = vmatprep.subr.bf16.mxu0 0
    %4136 = vmatpush1.bf16.msra.mxu0 %v4041
    %4137 = vmatprep.subr.bf16.mxu0 0
    %4138 = vmatpush1.bf16.msra.mxu0 %v4042
    %4139 = vmatprep.subr.bf16.mxu0 0
    %4140 = vmatpush1.bf16.msra.mxu0 %v4043
    %4141 = vmatprep.subr.bf16.mxu0 0
    %4142 = vmatpush1.bf16.msra.mxu0 %v4044
    %4143 = vmatprep.subr.bf16.mxu0 0
    %4144 = vmatpush1.bf16.msra.mxu0 %v4045
    %4145 = vmatprep.subr.bf16.mxu0 0
    %4146 = vmatpush1.bf16.msra.mxu0 %v4046
    %4147 = vmatprep.mubr.bf16.mxu0 %v3876
    %4148 = vmatmul.mubr.bf16.gmra.mrb[0].mxu0 %v3875
    %v4149 = vpop.f32.mrb[0].mxu0
    %v4150 = vadd.f32 0.0, %v4149
    %v4151 = vpop.f32.mrb[0].mxu0
    %v4152 = vpop.f32.mrb[0].mxu0
    %v4153 = vadd.f32 0.0, %v4152
    %v4154 = vpop.f32.mrb[0].mxu0
    %4155 = vmatprep.mubr.bf16.mxu0 %v3879
    %4156 = vmatmul.mubr.bf16.gmra.mrb[0].mxu0 %v3878
    %v4157 = vpop.f32.mrb[0].mxu0
    %v4158 = vadd.f32 0.0, %v4157
    %v4159 = vpop.f32.mrb[0].mxu0
    %v4160 = vpop.f32.mrb[0].mxu0
    %v4161 = vadd.f32 0.0, %v4160
    %v4162 = vpop.f32.mrb[0].mxu0
    %4163 = vmatprep.mubr.bf16.mxu0 %v3882
    %4164 = vmatmul.mubr.bf16.gmra.mrb[0].mxu0 %v3881
    %v4165 = vpop.f32.mrb[0].mxu0
    %v4166 = vadd.f32 0.0, %v4165
    %v4167 = vpop.f32.mrb[0].mxu0
    %v4168 = vpop.f32.mrb[0].mxu0
    %v4169 = vadd.f32 0.0, %v4168
    %v4170 = vpop.f32.mrb[0].mxu0
    %4171 = vmatprep.mubr.bf16.mxu0 %v3885
    %4172 = vmatmul.mubr.bf16.gmra.mrb[0].mxu0 %v3884
    %v4173 = vpop.f32.mrb[0].mxu0
    %v4174 = vadd.f32 0.0, %v4173
    %v4175 = vpop.f32.mrb[0].mxu0
    %v4176 = vpop.f32.mrb[0].mxu0
    %v4177 = vadd.f32 0.0, %v4176
    %v4178 = vpop.f32.mrb[0].mxu0
    %4179 = vmatprep.mubr.bf16.mxu0 %v3888
    %4180 = vmatmul.mubr.bf16.gmra.mrb[0].mxu0 %v3887
    %v4181 = vpop.f32.mrb[0].mxu0
    %v4182 = vadd.f32 0.0, %v4181
    %v4183 = vpop.f32.mrb[0].mxu0
    %v4184 = vpop.f32.mrb[0].mxu0
    %v4185 = vadd.f32 0.0, %v4184
    %v4186 = vpop.f32.mrb[0].mxu0
    %4187 = vmatprep.mubr.bf16.mxu0 %v3891
    %4188 = vmatmul.mubr.bf16.gmra.mrb[0].mxu0 %v3890
    %v4189 = vpop.f32.mrb[0].mxu0
    %v4190 = vadd.f32 0.0, %v4189
    %v4191 = vpop.f32.mrb[0].mxu0
    %v4192 = vpop.f32.mrb[0].mxu0
    %v4193 = vadd.f32 0.0, %v4192
    %v4194 = vpop.f32.mrb[0].mxu0
    %4195 = vmatprep.mubr.bf16.mxu0 %v3894
    %4196 = vmatmul.mubr.bf16.gmra.mrb[0].mxu0 %v3893
    %v4197 = vpop.f32.mrb[0].mxu0
    %v4198 = vadd.f32 0.0, %v4197
    %v4199 = vpop.f32.mrb[0].mxu0
    %v4200 = vpop.f32.mrb[0].mxu0
    %v4201 = vadd.f32 0.0, %v4200
    %v4202 = vpop.f32.mrb[0].mxu0
    %4203 = vmatprep.mubr.bf16.mxu0 %v3897
    %4204 = vmatmul.mubr.bf16.gmra.mrb[0].mxu0 %v3896
    %v4205 = vpop.f32.mrb[0].mxu0
    %v4206 = vadd.f32 0.0, %v4205
    %v4207 = vpop.f32.mrb[0].mxu0
    %v4208 = vpop.f32.mrb[0].mxu0
    %v4209 = vadd.f32 0.0, %v4208
    %v4210 = vpop.f32.mrb[0].mxu0
    %4211 = vmatprep.mubr.bf16.mxu0 %v3900
    %4212 = vmatmul.mubr.bf16.gmra.mrb[0].mxu0 %v3899
    %v4213 = vpop.f32.mrb[0].mxu0
    %v4214 = vadd.f32 0.0, %v4213
    %v4215 = vpop.f32.mrb[0].mxu0
    %v4216 = vpop.f32.mrb[0].mxu0
    %v4217 = vadd.f32 0.0, %v4216
    %v4218 = vpop.f32.mrb[0].mxu0
    %4219 = vmatprep.mubr.bf16.mxu0 %v3903
    %4220 = vmatmul.mubr.bf16.gmra.mrb[0].mxu0 %v3902
    %v4221 = vpop.f32.mrb[0].mxu0
    %v4222 = vadd.f32 0.0, %v4221
    %v4223 = vpop.f32.mrb[0].mxu0
    %v4224 = vpop.f32.mrb[0].mxu0
    %v4225 = vadd.f32 0.0, %v4224
    %v4226 = vpop.f32.mrb[0].mxu0
    %4227 = vmatprep.mubr.bf16.mxu0 %v3906
    %4228 = vmatmul.mubr.bf16.gmra.mrb[0].mxu0 %v3905
    %v4229 = vpop.f32.mrb[0].mxu0
    %v4230 = vadd.f32 0.0, %v4229
    %v4231 = vpop.f32.mrb[0].mxu0
    %v4232 = vpop.f32.mrb[0].mxu0
    %v4233 = vadd.f32 0.0, %v4232
    %v4234 = vpop.f32.mrb[0].mxu0
    %4235 = vmatprep.mubr.bf16.mxu0 %v3909
    %4236 = vmatmul.mubr.bf16.gmra.mrb[0].mxu0 %v3908
    %v4237 = vpop.f32.mrb[0].mxu0
    %v4238 = vadd.f32 0.0, %v4237
    %v4239 = vpop.f32.mrb[0].mxu0
    %v4240 = vpop.f32.mrb[0].mxu0
    %v4241 = vadd.f32 0.0, %v4240
    %v4242 = vpop.f32.mrb[0].mxu0
    %4243 = vmatprep.mubr.bf16.mxu0 %v3912
    %4244 = vmatmul.mubr.bf16.gmra.mrb[0].mxu0 %v3911
    %v4245 = vpop.f32.mrb[0].mxu0
    %v4246 = vadd.f32 0.0, %v4245
    %v4247 = vpop.f32.mrb[0].mxu0
    %v4248 = vpop.f32.mrb[0].mxu0
    %v4249 = vadd.f32 0.0, %v4248
    %v4250 = vpop.f32.mrb[0].mxu0
    %4251 = vmatprep.mubr.bf16.mxu0 %v3915
    %4252 = vmatmul.mubr.bf16.gmra.mrb[0].mxu0 %v3914
    %v4253 = vpop.f32.mrb[0].mxu0
    %v4254 = vadd.f32 0.0, %v4253
    %v4255 = vpop.f32.mrb[0].mxu0
    %v4256 = vpop.f32.mrb[0].mxu0
    %v4257 = vadd.f32 0.0, %v4256
    %v4258 = vpop.f32.mrb[0].mxu0
    %4259 = vmatprep.mubr.bf16.mxu0 %v3918
    %4260 = vmatmul.mubr.bf16.gmra.mrb[0].mxu0 %v3917
    %v4261 = vpop.f32.mrb[0].mxu0
    %v4262 = vadd.f32 0.0, %v4261
    %v4263 = vpop.f32.mrb[0].mxu0
    %v4264 = vpop.f32.mrb[0].mxu0
    %v4265 = vadd.f32 0.0, %v4264
    %v4266 = vpop.f32.mrb[0].mxu0
    %4267 = vmatprep.mubr.bf16.mxu0 %v3921
    %4268 = vmatmul.mubr.bf16.gmra.mrb[0].mxu0 %v3920
    %v4269 = vpop.f32.mrb[0].mxu0
    %v4270 = vadd.f32 0.0, %v4269
    %v4271 = vpop.f32.mrb[0].mxu0
    %v4272 = vpop.f32.mrb[0].mxu0
    %v4273 = vadd.f32 0.0, %v4272
    %v4274 = vpop.f32.mrb[0].mxu0
    %4275 = vdwg.mxu0
    %4276 = vmatprep.subr.bf16.mxu0 0
    %4277 = vmatpush1.bf16.msra.mxu0 %v4047
    %4278 = vmatprep.subr.bf16.mxu0 0
    %4279 = vmatpush1.bf16.msra.mxu0 %v4048
    %4280 = vmatprep.subr.bf16.mxu0 0
    %4281 = vmatpush1.bf16.msra.mxu0 0
    %4282 = vmatprep.subr.bf16.mxu0 0
    %4283 = vmatpush1.bf16.msra.mxu0 0
    %4284 = vmatprep.subr.bf16.mxu0 0
    %4285 = vmatpush1.bf16.msra.mxu0 0
    %4286 = vmatprep.subr.bf16.mxu0 0
    %4287 = vmatpush1.bf16.msra.mxu0 0
    %4288 = vmatprep.subr.bf16.mxu0 0
    %4289 = vmatpush1.bf16.msra.mxu0 0
    %4290 = vmatprep.subr.bf16.mxu0 0
    %4291 = vmatpush1.bf16.msra.mxu0 0
    %4292 = vmatprep.subr.bf16.mxu0 0
    %4293 = vmatpush1.bf16.msra.mxu0 0
    %4294 = vmatprep.subr.bf16.mxu0 0
    %4295 = vmatpush1.bf16.msra.mxu0 0
    %4296 = vmatprep.subr.bf16.mxu0 0
    %4297 = vmatpush1.bf16.msra.mxu0 0
    %4298 = vmatprep.subr.bf16.mxu0 0
    %4299 = vmatpush1.bf16.msra.mxu0 0
    %4300 = vmatprep.subr.bf16.mxu0 0
    %4301 = vmatpush1.bf16.msra.mxu0 0
    %4302 = vmatprep.subr.bf16.mxu0 0
    %4303 = vmatpush1.bf16.msra.mxu0 0
    %4304 = vmatprep.subr.bf16.mxu0 0
    %4305 = vmatpush1.bf16.msra.mxu0 0
    %4306 = vmatprep.subr.bf16.mxu0 0
    %4307 = vmatpush1.bf16.msra.mxu0 0
    %4308 = vmatprep.mubr.bf16.mxu0 0
    %4309 = vmatmul.mubr.bf16.gmra.mrb[0].mxu0 %v4068
    %v4310 = vpop.f32.mrb[0].mxu0
    %v4311 = vadd.f32 %v4150, %v4310
    %v4312 = vpop.f32.mrb[0].mxu0
    %v4313 = vpop.f32.mrb[0].mxu0
    %v4314 = vadd.f32 %v4153, %v4313
    %v4315 = vpop.f32.mrb[0].mxu0
    %4316 = vmatprep.mubr.bf16.mxu0 0
    %4317 = vmatmul.mubr.bf16.gmra.mrb[0].mxu0 %v4071
    %v4318 = vpop.f32.mrb[0].mxu0
    %v4319 = vadd.f32 %v4158, %v4318
    %v4320 = vpop.f32.mrb[0].mxu0
    %v4321 = vpop.f32.mrb[0].mxu0
    %v4322 = vadd.f32 %v4161, %v4321
    %v4323 = vpop.f32.mrb[0].mxu0
    %4324 = vmatprep.mubr.bf16.mxu0 0
    %4325 = vmatmul.mubr.bf16.gmra.mrb[0].mxu0 %v4074
    %v4326 = vpop.f32.mrb[0].mxu0
    %v4327 = vadd.f32 %v4166, %v4326
    %v4328 = vpop.f32.mrb[0].mxu0
    %v4329 = vpop.f32.mrb[0].mxu0
    %v4330 = vadd.f32 %v4169, %v4329
    %v4331 = vpop.f32.mrb[0].mxu0
    %4332 = vmatprep.mubr.bf16.mxu0 0
    %4333 = vmatmul.mubr.bf16.gmra.mrb[0].mxu0 %v4077
    %v4334 = vpop.f32.mrb[0].mxu0
    %v4335 = vadd.f32 %v4174, %v4334
    %v4336 = vpop.f32.mrb[0].mxu0
    %v4337 = vpop.f32.mrb[0].mxu0
    %v4338 = vadd.f32 %v4177, %v4337
    %v4339 = vpop.f32.mrb[0].mxu0
    %4340 = vmatprep.mubr.bf16.mxu0 0
    %4341 = vmatmul.mubr.bf16.gmra.mrb[0].mxu0 %v4080
    %v4342 = vpop.f32.mrb[0].mxu0
    %v4343 = vadd.f32 %v4182, %v4342
    %v4344 = vpop.f32.mrb[0].mxu0
    %v4345 = vpop.f32.mrb[0].mxu0
    %v4346 = vadd.f32 %v4185, %v4345
    %v4347 = vpop.f32.mrb[0].mxu0
    %4348 = vmatprep.mubr.bf16.mxu0 0
    %4349 = vmatmul.mubr.bf16.gmra.mrb[0].mxu0 %v4083
    %v4350 = vpop.f32.mrb[0].mxu0
    %v4351 = vadd.f32 %v4190, %v4350
    %v4352 = vpop.f32.mrb[0].mxu0
    %v4353 = vpop.f32.mrb[0].mxu0
    %v4354 = vadd.f32 %v4193, %v4353
    %v4355 = vpop.f32.mrb[0].mxu0
    %4356 = vmatprep.mubr.bf16.mxu0 0
    %4357 = vmatmul.mubr.bf16.gmra.mrb[0].mxu0 %v4086
    %v4358 = vpop.f32.mrb[0].mxu0
    %v4359 = vadd.f32 %v4198, %v4358
    %v4360 = vpop.f32.mrb[0].mxu0
    %v4361 = vpop.f32.mrb[0].mxu0
    %v4362 = vadd.f32 %v4201, %v4361
    %v4363 = vpop.f32.mrb[0].mxu0
    %4364 = vmatprep.mubr.bf16.mxu0 0
    %4365 = vmatmul.mubr.bf16.gmra.mrb[0].mxu0 %v4089
    %v4366 = vpop.f32.mrb[0].mxu0
    %v4367 = vadd.f32 %v4206, %v4366
    %v4368 = vpop.f32.mrb[0].mxu0
    %v4369 = vpop.f32.mrb[0].mxu0
    %v4370 = vadd.f32 %v4209, %v4369
    %v4371 = vpop.f32.mrb[0].mxu0
    %4372 = vmatprep.mubr.bf16.mxu0 0
    %4373 = vmatmul.mubr.bf16.gmra.mrb[0].mxu0 %v4092
    %v4374 = vpop.f32.mrb[0].mxu0
    %v4375 = vadd.f32 %v4214, %v4374
    %v4376 = vpop.f32.mrb[0].mxu0
    %v4377 = vpop.f32.mrb[0].mxu0
    %v4378 = vadd.f32 %v4217, %v4377
    %v4379 = vpop.f32.mrb[0].mxu0
    %4380 = vmatprep.mubr.bf16.mxu0 0
    %4381 = vmatmul.mubr.bf16.gmra.mrb[0].mxu0 %v4095
    %v4382 = vpop.f32.mrb[0].mxu0
    %v4383 = vadd.f32 %v4222, %v4382
    %v4384 = vpop.f32.mrb[0].mxu0
    %v4385 = vpop.f32.mrb[0].mxu0
    %v4386 = vadd.f32 %v4225, %v4385
    %v4387 = vpop.f32.mrb[0].mxu0
    %4388 = vmatprep.mubr.bf16.mxu0 0
    %4389 = vmatmul.mubr.bf16.gmra.mrb[0].mxu0 %v4098
    %v4390 = vpop.f32.mrb[0].mxu0
    %v4391 = vadd.f32 %v4230, %v4390
    %v4392 = vpop.f32.mrb[0].mxu0
    %v4393 = vpop.f32.mrb[0].mxu0
    %v4394 = vadd.f32 %v4233, %v4393
    %v4395 = vpop.f32.mrb[0].mxu0
    %4396 = vmatprep.mubr.bf16.mxu0 0
    %4397 = vmatmul.mubr.bf16.gmra.mrb[0].mxu0 %v4101
    %v4398 = vpop.f32.mrb[0].mxu0
    %v4399 = vadd.f32 %v4238, %v4398
    %v4400 = vpop.f32.mrb[0].mxu0
    %v4401 = vpop.f32.mrb[0].mxu0
    %v4402 = vadd.f32 %v4241, %v4401
    %v4403 = vpop.f32.mrb[0].mxu0
    %4404 = vmatprep.mubr.bf16.mxu0 0
    %4405 = vmatmul.mubr.bf16.gmra.mrb[0].mxu0 %v4104
    %v4406 = vpop.f32.mrb[0].mxu0
    %v4407 = vadd.f32 %v4246, %v4406
    %v4408 = vpop.f32.mrb[0].mxu0
    %v4409 = vpop.f32.mrb[0].mxu0
    %v4410 = vadd.f32 %v4249, %v4409
    %v4411 = vpop.f32.mrb[0].mxu0
    %4412 = vmatprep.mubr.bf16.mxu0 0
    %4413 = vmatmul.mubr.bf16.gmra.mrb[0].mxu0 %v4107
    %v4414 = vpop.f32.mrb[0].mxu0
    %v4415 = vadd.f32 %v4254, %v4414
    %v4416 = vpop.f32.mrb[0].mxu0
    %v4417 = vpop.f32.mrb[0].mxu0
    %v4418 = vadd.f32 %v4257, %v4417
    %v4419 = vpop.f32.mrb[0].mxu0
    %4420 = vmatprep.mubr.bf16.mxu0 0
    %4421 = vmatmul.mubr.bf16.gmra.mrb[0].mxu0 %v4110
    %v4422 = vpop.f32.mrb[0].mxu0
    %v4423 = vadd.f32 %v4262, %v4422
    %v4424 = vpop.f32.mrb[0].mxu0
    %v4425 = vpop.f32.mrb[0].mxu0
    %v4426 = vadd.f32 %v4265, %v4425
    %v4427 = vpop.f32.mrb[0].mxu0
    %4428 = vmatprep.mubr.bf16.mxu0 0
    %4429 = vmatmul.mubr.bf16.gmra.mrb[0].mxu0 %v4113
    %v4430 = vpop.f32.mrb[0].mxu0
    %v4431 = vadd.f32 %v4270, %v4430
    %v4432 = vpop.f32.mrb[0].mxu0
    %v4433 = vpop.f32.mrb[0].mxu0
    %v4434 = vadd.f32 %v4273, %v4433
    %v4435 = vpop.f32.mrb[0].mxu0
    %4436 = vdwg.mxu0
    %v4437 = vld [vmem:[%s5] sm:$0xff]
    %v4438 = vld [vmem:[%s5 + $0x8] sm:$0xff]
    %v4439 = vld [vmem:[%s5 + $0x10] sm:$0xff]
    %v4440 = vld [vmem:[%s5 + $0x18] sm:$0xff]
    %v4441 = vld [vmem:[%s5 + $0x20] sm:$0xff]
    %v4442 = vld [vmem:[%s5 + $0x28] sm:$0xff]
    %v4443 = vld [vmem:[%s5 + $0x30] sm:$0xff]
    %v4444 = vld [vmem:[%s5 + $0x38] sm:$0xff]
    %v4445 = vadd.f32 %v4311, %v4437
    %v4446 = vadd.f32 %v4314, %v4438
    %v4447 = vadd.f32 %v4319, %v4439
    %v4448 = vadd.f32 %v4322, %v4440
    %v4449 = vadd.f32 %v4327, %v4441
    %v4450 = vadd.f32 %v4330, %v4442
    %v4451 = vadd.f32 %v4335, %v4443
    %v4452 = vadd.f32 %v4338, %v4444
    %v4453 = vadd.f32 %v4343, %v4437
    %v4454 = vadd.f32 %v4346, %v4438
    %v4455 = vadd.f32 %v4351, %v4439
    %v4456 = vadd.f32 %v4354, %v4440
    %v4457 = vadd.f32 %v4359, %v4441
    %v4458 = vadd.f32 %v4362, %v4442
    %v4459 = vadd.f32 %v4367, %v4443
    %v4460 = vadd.f32 %v4370, %v4444
    %v4461 = vadd.f32 %v4375, %v4437
    %v4462 = vadd.f32 %v4378, %v4438
    %v4463 = vadd.f32 %v4383, %v4439
    %v4464 = vadd.f32 %v4386, %v4440
    %v4465 = vadd.f32 %v4391, %v4441
    %v4466 = vadd.f32 %v4394, %v4442
    %v4467 = vadd.f32 %v4399, %v4443
    %v4468 = vadd.f32 %v4402, %v4444
    %v4469 = vadd.f32 %v4407, %v4437
    %v4470 = vadd.f32 %v4410, %v4438
    %v4471 = vadd.f32 %v4415, %v4439
    %v4472 = vadd.f32 %v4418, %v4440
    %v4473 = vadd.f32 %v4423, %v4441
    %v4474 = vadd.f32 %v4426, %v4442
    %v4475 = vadd.f32 %v4431, %v4443
    %v4476 = vadd.f32 %v4434, %v4444
    %v4477 = vxor.u32 %v4445, 2147483648
    %v4478 = vxor.u32 %v4446, 2147483648
    %v4479 = vxor.u32 %v4447, 2147483648
    %v4480 = vxor.u32 %v4448, 2147483648
    %v4481 = vxor.u32 %v4449, 2147483648
    %v4482 = vxor.u32 %v4450, 2147483648
    %v4483 = vxor.u32 %v4451, 2147483648
    %v4484 = vxor.u32 %v4452, 2147483648
    %v4485 = vxor.u32 %v4453, 2147483648
    %v4486 = vxor.u32 %v4454, 2147483648
    %v4487 = vxor.u32 %v4455, 2147483648
    %v4488 = vxor.u32 %v4456, 2147483648
    %v4489 = vxor.u32 %v4457, 2147483648
    %v4490 = vxor.u32 %v4458, 2147483648
    %v4491 = vxor.u32 %v4459, 2147483648
    %v4492 = vxor.u32 %v4460, 2147483648
    %v4493 = vxor.u32 %v4461, 2147483648
    %v4494 = vxor.u32 %v4462, 2147483648
    %v4495 = vxor.u32 %v4463, 2147483648
    %v4496 = vxor.u32 %v4464, 2147483648
    %v4497 = vxor.u32 %v4465, 2147483648
    %v4498 = vxor.u32 %v4466, 2147483648
    %v4499 = vxor.u32 %v4467, 2147483648
    %v4500 = vxor.u32 %v4468, 2147483648
    %v4501 = vxor.u32 %v4469, 2147483648
    %v4502 = vxor.u32 %v4470, 2147483648
    %v4503 = vxor.u32 %v4471, 2147483648
    %v4504 = vxor.u32 %v4472, 2147483648
    %v4505 = vxor.u32 %v4473, 2147483648
    %v4506 = vxor.u32 %v4474, 2147483648
    %v4507 = vxor.u32 %v4475, 2147483648
    %v4508 = vxor.u32 %v4476, 2147483648
    %v4509 = vmul.f32 %v4477, 1.442695
    %v4510 = vpow.pop %v4509
    %v4511 = vmul.f32 %v4478, 1.442695
    %v4512 = vpow.pop %v4511
    %v4513 = vmul.f32 %v4479, 1.442695
    %v4514 = vpow.pop %v4513
    %v4515 = vmul.f32 %v4480, 1.442695
    %v4516 = vpow.pop %v4515
    %v4517 = vmul.f32 %v4481, 1.442695
    %v4518 = vpow.pop %v4517
    %v4519 = vmul.f32 %v4482, 1.442695
    %v4520 = vpow.pop %v4519
    %v4521 = vmul.f32 %v4483, 1.442695
    %v4522 = vpow.pop %v4521
    %v4523 = vmul.f32 %v4484, 1.442695
    %v4524 = vpow.pop %v4523
    %v4525 = vmul.f32 %v4485, 1.442695
    %v4526 = vpow.pop %v4525
    %v4527 = vmul.f32 %v4486, 1.442695
    %v4528 = vpow.pop %v4527
    %v4529 = vmul.f32 %v4487, 1.442695
    %v4530 = vpow.pop %v4529
    %v4531 = vmul.f32 %v4488, 1.442695
    %v4532 = vpow.pop %v4531
    %v4533 = vmul.f32 %v4489, 1.442695
    %v4534 = vpow.pop %v4533
    %v4535 = vmul.f32 %v4490, 1.442695
    %v4536 = vpow.pop %v4535
    %v4537 = vmul.f32 %v4491, 1.442695
    %v4538 = vpow.pop %v4537
    %v4539 = vmul.f32 %v4492, 1.442695
    %v4540 = vpow.pop %v4539
    %v4541 = vmul.f32 %v4493, 1.442695
    %v4542 = vpow.pop %v4541
    %v4543 = vmul.f32 %v4494, 1.442695
    %v4544 = vpow.pop %v4543
    %v4545 = vmul.f32 %v4495, 1.442695
    %v4546 = vpow.pop %v4545
    %v4547 = vmul.f32 %v4496, 1.442695
    %v4548 = vpow.pop %v4547
    %v4549 = vmul.f32 %v4497, 1.442695
    %v4550 = vpow.pop %v4549
    %v4551 = vmul.f32 %v4498, 1.442695
    %v4552 = vpow.pop %v4551
    %v4553 = vmul.f32 %v4499, 1.442695
    %v4554 = vpow.pop %v4553
    %v4555 = vmul.f32 %v4500, 1.442695
    %v4556 = vpow.pop %v4555
    %v4557 = vmul.f32 %v4501, 1.442695
    %v4558 = vpow.pop %v4557
    %v4559 = vmul.f32 %v4502, 1.442695
    %v4560 = vpow.pop %v4559
    %v4561 = vmul.f32 %v4503, 1.442695
    %v4562 = vpow.pop %v4561
    %v4563 = vmul.f32 %v4504, 1.442695
    %v4564 = vpow.pop %v4563
    %v4565 = vmul.f32 %v4505, 1.442695
    %v4566 = vpow.pop %v4565
    %v4567 = vmul.f32 %v4506, 1.442695
    %v4568 = vpow.pop %v4567
    %v4569 = vmul.f32 %v4507, 1.442695
    %v4570 = vpow.pop %v4569
    %v4571 = vmul.f32 %v4508, 1.442695
    %v4572 = vpow.pop %v4571
    %v4573 = vadd.f32 %v4510, 1.0
    %v4574 = vadd.f32 %v4512, 1.0
    %v4575 = vadd.f32 %v4514, 1.0
    %v4576 = vadd.f32 %v4516, 1.0
    %v4577 = vadd.f32 %v4518, 1.0
    %v4578 = vadd.f32 %v4520, 1.0
    %v4579 = vadd.f32 %v4522, 1.0
    %v4580 = vadd.f32 %v4524, 1.0
    %v4581 = vadd.f32 %v4526, 1.0
    %v4582 = vadd.f32 %v4528, 1.0
    %v4583 = vadd.f32 %v4530, 1.0
    %v4584 = vadd.f32 %v4532, 1.0
    %v4585 = vadd.f32 %v4534, 1.0
    %v4586 = vadd.f32 %v4536, 1.0
    %v4587 = vadd.f32 %v4538, 1.0
    %v4588 = vadd.f32 %v4540, 1.0
    %v4589 = vadd.f32 %v4542, 1.0
    %v4590 = vadd.f32 %v4544, 1.0
    %v4591 = vadd.f32 %v4546, 1.0
    %v4592 = vadd.f32 %v4548, 1.0
    %v4593 = vadd.f32 %v4550, 1.0
    %v4594 = vadd.f32 %v4552, 1.0
    %v4595 = vadd.f32 %v4554, 1.0
    %v4596 = vadd.f32 %v4556, 1.0
    %v4597 = vadd.f32 %v4558, 1.0
    %v4598 = vadd.f32 %v4560, 1.0
    %v4599 = vadd.f32 %v4562, 1.0
    %v4600 = vadd.f32 %v4564, 1.0
    %v4601 = vadd.f32 %v4566, 1.0
    %v4602 = vadd.f32 %v4568, 1.0
    %v4603 = vadd.f32 %v4570, 1.0
    %v4604 = vadd.f32 %v4572, 1.0
    %v4605 = vrcp.pop %v4573
    %v4606 = vmul.f32 1.0, %v4605
    %v4607 = vrcp.pop %v4574
    %v4608 = vmul.f32 1.0, %v4607
    %v4609 = vrcp.pop %v4575
    %v4610 = vmul.f32 1.0, %v4609
    %v4611 = vrcp.pop %v4576
    %v4612 = vmul.f32 1.0, %v4611
    %v4613 = vrcp.pop %v4577
    %v4614 = vmul.f32 1.0, %v4613
    %v4615 = vrcp.pop %v4578
    %v4616 = vmul.f32 1.0, %v4615
    %v4617 = vrcp.pop %v4579
    %v4618 = vmul.f32 1.0, %v4617
    %v4619 = vrcp.pop %v4580
    %v4620 = vmul.f32 1.0, %v4619
    %v4621 = vrcp.pop %v4581
    %v4622 = vmul.f32 1.0, %v4621
    %v4623 = vrcp.pop %v4582
    %v4624 = vmul.f32 1.0, %v4623
    %v4625 = vrcp.pop %v4583
    %v4626 = vmul.f32 1.0, %v4625
    %v4627 = vrcp.pop %v4584
    %v4628 = vmul.f32 1.0, %v4627
    %v4629 = vrcp.pop %v4585
    %v4630 = vmul.f32 1.0, %v4629
    %v4631 = vrcp.pop %v4586
    %v4632 = vmul.f32 1.0, %v4631
    %v4633 = vrcp.pop %v4587
    %v4634 = vmul.f32 1.0, %v4633
    %v4635 = vrcp.pop %v4588
    %v4636 = vmul.f32 1.0, %v4635
    %v4637 = vrcp.pop %v4589
    %v4638 = vmul.f32 1.0, %v4637
    %v4639 = vrcp.pop %v4590
    %v4640 = vmul.f32 1.0, %v4639
    %v4641 = vrcp.pop %v4591
    %v4642 = vmul.f32 1.0, %v4641
    %v4643 = vrcp.pop %v4592
    %v4644 = vmul.f32 1.0, %v4643
    %v4645 = vrcp.pop %v4593
    %v4646 = vmul.f32 1.0, %v4645
    %v4647 = vrcp.pop %v4594
    %v4648 = vmul.f32 1.0, %v4647
    %v4649 = vrcp.pop %v4595
    %v4650 = vmul.f32 1.0, %v4649
    %v4651 = vrcp.pop %v4596
    %v4652 = vmul.f32 1.0, %v4651
    %v4653 = vrcp.pop %v4597
    %v4654 = vmul.f32 1.0, %v4653
    %v4655 = vrcp.pop %v4598
    %v4656 = vmul.f32 1.0, %v4655
    %v4657 = vrcp.pop %v4599
    %v4658 = vmul.f32 1.0, %v4657
    %v4659 = vrcp.pop %v4600
    %v4660 = vmul.f32 1.0, %v4659
    %v4661 = vrcp.pop %v4601
    %v4662 = vmul.f32 1.0, %v4661
    %v4663 = vrcp.pop %v4602
    %v4664 = vmul.f32 1.0, %v4663
    %v4665 = vrcp.pop %v4603
    %v4666 = vmul.f32 1.0, %v4665
    %v4667 = vrcp.pop %v4604
    %v4668 = vmul.f32 1.0, %v4667
    %v4669 = vtanh.pop %v4445
    %v4670 = vtanh.pop %v4446
    %v4671 = vtanh.pop %v4447
    %v4672 = vtanh.pop %v4448
    %v4673 = vtanh.pop %v4449
    %v4674 = vtanh.pop %v4450
    %v4675 = vtanh.pop %v4451
    %v4676 = vtanh.pop %v4452
    %v4677 = vtanh.pop %v4453
    %v4678 = vtanh.pop %v4454
    %v4679 = vtanh.pop %v4455
    %v4680 = vtanh.pop %v4456
    %v4681 = vtanh.pop %v4457
    %v4682 = vtanh.pop %v4458
    %v4683 = vtanh.pop %v4459
    %v4684 = vtanh.pop %v4460
    %v4685 = vtanh.pop %v4461
    %v4686 = vtanh.pop %v4462
    %v4687 = vtanh.pop %v4463
    %v4688 = vtanh.pop %v4464
    %v4689 = vtanh.pop %v4465
    %v4690 = vtanh.pop %v4466
    %v4691 = vtanh.pop %v4467
    %v4692 = vtanh.pop %v4468
    %v4693 = vtanh.pop %v4469
    %v4694 = vtanh.pop %v4470
    %v4695 = vtanh.pop %v4471
    %v4696 = vtanh.pop %v4472
    %v4697 = vtanh.pop %v4473
    %v4698 = vtanh.pop %v4474
    %v4699 = vtanh.pop %v4475
    %v4700 = vtanh.pop %v4476
    %v4701 = vmul.f32 %v4606, %v2043
    %v4702 = vmul.f32 %v4608, %v2044
    %v4703 = vmul.f32 %v4610, %v2045
    %v4704 = vmul.f32 %v4612, %v2046
    %v4705 = vmul.f32 %v4614, %v2047
    %v4706 = vmul.f32 %v4616, %v2048
    %v4707 = vmul.f32 %v4618, %v2049
    %v4708 = vmul.f32 %v4620, %v2050
    %v4709 = vmul.f32 %v4622, %v2051
    %v4710 = vmul.f32 %v4624, %v2052
    %v4711 = vmul.f32 %v4626, %v2053
    %v4712 = vmul.f32 %v4628, %v2054
    %v4713 = vmul.f32 %v4630, %v2055
    %v4714 = vmul.f32 %v4632, %v2056
    %v4715 = vmul.f32 %v4634, %v2057
    %v4716 = vmul.f32 %v4636, %v2058
    %v4717 = vmul.f32 %v4638, %v2059
    %v4718 = vmul.f32 %v4640, %v2060
    %v4719 = vmul.f32 %v4642, %v2061
    %v4720 = vmul.f32 %v4644, %v2062
    %v4721 = vmul.f32 %v4646, %v2063
    %v4722 = vmul.f32 %v4648, %v2064
    %v4723 = vmul.f32 %v4650, %v2065
    %v4724 = vmul.f32 %v4652, %v2066
    %v4725 = vmul.f32 %v4654, %v2067
    %v4726 = vmul.f32 %v4656, %v2068
    %v4727 = vmul.f32 %v4658, %v2069
    %v4728 = vmul.f32 %v4660, %v2070
    %v4729 = vmul.f32 %v4662, %v2071
    %v4730 = vmul.f32 %v4664, %v2072
    %v4731 = vmul.f32 %v4666, %v2073
    %v4732 = vmul.f32 %v4668, %v2074
    %v4733 = vsub.f32 1.0, %v4606
    %v4734 = vsub.f32 1.0, %v4608
    %v4735 = vsub.f32 1.0, %v4610
    %v4736 = vsub.f32 1.0, %v4612
    %v4737 = vsub.f32 1.0, %v4614
    %v4738 = vsub.f32 1.0, %v4616
    %v4739 = vsub.f32 1.0, %v4618
    %v4740 = vsub.f32 1.0, %v4620
    %v4741 = vsub.f32 1.0, %v4622
    %v4742 = vsub.f32 1.0, %v4624
    %v4743 = vsub.f32 1.0, %v4626
    %v4744 = vsub.f32 1.0, %v4628
    %v4745 = vsub.f32 1.0, %v4630
    %v4746 = vsub.f32 1.0, %v4632
    %v4747 = vsub.f32 1.0, %v4634
    %v4748 = vsub.f32 1.0, %v4636
    %v4749 = vsub.f32 1.0, %v4638
    %v4750 = vsub.f32 1.0, %v4640
    %v4751 = vsub.f32 1.0, %v4642
    %v4752 = vsub.f32 1.0, %v4644
    %v4753 = vsub.f32 1.0, %v4646
    %v4754 = vsub.f32 1.0, %v4648
    %v4755 = vsub.f32 1.0, %v4650
    %v4756 = vsub.f32 1.0, %v4652
    %v4757 = vsub.f32 1.0, %v4654
    %v4758 = vsub.f32 1.0, %v4656
    %v4759 = vsub.f32 1.0, %v4658
    %v4760 = vsub.f32 1.0, %v4660
    %v4761 = vsub.f32 1.0, %v4662
    %v4762 = vsub.f32 1.0, %v4664
    %v4763 = vsub.f32 1.0, %v4666
    %v4764 = vsub.f32 1.0, %v4668
    %4797 = vrot.lane.b32.xlu0 %v4733, 120
    %v4798 = vpop.permute.xlu0 %4797
    %4799 = vrot.lane.b32.xlu0 %v4734, 120
    %v4800 = vpop.permute.xlu0 %4799
    %4801 = vrot.lane.b32.xlu0 %v4735, 120
    %v4802 = vpop.permute.xlu0 %4801
    %4803 = vrot.lane.b32.xlu0 %v4736, 120
    %v4804 = vpop.permute.xlu0 %4803
    %4805 = vrot.lane.b32.xlu0 %v4737, 120
    %v4806 = vpop.permute.xlu0 %4805
    %4807 = vrot.lane.b32.xlu0 %v4738, 120
    %v4808 = vpop.permute.xlu0 %4807
    %4809 = vrot.lane.b32.xlu0 %v4739, 120
    %v4810 = vpop.permute.xlu0 %4809
    %4811 = vrot.lane.b32.xlu0 %v4740, 120
    %v4812 = vpop.permute.xlu0 %4811
    %4813 = vrot.lane.b32.xlu0 %v4741, 120
    %v4814 = vpop.permute.xlu0 %4813
    %4815 = vrot.lane.b32.xlu0 %v4742, 120
    %v4816 = vpop.permute.xlu0 %4815
    %4817 = vrot.lane.b32.xlu0 %v4743, 120
    %v4818 = vpop.permute.xlu0 %4817
    %4819 = vrot.lane.b32.xlu0 %v4744, 120
    %v4820 = vpop.permute.xlu0 %4819
    %4821 = vrot.lane.b32.xlu0 %v4745, 120
    %v4822 = vpop.permute.xlu0 %4821
    %4823 = vrot.lane.b32.xlu0 %v4746, 120
    %v4824 = vpop.permute.xlu0 %4823
    %4825 = vrot.lane.b32.xlu0 %v4747, 120
    %v4826 = vpop.permute.xlu0 %4825
    %4827 = vrot.lane.b32.xlu0 %v4748, 120
    %v4828 = vpop.permute.xlu0 %4827
    %4829 = vrot.lane.b32.xlu0 %v4749, 120
    %v4830 = vpop.permute.xlu0 %4829
    %4831 = vrot.lane.b32.xlu0 %v4750, 120
    %v4832 = vpop.permute.xlu0 %4831
    %4833 = vrot.lane.b32.xlu0 %v4751, 120
    %v4834 = vpop.permute.xlu0 %4833
    %4835 = vrot.lane.b32.xlu0 %v4752, 120
    %v4836 = vpop.permute.xlu0 %4835
    %4837 = vrot.lane.b32.xlu0 %v4753, 120
    %v4838 = vpop.permute.xlu0 %4837
    %4839 = vrot.lane.b32.xlu0 %v4754, 120
    %v4840 = vpop.permute.xlu0 %4839
    %4841 = vrot.lane.b32.xlu0 %v4755, 120
    %v4842 = vpop.permute.xlu0 %4841
    %4843 = vrot.lane.b32.xlu0 %v4756, 120
    %v4844 = vpop.permute.xlu0 %4843
    %4845 = vrot.lane.b32.xlu0 %v4757, 120
    %v4846 = vpop.permute.xlu0 %4845
    %4847 = vrot.lane.b32.xlu0 %v4758, 120
    %v4848 = vpop.permute.xlu0 %4847
    %4849 = vrot.lane.b32.xlu0 %v4759, 120
    %v4850 = vpop.permute.xlu0 %4849
    %4851 = vrot.lane.b32.xlu0 %v4760, 120
    %v4852 = vpop.permute.xlu0 %4851
    %4853 = vrot.lane.b32.xlu0 %v4761, 120
    %v4854 = vpop.permute.xlu0 %4853
    %4855 = vrot.lane.b32.xlu0 %v4762, 120
    %v4856 = vpop.permute.xlu0 %4855
    %4857 = vrot.lane.b32.xlu0 %v4763, 120
    %v4858 = vpop.permute.xlu0 %4857
    %4859 = vrot.lane.b32.xlu0 %v4764, 120
    %v4860 = vpop.permute.xlu0 %4859
    %v4893 = vmul.f32 %v4701, %v4798
    %v4894 = vmul.f32 %v4702, %v4800
    %v4895 = vmul.f32 %v4703, %v4802
    %v4896 = vmul.f32 %v4704, %v4804
    %v4897 = vmul.f32 %v4705, %v4806
    %v4898 = vmul.f32 %v4706, %v4808
    %v4899 = vmul.f32 %v4707, %v4810
    %v4900 = vmul.f32 %v4708, %v4812
    %v4901 = vmul.f32 %v4709, %v4814
    %v4902 = vmul.f32 %v4710, %v4816
    %v4903 = vmul.f32 %v4711, %v4818
    %v4904 = vmul.f32 %v4712, %v4820
    %v4905 = vmul.f32 %v4713, %v4822
    %v4906 = vmul.f32 %v4714, %v4824
    %v4907 = vmul.f32 %v4715, %v4826
    %v4908 = vmul.f32 %v4716, %v4828
    %v4909 = vmul.f32 %v4717, %v4830
    %v4910 = vmul.f32 %v4718, %v4832
    %v4911 = vmul.f32 %v4719, %v4834
    %v4912 = vmul.f32 %v4720, %v4836
    %v4913 = vmul.f32 %v4721, %v4838
    %v4914 = vmul.f32 %v4722, %v4840
    %v4915 = vmul.f32 %v4723, %v4842
    %v4916 = vmul.f32 %v4724, %v4844
    %v4917 = vmul.f32 %v4725, %v4846
    %v4918 = vmul.f32 %v4726, %v4848
    %v4919 = vmul.f32 %v4727, %v4850
    %v4920 = vmul.f32 %v4728, %v4852
    %v4921 = vmul.f32 %v4729, %v4854
    %v4922 = vmul.f32 %v4730, %v4856
    %v4923 = vmul.f32 %v4731, %v4858
    %v4924 = vmul.f32 %v4732, %v4860
    %4957 = vrot.lane.b32.xlu0 %v4669, 120
    %v4958 = vpop.permute.xlu0 %4957
    %4959 = vrot.lane.b32.xlu0 %v4670, 120
    %v4960 = vpop.permute.xlu0 %4959
    %4961 = vrot.lane.b32.xlu0 %v4671, 120
    %v4962 = vpop.permute.xlu0 %4961
    %4963 = vrot.lane.b32.xlu0 %v4672, 120
    %v4964 = vpop.permute.xlu0 %4963
    %4965 = vrot.lane.b32.xlu0 %v4673, 120
    %v4966 = vpop.permute.xlu0 %4965
    %4967 = vrot.lane.b32.xlu0 %v4674, 120
    %v4968 = vpop.permute.xlu0 %4967
    %4969 = vrot.lane.b32.xlu0 %v4675, 120
    %v4970 = vpop.permute.xlu0 %4969
    %4971 = vrot.lane.b32.xlu0 %v4676, 120
    %v4972 = vpop.permute.xlu0 %4971
    %4973 = vrot.lane.b32.xlu0 %v4677, 120
    %v4974 = vpop.permute.xlu0 %4973
    %4975 = vrot.lane.b32.xlu0 %v4678, 120
    %v4976 = vpop.permute.xlu0 %4975
    %4977 = vrot.lane.b32.xlu0 %v4679, 120
    %v4978 = vpop.permute.xlu0 %4977
    %4979 = vrot.lane.b32.xlu0 %v4680, 120
    %v4980 = vpop.permute.xlu0 %4979
    %4981 = vrot.lane.b32.xlu0 %v4681, 120
    %v4982 = vpop.permute.xlu0 %4981
    %4983 = vrot.lane.b32.xlu0 %v4682, 120
    %v4984 = vpop.permute.xlu0 %4983
    %4985 = vrot.lane.b32.xlu0 %v4683, 120
    %v4986 = vpop.permute.xlu0 %4985
    %4987 = vrot.lane.b32.xlu0 %v4684, 120
    %v4988 = vpop.permute.xlu0 %4987
    %4989 = vrot.lane.b32.xlu0 %v4685, 120
    %v4990 = vpop.permute.xlu0 %4989
    %4991 = vrot.lane.b32.xlu0 %v4686, 120
    %v4992 = vpop.permute.xlu0 %4991
    %4993 = vrot.lane.b32.xlu0 %v4687, 120
    %v4994 = vpop.permute.xlu0 %4993
    %4995 = vrot.lane.b32.xlu0 %v4688, 120
    %v4996 = vpop.permute.xlu0 %4995
    %4997 = vrot.lane.b32.xlu0 %v4689, 120
    %v4998 = vpop.permute.xlu0 %4997
    %4999 = vrot.lane.b32.xlu0 %v4690, 120
    %v5000 = vpop.permute.xlu0 %4999
    %5001 = vrot.lane.b32.xlu0 %v4691, 120
    %v5002 = vpop.permute.xlu0 %5001
    %5003 = vrot.lane.b32.xlu0 %v4692, 120
    %v5004 = vpop.permute.xlu0 %5003
    %5005 = vrot.lane.b32.xlu0 %v4693, 120
    %v5006 = vpop.permute.xlu0 %5005
    %5007 = vrot.lane.b32.xlu0 %v4694, 120
    %v5008 = vpop.permute.xlu0 %5007
    %5009 = vrot.lane.b32.xlu0 %v4695, 120
    %v5010 = vpop.permute.xlu0 %5009
    %5011 = vrot.lane.b32.xlu0 %v4696, 120
    %v5012 = vpop.permute.xlu0 %5011
    %5013 = vrot.lane.b32.xlu0 %v4697, 120
    %v5014 = vpop.permute.xlu0 %5013
    %5015 = vrot.lane.b32.xlu0 %v4698, 120
    %v5016 = vpop.permute.xlu0 %5015
    %5017 = vrot.lane.b32.xlu0 %v4699, 120
    %v5018 = vpop.permute.xlu0 %5017
    %5019 = vrot.lane.b32.xlu0 %v4700, 120
    %v5020 = vpop.permute.xlu0 %5019
    %v5053 = vmul.f32 %v4606, %v4958
    %v5054 = vmul.f32 %v4608, %v4960
    %v5055 = vmul.f32 %v4610, %v4962
    %v5056 = vmul.f32 %v4612, %v4964
    %v5057 = vmul.f32 %v4614, %v4966
    %v5058 = vmul.f32 %v4616, %v4968
    %v5059 = vmul.f32 %v4618, %v4970
    %v5060 = vmul.f32 %v4620, %v4972
    %v5061 = vmul.f32 %v4622, %v4974
    %v5062 = vmul.f32 %v4624, %v4976
    %v5063 = vmul.f32 %v4626, %v4978
    %v5064 = vmul.f32 %v4628, %v4980
    %v5065 = vmul.f32 %v4630, %v4982
    %v5066 = vmul.f32 %v4632, %v4984
    %v5067 = vmul.f32 %v4634, %v4986
    %v5068 = vmul.f32 %v4636, %v4988
    %v5069 = vmul.f32 %v4638, %v4990
    %v5070 = vmul.f32 %v4640, %v4992
    %v5071 = vmul.f32 %v4642, %v4994
    %v5072 = vmul.f32 %v4644, %v4996
    %v5073 = vmul.f32 %v4646, %v4998
    %v5074 = vmul.f32 %v4648, %v5000
    %v5075 = vmul.f32 %v4650, %v5002
    %v5076 = vmul.f32 %v4652, %v5004
    %v5077 = vmul.f32 %v4654, %v5006
    %v5078 = vmul.f32 %v4656, %v5008
    %v5079 = vmul.f32 %v4658, %v5010
    %v5080 = vmul.f32 %v4660, %v5012
    %v5081 = vmul.f32 %v4662, %v5014
    %v5082 = vmul.f32 %v4664, %v5016
    %v5083 = vmul.f32 %v4666, %v5018
    %v5084 = vmul.f32 %v4668, %v5020
    %5117 = vrot.lane.b32.xlu0 %v5053, 120
    %v5118 = vpop.permute.xlu0 %5117
    %5119 = vrot.lane.b32.xlu0 %v5054, 120
    %v5120 = vpop.permute.xlu0 %5119
    %5121 = vrot.lane.b32.xlu0 %v5055, 120
    %v5122 = vpop.permute.xlu0 %5121
    %5123 = vrot.lane.b32.xlu0 %v5056, 120
    %v5124 = vpop.permute.xlu0 %5123
    %5125 = vrot.lane.b32.xlu0 %v5057, 120
    %v5126 = vpop.permute.xlu0 %5125
    %5127 = vrot.lane.b32.xlu0 %v5058, 120
    %v5128 = vpop.permute.xlu0 %5127
    %5129 = vrot.lane.b32.xlu0 %v5059, 120
    %v5130 = vpop.permute.xlu0 %5129
    %5131 = vrot.lane.b32.xlu0 %v5060, 120
    %v5132 = vpop.permute.xlu0 %5131
    %5133 = vrot.lane.b32.xlu0 %v5061, 120
    %v5134 = vpop.permute.xlu0 %5133
    %5135 = vrot.lane.b32.xlu0 %v5062, 120
    %v5136 = vpop.permute.xlu0 %5135
    %5137 = vrot.lane.b32.xlu0 %v5063, 120
    %v5138 = vpop.permute.xlu0 %5137
    %5139 = vrot.lane.b32.xlu0 %v5064, 120
    %v5140 = vpop.permute.xlu0 %5139
    %5141 = vrot.lane.b32.xlu0 %v5065, 120
    %v5142 = vpop.permute.xlu0 %5141
    %5143 = vrot.lane.b32.xlu0 %v5066, 120
    %v5144 = vpop.permute.xlu0 %5143
    %5145 = vrot.lane.b32.xlu0 %v5067, 120
    %v5146 = vpop.permute.xlu0 %5145
    %5147 = vrot.lane.b32.xlu0 %v5068, 120
    %v5148 = vpop.permute.xlu0 %5147
    %5149 = vrot.lane.b32.xlu0 %v5069, 120
    %v5150 = vpop.permute.xlu0 %5149
    %5151 = vrot.lane.b32.xlu0 %v5070, 120
    %v5152 = vpop.permute.xlu0 %5151
    %5153 = vrot.lane.b32.xlu0 %v5071, 120
    %v5154 = vpop.permute.xlu0 %5153
    %5155 = vrot.lane.b32.xlu0 %v5072, 120
    %v5156 = vpop.permute.xlu0 %5155
    %5157 = vrot.lane.b32.xlu0 %v5073, 120
    %v5158 = vpop.permute.xlu0 %5157
    %5159 = vrot.lane.b32.xlu0 %v5074, 120
    %v5160 = vpop.permute.xlu0 %5159
    %5161 = vrot.lane.b32.xlu0 %v5075, 120
    %v5162 = vpop.permute.xlu0 %5161
    %5163 = vrot.lane.b32.xlu0 %v5076, 120
    %v5164 = vpop.permute.xlu0 %5163
    %5165 = vrot.lane.b32.xlu0 %v5077, 120
    %v5166 = vpop.permute.xlu0 %5165
    %5167 = vrot.lane.b32.xlu0 %v5078, 120
    %v5168 = vpop.permute.xlu0 %5167
    %5169 = vrot.lane.b32.xlu0 %v5079, 120
    %v5170 = vpop.permute.xlu0 %5169
    %5171 = vrot.lane.b32.xlu0 %v5080, 120
    %v5172 = vpop.permute.xlu0 %5171
    %5173 = vrot.lane.b32.xlu0 %v5081, 120
    %v5174 = vpop.permute.xlu0 %5173
    %5175 = vrot.lane.b32.xlu0 %v5082, 120
    %v5176 = vpop.permute.xlu0 %5175
    %5177 = vrot.lane.b32.xlu0 %v5083, 120
    %v5178 = vpop.permute.xlu0 %5177
    %5179 = vrot.lane.b32.xlu0 %v5084, 120
    %v5180 = vpop.permute.xlu0 %5179
    %v5213 = vadd.f32 %v4893, %v5118
    %v5214 = vadd.f32 %v4894, %v5120
    %v5215 = vadd.f32 %v4895, %v5122
    %v5216 = vadd.f32 %v4896, %v5124
    %v5217 = vadd.f32 %v4897, %v5126
    %v5218 = vadd.f32 %v4898, %v5128
    %v5219 = vadd.f32 %v4899, %v5130
    %v5220 = vadd.f32 %v4900, %v5132
    %v5221 = vadd.f32 %v4901, %v5134
    %v5222 = vadd.f32 %v4902, %v5136
    %v5223 = vadd.f32 %v4903, %v5138
    %v5224 = vadd.f32 %v4904, %v5140
    %v5225 = vadd.f32 %v4905, %v5142
    %v5226 = vadd.f32 %v4906, %v5144
    %v5227 = vadd.f32 %v4907, %v5146
    %v5228 = vadd.f32 %v4908, %v5148
    %v5229 = vadd.f32 %v4909, %v5150
    %v5230 = vadd.f32 %v4910, %v5152
    %v5231 = vadd.f32 %v4911, %v5154
    %v5232 = vadd.f32 %v4912, %v5156
    %v5233 = vadd.f32 %v4913, %v5158
    %v5234 = vadd.f32 %v4914, %v5160
    %v5235 = vadd.f32 %v4915, %v5162
    %v5236 = vadd.f32 %v4916, %v5164
    %v5237 = vadd.f32 %v4917, %v5166
    %v5238 = vadd.f32 %v4918, %v5168
    %v5239 = vadd.f32 %v4919, %v5170
    %v5240 = vadd.f32 %v4920, %v5172
    %v5241 = vadd.f32 %v4921, %v5174
    %v5242 = vadd.f32 %v4922, %v5176
    %v5243 = vadd.f32 %v4923, %v5178
    %v5244 = vadd.f32 %v4924, %v5180
    %5245 = vst.msk [vmem:[#allocation3] sm:$0xff] %vm2108, %v5213
    %5246 = vst.msk [vmem:[#allocation3 + $0x8] sm:$0xff] %vm2108, %v5214
    %5247 = vst.msk [vmem:[#allocation3 + $0x10] sm:$0xff] %vm2108, %v5215
    %5248 = vst.msk [vmem:[#allocation3 + $0x18] sm:$0xff] %vm2108, %v5216
    %5249 = vst.msk [vmem:[#allocation3 + $0x20] sm:$0xff] %vm2108, %v5217
    %5250 = vst.msk [vmem:[#allocation3 + $0x28] sm:$0xff] %vm2108, %v5218
    %5251 = vst.msk [vmem:[#allocation3 + $0x30] sm:$0xff] %vm2108, %v5219
    %5252 = vst.msk [vmem:[#allocation3 + $0x38] sm:$0xff] %vm2108, %v5220
    %5253 = vst.msk [vmem:[#allocation3 + $0x40] sm:$0xff] %vm2108, %v5221
    %5254 = vst.msk [vmem:[#allocation3 + $0x48] sm:$0xff] %vm2108, %v5222
    %5255 = vst.msk [vmem:[#allocation3 + $0x50] sm:$0xff] %vm2108, %v5223
    %5256 = vst.msk [vmem:[#allocation3 + $0x58] sm:$0xff] %vm2108, %v5224
    %5257 = vst.msk [vmem:[#allocation3 + $0x60] sm:$0xff] %vm2108, %v5225
    %5258 = vst.msk [vmem:[#allocation3 + $0x68] sm:$0xff] %vm2108, %v5226
    %5259 = vst.msk [vmem:[#allocation3 + $0x70] sm:$0xff] %vm2108, %v5227
    %5260 = vst.msk [vmem:[#allocation3 + $0x78] sm:$0xff] %vm2108, %v5228
    %5261 = vst.msk [vmem:[#allocation3 + $0x80] sm:$0xff] %vm2108, %v5229
    %5262 = vst.msk [vmem:[#allocation3 + $0x88] sm:$0xff] %vm2108, %v5230
    %5263 = vst.msk [vmem:[#allocation3 + $0x90] sm:$0xff] %vm2108, %v5231
    %5264 = vst.msk [vmem:[#allocation3 + $0x98] sm:$0xff] %vm2108, %v5232
    %5265 = vst.msk [vmem:[#allocation3 + $0xa0] sm:$0xff] %vm2108, %v5233
    %5266 = vst.msk [vmem:[#allocation3 + $0xa8] sm:$0xff] %vm2108, %v5234
    %5267 = vst.msk [vmem:[#allocation3 + $0xb0] sm:$0xff] %vm2108, %v5235
    %5268 = vst.msk [vmem:[#allocation3 + $0xb8] sm:$0xff] %vm2108, %v5236
    %5269 = vst.msk [vmem:[#allocation3 + $0xc0] sm:$0xff] %vm2108, %v5237
    %5270 = vst.msk [vmem:[#allocation3 + $0xc8] sm:$0xff] %vm2108, %v5238
    %5271 = vst.msk [vmem:[#allocation3 + $0xd0] sm:$0xff] %vm2108, %v5239
    %5272 = vst.msk [vmem:[#allocation3 + $0xd8] sm:$0xff] %vm2108, %v5240
    %5273 = vst.msk [vmem:[#allocation3 + $0xe0] sm:$0xff] %vm2108, %v5241
    %5274 = vst.msk [vmem:[#allocation3 + $0xe8] sm:$0xff] %vm2108, %v5242
    %5275 = vst.msk [vmem:[#allocation3 + $0xf0] sm:$0xff] %vm2108, %v5243
    %5276 = vst.msk [vmem:[#allocation3 + $0xf8] sm:$0xff] %vm2108, %v5244
    // Predicated region
    $region26: #{multiscale_sensory_updater.1} parent=1 // pred_check
      _
    $region27: #{multiscale_sensory_updater.1} parent=1 // pred_check_branch
      %5278 = sbr.rel (0) target = $region29
    $region28: #{multiscale_sensory_updater.1} parent=1 // pred_region
      %s5280 = ssub.s32 4096, 4096
      %5281 = vsyncadd [#allocation4], %s5280
      %s5282 = sshll.u32 [#allocation3], 4
      %s5283 = int_to_ptr.vmem [resolvable:$true] %s5282
      %5288 = dma.vmem_to_hbm [thread:$0]  %s5283, 4096, %s6, [#allocation4], 128, 128, 8
    $region29: #{multiscale_sensory_updater.1} parent=1 // pred_fallthru
      _
    // Predicated region
    $region30: #{multiscale_sensory_updater.1} parent=1 // pred_check
      _
    $region31: #{multiscale_sensory_updater.1} parent=1 // pred_check_branch
      %5290 = sbr.rel (0) target = $region33
    $region32: #{multiscale_sensory_updater.1} parent=1 // pred_region
      %5291 = dma.done [#allocation4], 4096
    $region33: #{multiscale_sensory_updater.1} parent=1 // pred_fallthru
      _
    %5292 = vsyncpa [#allocation4], 1

</llo_original>
